<compile_context>
chip_gen: v5e
topology: v5e:2x2
jax: 0.10.0
libtpu: 0.0.40
codegen_flags: <defaults>
</compile_context>

<pallas_src>
import functools

import jax
import jax.numpy as jnp
from jax.experimental import pallas as pl
from jax.experimental.pallas import tpu as pltpu

LANE = 128      # lane width (last-dim alignment)
SUBLANE = 8     # f32 sublane width (second-to-last-dim alignment)

_GATE_PERM = (0, 1, 3, 2)   # torch gate order [i, f, g, o] -> kernel order [i, f, o, g]


def _round_up(x, m):
    return (x + m - 1) // m * m


def _pick_time_tile(T, max_tile=16):
    """Largest divisor of T that is <= max_tile (timesteps per grid iteration)."""
    for tile in range(min(T, max_tile), 0, -1):
        if T % tile == 0:
            return tile
    return 1


# ----------------------------------------------------------------------------
# Runtime probe: is pipeline_mode=pl.Buffered(1) (single-buffered resident
# blocks) supported by this Pallas/Mosaic build?  Cached after first call.
# ----------------------------------------------------------------------------
_BUFFERED_OK = None


def _buffered_one_supported():
    global _BUFFERED_OK
    if _BUFFERED_OK is not None:
        return _BUFFERED_OK
    try:
        spec = pl.BlockSpec((SUBLANE, LANE), lambda i: (0, 0),
                            pipeline_mode=pl.Buffered(1))

        def _k(x_ref, o_ref):
            o_ref[...] = x_ref[...] + 1.0

        x = jnp.zeros((SUBLANE, LANE), jnp.float32)
        out = pl.pallas_call(
            _k,
            out_shape=jax.ShapeDtypeStruct((SUBLANE, LANE), jnp.float32),
            grid=(1,),
            in_specs=[spec],
            out_specs=pl.BlockSpec((SUBLANE, LANE), lambda i: (0, 0)),
        )(x)
        jax.block_until_ready(out)
        _BUFFERED_OK = True
    except Exception:
        _BUFFERED_OK = False
    return _BUFFERED_OK


# ----------------------------------------------------------------------------
# Pallas kernel: LSTM recurrence only (input projection precomputed).
# Grid = (batch_blocks [parallel], time_blocks [arbitrary / sequential]).
# Hidden/cell state carried in VMEM scratch across the sequential time axis.
# ----------------------------------------------------------------------------
def _lstm_recurrent_kernel(gx_ref, whh_ref, y_ref, h_out_ref, c_out_ref,
                           h_sc, c_sc, *, hp, time_tile):
    t_blk = pl.program_id(1)

    @pl.when(t_blk == 0)
    def _init():
        h_sc[...] = jnp.zeros_like(h_sc)
        c_sc[...] = jnp.zeros_like(c_sc)

    # Fully unrolled inner time loop with static indices -> aligned, lane-dense
    # loads/stores on the (time_tile, B, 4*Hp) VMEM block; y is written back to
    # HBM once per tile by the pipeline.
    for tt in range(time_tile):
        gates = gx_ref[tt] + jnp.dot(h_sc[...], whh_ref[...],
                                     preferred_element_type=jnp.float32)
        # Gate layout is [i, f, o, g]: one contiguous sigmoid slab + one tanh.
        sig = jax.nn.sigmoid(gates[:, :3 * hp])
        i_g = sig[:, 0 * hp:1 * hp]
        f_g = sig[:, 1 * hp:2 * hp]
        o_g = sig[:, 2 * hp:3 * hp]
        g_g = jnp.tanh(gates[:, 3 * hp:4 * hp])

        c_new = f_g * c_sc[...] + i_g * g_g
        h_new = o_g * jnp.tanh(c_new)
        c_sc[...] = c_new
        h_sc[...] = h_new
        y_ref[tt] = h_new.astype(y_ref.dtype)

    @pl.when(t_blk == pl.num_programs(1) - 1)
    def _finalize():
        h_out_ref[...] = h_sc[...].astype(h_out_ref.dtype)
        c_out_ref[...] = c_sc[...].astype(c_out_ref.dtype)


def lstm_recurrence_pallas(gx, whh_t, *, time_tile):
    """Sequential LSTM recurrence given precomputed input projections.

    gx    : (T, Bp, 4*Hp) f32 = x @ W_ih^T + (b_ih + b_hh); gate order [i,f,o,g],
            each gate block padded to Hp (multiple of 128); Bp multiple of 8.
    whh_t : (Hp, 4*Hp) f32 padded / reordered W_hh^T.
    Returns y (T, Bp, Hp), h_T (Bp, Hp), c_T (Bp, Hp).
    """
    T, Bp, G = gx.shape
    Hp = whh_t.shape[0]
    assert G == 4 * Hp and whh_t.shape == (Hp, 4 * Hp)
    assert T % time_tile == 0 and Bp % SUBLANE == 0

    # Split the padded batch into two blocks when large enough so the leading
    # "parallel" grid axis can run on both TensorCores on v7x (nb=1 otherwise).
    if Bp % (2 * SUBLANE) == 0 and Bp >= 2 * SUBLANE:
        bb = Bp // 2
    else:
        bb = Bp
    nb = Bp // bb
    nt = T // time_tile

    # Resident weights: single-buffered when supported (constant index_map ->
    # a second pipeline buffer is pure VMEM waste; matters at H~1150 on v7x).
    if _buffered_one_supported():
        whh_spec = pl.BlockSpec((Hp, 4 * Hp), lambda b, t: (0, 0),
                                pipeline_mode=pl.Buffered(1))
        whh_bufs = 1
    else:
        whh_spec = pl.BlockSpec((Hp, 4 * Hp), lambda b, t: (0, 0))
        whh_bufs = 2

    # Explicit VMEM budget (capped at 64 MiB so the same tiling runs on v7x).
    f32b = 4
    budget = (2 * time_tile * bb * 4 * Hp * f32b      # gx blocks (double-buffered)
              + whh_bufs * Hp * 4 * Hp * f32b         # resident W_hh^T
              + 2 * time_tile * bb * Hp * f32b        # y blocks
              + 2 * 2 * bb * Hp * f32b                # h_T / c_T blocks
              + 2 * bb * Hp * f32b)                   # h/c carry scratch
    vmem_limit = int(min(64 * 1024 * 1024,
                         max(32 * 1024 * 1024, budget * 13 // 10 + (4 << 20))))

    kernel = functools.partial(_lstm_recurrent_kernel, hp=Hp, time_tile=time_tile)

    y, h_T, c_T = pl.pallas_call(
        kernel,
        out_shape=(
            jax.ShapeDtypeStruct((T, Bp, Hp), jnp.float32),   # full sequence of h_t
            jax.ShapeDtypeStruct((Bp, Hp), jnp.float32),      # h_T
            jax.ShapeDtypeStruct((Bp, Hp), jnp.float32),      # c_T
        ),
        grid_spec=pltpu.PrefetchScalarGridSpec(
            num_scalar_prefetch=0,
            grid=(nb, nt),
            in_specs=[
                pl.BlockSpec((time_tile, bb, 4 * Hp), lambda b, t: (t, b, 0)),
                whh_spec,
            ],
            out_specs=[
                pl.BlockSpec((time_tile, bb, Hp), lambda b, t: (t, b, 0)),
                pl.BlockSpec((bb, Hp), lambda b, t: (b, 0)),
                pl.BlockSpec((bb, Hp), lambda b, t: (b, 0)),
            ],
            scratch_shapes=[
                pltpu.VMEM((bb, Hp), jnp.float32),   # h carry
                pltpu.VMEM((bb, Hp), jnp.float32),   # c carry
            ],
        ),
        compiler_params=pltpu.CompilerParams(
            dimension_semantics=("parallel", "arbitrary"),   # time is sequential
            vmem_limit_bytes=vmem_limit,
        ),
    )(gx, whh_t)
    return y, h_T, c_T


# ----------------------------------------------------------------------------
# Parameters: raw (torch-like) init + one-time preparation (hoisted transpose,
# gate reorder, bias fold, lane/sublane padding).
# ----------------------------------------------------------------------------
def init_rnn_model_params(key, vocab_size, ninp, nhid, nlayers):
    """Deterministic synthetic params mirroring RNNModel.__init__ (LSTM type,
    tie_weights=False). Encoder ~ U(-0.1, 0.1); LSTM params ~ U(-1/sqrt(H), 1/sqrt(H))."""
    keys = jax.random.split(key, 1 + 4 * nlayers)
    params = {}
    params["encoder"] = jax.random.uniform(
        keys[0], (vocab_size, ninp), jnp.float32, minval=-0.1, maxval=0.1)
    params["lstm"] = []
    k_idx = 1
    for l in range(nlayers):
        in_dim = ninp if l == 0 else nhid
        out_dim = nhid  # tie_weights=False => every layer's hidden size is nhid
        bound = 1.0 / jnp.sqrt(out_dim).astype(jnp.float32)
        w_ih = jax.random.uniform(keys[k_idx + 0], (4 * out_dim, in_dim),
                                  jnp.float32, minval=-bound, maxval=bound)
        w_hh = jax.random.uniform(keys[k_idx + 1], (4 * out_dim, out_dim),
                                  jnp.float32, minval=-bound, maxval=bound)
        b_ih = jax.random.uniform(keys[k_idx + 2], (4 * out_dim,),
                                  jnp.float32, minval=-bound, maxval=bound)
        b_hh = jax.random.uniform(keys[k_idx + 3], (4 * out_dim,),
                                  jnp.float32, minval=-bound, maxval=bound)
        params["lstm"].append((w_ih, w_hh, b_ih, b_hh))
        k_idx += 4
    # Decoder weights exist in the module but are never used in forward().
    return params


def _prep_gate_matrix(w, H, Hp, in_pad):
    """w: (4H, In) torch layout -> (in_pad, 4*Hp) transposed, gate-reordered
    to [i, f, o, g], each gate column block padded H -> Hp, rows padded to in_pad."""
    In = w.shape[1]
    w4 = jnp.asarray(w, jnp.float32).reshape(4, H, In)[jnp.asarray(_GATE_PERM)]
    w4 = jnp.transpose(w4, (2, 0, 1))                       # (In, 4, H)
    w4 = jnp.pad(w4, ((0, in_pad - In), (0, 0), (0, Hp - H)))
    return w4.reshape(in_pad, 4 * Hp)


def _prep_bias(b_ih, b_hh, H, Hp):
    b = (jnp.asarray(b_ih, jnp.float32) + jnp.asarray(b_hh, jnp.float32))
    b = b.reshape(4, H)[jnp.asarray(_GATE_PERM)]             # (4, H) reordered
    b = jnp.pad(b, ((0, 0), (0, Hp - H)))
    return b.reshape(4 * Hp)


def prepare_rnn_model_params(params, ninp, nhid, nlayers):
    """One-time parameter preparation (done once, not per forward call)."""
    Hp = _round_up(nhid, LANE)
    prepared = {"encoder": jnp.asarray(params["encoder"], jnp.float32),
                "layers": []}
    for l in range(nlayers):
        w_ih, w_hh, b_ih, b_hh = params["lstm"][l]
        in_dim = ninp if l == 0 else nhid
        in_pad = in_dim if l == 0 else Hp   # layers > 0 consume the padded y directly
        prepared["layers"].append({
            "wih_t": _prep_gate_matrix(w_ih, nhid, Hp, in_pad),   # (in_pad, 4Hp)
            "whh_t": _prep_gate_matrix(w_hh, nhid, Hp, Hp),       # (Hp, 4Hp)
            "bias": _prep_bias(b_ih, b_hh, nhid, Hp),             # (4Hp,)
        })
    # TODO(synk): optionally store wih_t/whh_t in bfloat16 (f32 accumulation kept
    # via preferred_element_type) to halve resident-weight VMEM on v6e/v7x.
    return prepared


# ----------------------------------------------------------------------------
# Forward pass (eval mode).
# ----------------------------------------------------------------------------
@functools.partial(jax.jit, static_argnames=("nhid", "time_tile"))
def rnn_model_forward(prepared, input_ids, *, nhid, time_tile):
    """Equivalent of RNNModel.forward(input) in eval mode (dropouts disabled).

    input_ids: (B, T) int32 token ids.
    Returns (result, hidden): result is (B*T, nhid); hidden is a list of (h, c)
    pairs each shaped (1, B, nhid), matching the PyTorch return.
    """
    B, T = input_ids.shape
    Bp = _round_up(B, SUBLANE)

    # Embedding lookup (gather) in plain JAX; eval-mode dropouts are identity.
    emb = jnp.take(prepared["encoder"], input_ids, axis=0)      # (B, T, ninp)
    x = jnp.transpose(emb, (1, 0, 2))                            # time-major (T, B, D)
    x = jnp.pad(x, ((0, 0), (0, Bp - B), (0, 0)))                # sublane-pad batch

    hidden = []
    for layer in prepared["layers"]:
        wih_t, whh_t, bias = layer["wih_t"], layer["whh_t"], layer["bias"]
        T_, Bp_, Din = x.shape
        # Input projection hoisted off the serial critical path: one large
        # (T*Bp, Din) x (Din, 4Hp) matmul for the whole sequence, bias folded in.
        gx = (jnp.dot(x.reshape(T_ * Bp_, Din), wih_t,
                      preferred_element_type=jnp.float32) + bias)
        gx = gx.reshape(T_, Bp_, wih_t.shape[1])
        y, h_T, c_T = lstm_recurrence_pallas(gx, whh_t, time_tile=time_tile)
        hidden.append((h_T[None, :B, :nhid], c_T[None, :B, :nhid]))  # (1, B, H)
        x = y                                                    # padded (T, Bp, Hp)

    out = x[:, :B, :nhid]                                        # strip padding
    out = jnp.transpose(out, (1, 0, 2))                          # (B, T, H) batch_first
    result = out.reshape(B * T, nhid)                            # output.view(B*T, H)
    return result, hidden


# ----------------------------------------------------------------------------
# Pure-JAX reference (lax.scan) used to sanity-check the Pallas kernel.
# ----------------------------------------------------------------------------
def _lstm_layer_ref(x_tbd, w_ih, w_hh, b_ih, b_hh):
    H = w_hh.shape[1]
    B = x_tbd.shape[1]

    def step(carry, x_t):
        h, c = carry
        gates = x_t @ w_ih.T + h @ w_hh.T + b_ih + b_hh
        i = jax.nn.sigmoid(gates[:, 0 * H:1 * H])
        f = jax.nn.sigmoid(gates[:, 1 * H:2 * H])
        g = jnp.tanh(gates[:, 2 * H:3 * H])
        o = jax.nn.sigmoid(gates[:, 3 * H:4 * H])
        c = f * c + i * g
        h = o * jnp.tanh(c)
        return (h, c), h

    h0 = jnp.zeros((B, H), jnp.float32)
    c0 = jnp.zeros((B, H), jnp.float32)
    (hT, cT), ys = jax.lax.scan(step, (h0, c0), x_tbd)
    return ys, hT, cT


def _reference_forward(params, input_ids, nlayers):
    emb = jnp.take(params["encoder"], input_ids, axis=0)
    x = jnp.transpose(emb, (1, 0, 2))
    hidden = []
    for l in range(nlayers):
        w_ih, w_hh, b_ih, b_hh = params["lstm"][l]
        x, hT, cT = _lstm_layer_ref(x, w_ih, w_hh, b_ih, b_hh)
        hidden.append((hT[None], cT[None]))
    out = jnp.transpose(x, (1, 0, 2))
    return out.reshape(-1, out.shape[-1]), hidden


if __name__ == "__main__":
    # Small shapes: vocab=50, ninp=32, nhid=32, nlayers=2, batch=2, seq=8.
    VOCAB, NINP, NHID, NLAYERS = 50, 32, 32, 2
    B, T = 2, 8

    key = jax.random.PRNGKey(0)
    k_param, k_ids = jax.random.split(key)
    params = init_rnn_model_params(k_param, VOCAB, NINP, NHID, NLAYERS)
    prepared = prepare_rnn_model_params(params, NINP, NHID, NLAYERS)
    input_ids = jax.random.randint(k_ids, (B, T), 0, VOCAB, dtype=jnp.int32)

    _buffered_one_supported()            # probe once, outside the jitted forward
    time_tile = _pick_time_tile(T)       # timesteps per grid iteration (divides T)

    result, hidden = rnn_model_forward(prepared, input_ids,
                                       nhid=NHID, time_tile=time_tile)
    result = jax.block_until_ready(result)

    assert result.shape == (B * T, NHID), result.shape
    assert len(hidden) == NLAYERS
    assert hidden[0][0].shape == (1, B, NHID)

    # Numerical sanity check against pure-JAX scan reference.
    ref_result, ref_hidden = _reference_forward(params, input_ids, NLAYERS)
    assert jnp.allclose(result, ref_result, atol=1e-5, rtol=1e-5), \
        float(jnp.max(jnp.abs(result - ref_result)))
    for l in range(NLAYERS):
        assert jnp.allclose(hidden[l][0], ref_hidden[l][0], atol=1e-5, rtol=1e-5)
        assert jnp.allclose(hidden[l][1], ref_hidden[l][1], atol=1e-5, rtol=1e-5)

    # TODO(synk): training-mode dropout paths (embedded_dropout / LockedDropout /
    # WeightDrop) are identity in eval mode and are not reproduced here.
    print("KERNEL_OK")
</pallas_src>

<mosaic_0001>
module attributes {stable_mosaic.version = 11 : i64} {
  func.func @_k(%arg0: i32, %arg1: memref<8x128xf32, #tpu.memory_space<vmem>>, %arg2: memref<8x128xf32, #tpu.memory_space<vmem>>) attributes {dimension_semantics = [#tpu.dimension_semantics<arbitrary>], iteration_bounds = array<i64: 1>, scalar_prefetch = 0 : i64, scratch_operands = 0 : i64, tpu.core_type = #tpu.core_type<tc>, window_params = [{pipeline_mode = #tpu.pipeline_mode<synchronous>, transform_indices = @transform_0, window_bounds = array<i64: 8, 128>}, {pipeline_mode = #tpu.pipeline_mode<synchronous>, transform_indices = @transform_1, window_bounds = array<i64: 8, 128>}]} {
    %c0 = arith.constant 0 : index
    %c0_0 = arith.constant 0 : index
    %0 = vector.load %arg1[%c0, %c0_0] : memref<8x128xf32, #tpu.memory_space<vmem>>, vector<8x128xf32>
    %cst = arith.constant 1.000000e+00 : f32
    %1 = vector.broadcast %cst : f32 to vector<8x128xf32>
    %2 = arith.addf %0, %1 : vector<8x128xf32>
    %c0_1 = arith.constant 0 : index
    %c0_2 = arith.constant 0 : index
    %3 = vector.load %arg2[%c0_1, %c0_2] : memref<8x128xf32, #tpu.memory_space<vmem>>, vector<8x128xf32>
    tpu.vector_store %arg2[%c0_1, %c0_2], %2 {strides = array<i32>} : memref<8x128xf32, #tpu.memory_space<vmem>>, vector<8x128xf32>,
    return
  }
  func.func @transform_0(%arg0: i32) -> (i32, i32) {
    %c0_i32 = arith.constant 0 : i32
    %c0_i32_0 = arith.constant 0 : i32
    %c0_i32_1 = arith.constant 0 : i32
    return %c0_i32, %c0_i32_0 : i32, i32
  }
  func.func @transform_1(%arg0: i32) -> (i32, i32) {
    %c0_i32 = arith.constant 0 : i32
    %c0_i32_0 = arith.constant 0 : i32
    %c0_i32_1 = arith.constant 0 : i32
    return %c0_i32, %c0_i32_0 : i32, i32
  }
}

module attributes {stable_mosaic.version = 11 : i64} {
  func.func @_lstm_recurrent_kernel(%arg0: i32, %arg1: i32, %arg2: memref<8x8x512xf32, #tpu.memory_space<vmem>>, %arg3: memref<128x512xf32, #tpu.memory_space<vmem>>, %arg4: memref<8x8x128xf32, #tpu.memory_space<vmem>>, %arg5: memref<8x128xf32, #tpu.memory_space<vmem>>, %arg6: memref<8x128xf32, #tpu.memory_space<vmem>>, %arg7: memref<8x128xf32, #tpu.memory_space<vmem>>, %arg8: memref<8x128xf32, #tpu.memory_space<vmem>>) attributes {dimension_semantics = [#tpu.dimension_semantics<parallel>, #tpu.dimension_semantics<arbitrary>], iteration_bounds = array<i64: 1, 1>, scalar_prefetch = 0 : i64, scratch_operands = 2 : i64, tpu.core_type = #tpu.core_type<tc>, window_params = [{transform_indices = @transform_0, window_bounds = array<i64: 8, 8, 512>}, {pipeline_mode = #tpu.pipeline_mode<synchronous>, transform_indices = @transform_1, window_bounds = array<i64: 128, 512>}, {transform_indices = @transform_2, window_bounds = array<i64: 8, 8, 128>}, {transform_indices = @transform_3, window_bounds = array<i64: 8, 128>}, {transform_indices = @transform_4, window_bounds = array<i64: 8, 128>}]} {
    %c0_i32 = arith.constant 0 : i32
    %0 = arith.cmpi eq, %arg1, %c0_i32 : i32
    %1 = arith.extui %0 : i1 to i32
    %c0_i32_0 = arith.constant 0 : i32
    %2 = arith.cmpi ne, %1, %c0_i32_0 : i32
    scf.if %2 {
      %cst_138 = arith.constant 0.000000e+00 : f32
      %230 = vector.broadcast %cst_138 : f32 to vector<8x128xf32>
      %c0_139 = arith.constant 0 : index
      %c0_140 = arith.constant 0 : index
      %231 = vector.load %arg7[%c0_139, %c0_140] : memref<8x128xf32, #tpu.memory_space<vmem>>, vector<8x128xf32>
      tpu.vector_store %arg7[%c0_139, %c0_140], %230 {strides = array<i32>} : memref<8x128xf32, #tpu.memory_space<vmem>>, vector<8x128xf32>,
      %cst_141 = arith.constant 0.000000e+00 : f32
      %232 = vector.broadcast %cst_141 : f32 to vector<8x128xf32>
      %c0_142 = arith.constant 0 : index
      %c0_143 = arith.constant 0 : index
      %233 = vector.load %arg8[%c0_142, %c0_143] : memref<8x128xf32, #tpu.memory_space<vmem>>, vector<8x128xf32>
      tpu.vector_store %arg8[%c0_142, %c0_143], %232 {strides = array<i32>} : memref<8x128xf32, #tpu.memory_space<vmem>>, vector<8x128xf32>,
    } else {
    }
    %c0 = arith.constant 0 : index
    %c0_1 = arith.constant 0 : index
    %c0_2 = arith.constant 0 : index
    %3 = vector.load %arg2[%c0, %c0_1, %c0_2] : memref<8x8x512xf32, #tpu.memory_space<vmem>>, vector<1x8x512xf32>
    %4 = vector.shape_cast %3 : vector<1x8x512xf32> to vector<8x512xf32>
    %c0_3 = arith.constant 0 : index
    %c0_4 = arith.constant 0 : index
    %5 = vector.load %arg7[%c0_3, %c0_4] : memref<8x128xf32, #tpu.memory_space<vmem>>, vector<8x128xf32>
    %c0_5 = arith.constant 0 : index
    %c0_6 = arith.constant 0 : index
    %6 = vector.load %arg3[%c0_5, %c0_6] : memref<128x512xf32, #tpu.memory_space<vmem>>, vector<128x512xf32>
    %cst = arith.constant dense<0.000000e+00> : vector<8x512xf32>
    %7 = tpu.matmul %5, %6, %cst {dimension_numbers = #tpu.dot_dimension_numbers<[1], [0], [0], [1], [0, 0, 1, 1], [], []>} : vector<8x128xf32>, vector<128x512xf32>, vector<8x512xf32> -> vector<8x512xf32>
    %8 = arith.addf %4, %7 : vector<8x512xf32>
    %9 = vector.extract_strided_slice %8 {offsets = [0, 0], sizes = [8, 384], strides = [1, 1]} : vector<8x512xf32> to vector<8x384xf32>
    %10 = arith.negf %9 : vector<8x384xf32>
    %11 = math.exp %10 : vector<8x384xf32>
    %cst_7 = arith.constant 1.000000e+00 : f32
    %12 = vector.broadcast %cst_7 : f32 to vector<8x384xf32>
    %13 = arith.addf %12, %11 : vector<8x384xf32>
    %14 = arith.divf %12, %13 : vector<8x384xf32>
    %15 = vector.extract_strided_slice %14 {offsets = [0, 0], sizes = [8, 128], strides = [1, 1]} : vector<8x384xf32> to vector<8x128xf32>
    %16 = vector.extract_strided_slice %14 {offsets = [0, 128], sizes = [8, 128], strides = [1, 1]} : vector<8x384xf32> to vector<8x128xf32>
    %17 = vector.extract_strided_slice %14 {offsets = [0, 256], sizes = [8, 128], strides = [1, 1]} : vector<8x384xf32> to vector<8x128xf32>
    %18 = vector.extract_strided_slice %8 {offsets = [0, 384], sizes = [8, 128], strides = [1, 1]} : vector<8x512xf32> to vector<8x128xf32>
    %19 = math.tanh %18 : vector<8x128xf32>
    %c0_8 = arith.constant 0 : index
    %c0_9 = arith.constant 0 : index
    %20 = vector.load %arg8[%c0_8, %c0_9] : memref<8x128xf32, #tpu.memory_space<vmem>>, vector<8x128xf32>
    %21 = arith.mulf %16, %20 : vector<8x128xf32>
    %22 = arith.mulf %15, %19 : vector<8x128xf32>
    %23 = arith.addf %21, %22 : vector<8x128xf32>
    %24 = math.tanh %23 : vector<8x128xf32>
    %25 = arith.mulf %17, %24 : vector<8x128xf32>
    %c0_10 = arith.constant 0 : index
    %c0_11 = arith.constant 0 : index
    %26 = vector.load %arg8[%c0_10, %c0_11] : memref<8x128xf32, #tpu.memory_space<vmem>>, vector<8x128xf32>
    tpu.vector_store %arg8[%c0_10, %c0_11], %23 {strides = array<i32>} : memref<8x128xf32, #tpu.memory_space<vmem>>, vector<8x128xf32>,
    %c0_12 = arith.constant 0 : index
    %c0_13 = arith.constant 0 : index
    %27 = vector.load %arg7[%c0_12, %c0_13] : memref<8x128xf32, #tpu.memory_space<vmem>>, vector<8x128xf32>
    tpu.vector_store %arg7[%c0_12, %c0_13], %25 {strides = array<i32>} : memref<8x128xf32, #tpu.memory_space<vmem>>, vector<8x128xf32>,
    %c0_14 = arith.constant 0 : index
    %c0_15 = arith.constant 0 : index
    %c0_16 = arith.constant 0 : index
    %28 = vector.load %arg4[%c0_14, %c0_15, %c0_16] : memref<8x8x128xf32, #tpu.memory_space<vmem>>, vector<1x8x128xf32>
    %29 = vector.shape_cast %28 : vector<1x8x128xf32> to vector<8x128xf32>
    %30 = vector.shape_cast %25 : vector<8x128xf32> to vector<1x8x128xf32>
    tpu.vector_store %arg4[%c0_14, %c0_15, %c0_16], %30 {strides = array<i32>} : memref<8x8x128xf32, #tpu.memory_space<vmem>>, vector<1x8x128xf32>,
    %c1 = arith.constant 1 : index
    %c0_17 = arith.constant 0 : index
    %c0_18 = arith.constant 0 : index
    %31 = vector.load %arg2[%c1, %c0_17, %c0_18] : memref<8x8x512xf32, #tpu.memory_space<vmem>>, vector<1x8x512xf32>
    %32 = vector.shape_cast %31 : vector<1x8x512xf32> to vector<8x512xf32>
    %c0_19 = arith.constant 0 : index
    %c0_20 = arith.constant 0 : index
    %33 = vector.load %arg7[%c0_19, %c0_20] : memref<8x128xf32, #tpu.memory_space<vmem>>, vector<8x128xf32>
    %c0_21 = arith.constant 0 : index
    %c0_22 = arith.constant 0 : index
    %34 = vector.load %arg3[%c0_21, %c0_22] : memref<128x512xf32, #tpu.memory_space<vmem>>, vector<128x512xf32>
    %cst_23 = arith.constant dense<0.000000e+00> : vector<8x512xf32>
    %35 = tpu.matmul %33, %34, %cst_23 {dimension_numbers = #tpu.dot_dimension_numbers<[1], [0], [0], [1], [0, 0, 1, 1], [], []>} : vector<8x128xf32>, vector<128x512xf32>, vector<8x512xf32> -> vector<8x512xf32>
    %36 = arith.addf %32, %35 : vector<8x512xf32>
    %37 = vector.extract_strided_slice %36 {offsets = [0, 0], sizes = [8, 384], strides = [1, 1]} : vector<8x512xf32> to vector<8x384xf32>
    %38 = arith.negf %37 : vector<8x384xf32>
    %39 = math.exp %38 : vector<8x384xf32>
    %cst_24 = arith.constant 1.000000e+00 : f32
    %40 = vector.broadcast %cst_24 : f32 to vector<8x384xf32>
    %41 = arith.addf %40, %39 : vector<8x384xf32>
    %42 = arith.divf %40, %41 : vector<8x384xf32>
    %43 = vector.extract_strided_slice %42 {offsets = [0, 0], sizes = [8, 128], strides = [1, 1]} : vector<8x384xf32> to vector<8x128xf32>
    %44 = vector.extract_strided_slice %42 {offsets = [0, 128], sizes = [8, 128], strides = [1, 1]} : vector<8x384xf32> to vector<8x128xf32>
    %45 = vector.extract_strided_slice %42 {offsets = [0, 256], sizes = [8, 128], strides = [1, 1]} : vector<8x384xf32> to vector<8x128xf32>
    %46 = vector.extract_strided_slice %36 {offsets = [0, 384], sizes = [8, 128], strides = [1, 1]} : vector<8x512xf32> to vector<8x128xf32>
    %47 = math.tanh %46 : vector<8x128xf32>
    %c0_25 = arith.constant 0 : index
    %c0_26 = arith.constant 0 : index
    %48 = vector.load %arg8[%c0_25, %c0_26] : memref<8x128xf32, #tpu.memory_space<vmem>>, vector<8x128xf32>
    %49 = arith.mulf %44, %48 : vector<8x128xf32>
    %50 = arith.mulf %43, %47 : vector<8x128xf32>
    %51 = arith.addf %49, %50 : vector<8x128xf32>
    %52 = math.tanh %51 : vector<8x128xf32>
    %53 = arith.mulf %45, %52 : vector<8x128xf32>
    %c0_27 = arith.constant 0 : index
    %c0_28 = arith.constant 0 : index
    %54 = vector.load %arg8[%c0_27, %c0_28] : memref<8x128xf32, #tpu.memory_space<vmem>>, vector<8x128xf32>
    tpu.vector_store %arg8[%c0_27, %c0_28], %51 {strides = array<i32>} : memref<8x128xf32, #tpu.memory_space<vmem>>, vector<8x128xf32>,
    %c0_29 = arith.constant 0 : index
    %c0_30 = arith.constant 0 : index
    %55 = vector.load %arg7[%c0_29, %c0_30] : memref<8x128xf32, #tpu.memory_space<vmem>>, vector<8x128xf32>
    tpu.vector_store %arg7[%c0_29, %c0_30], %53 {strides = array<i32>} : memref<8x128xf32, #tpu.memory_space<vmem>>, vector<8x128xf32>,
    %c1_31 = arith.constant 1 : index
    %c0_32 = arith.constant 0 : index
    %c0_33 = arith.constant 0 : index
    %56 = vector.load %arg4[%c1_31, %c0_32, %c0_33] : memref<8x8x128xf32, #tpu.memory_space<vmem>>, vector<1x8x128xf32>
    %57 = vector.shape_cast %56 : vector<1x8x128xf32> to vector<8x128xf32>
    %58 = vector.shape_cast %53 : vector<8x128xf32> to vector<1x8x128xf32>
    tpu.vector_store %arg4[%c1_31, %c0_32, %c0_33], %58 {strides = array<i32>} : memref<8x8x128xf32, #tpu.memory_space<vmem>>, vector<1x8x128xf32>,
    %c2 = arith.constant 2 : index
    %c0_34 = arith.constant 0 : index
    %c0_35 = arith.constant 0 : index
    %59 = vector.load %arg2[%c2, %c0_34, %c0_35] : memref<8x8x512xf32, #tpu.memory_space<vmem>>, vector<1x8x512xf32>
    %60 = vector.shape_cast %59 : vector<1x8x512xf32> to vector<8x512xf32>
    %c0_36 = arith.constant 0 : index
    %c0_37 = arith.constant 0 : index
    %61 = vector.load %arg7[%c0_36, %c0_37] : memref<8x128xf32, #tpu.memory_space<vmem>>, vector<8x128xf32>
    %c0_38 = arith.constant 0 : index
    %c0_39 = arith.constant 0 : index
    %62 = vector.load %arg3[%c0_38, %c0_39] : memref<128x512xf32, #tpu.memory_space<vmem>>, vector<128x512xf32>
    %cst_40 = arith.constant dense<0.000000e+00> : vector<8x512xf32>
    %63 = tpu.matmul %61, %62, %cst_40 {dimension_numbers = #tpu.dot_dimension_numbers<[1], [0], [0], [1], [0, 0, 1, 1], [], []>} : vector<8x128xf32>, vector<128x512xf32>, vector<8x512xf32> -> vector<8x512xf32>
    %64 = arith.addf %60, %63 : vector<8x512xf32>
    %65 = vector.extract_strided_slice %64 {offsets = [0, 0], sizes = [8, 384], strides = [1, 1]} : vector<8x512xf32> to vector<8x384xf32>
    %66 = arith.negf %65 : vector<8x384xf32>
    %67 = math.exp %66 : vector<8x384xf32>
    %cst_41 = arith.constant 1.000000e+00 : f32
    %68 = vector.broadcast %cst_41 : f32 to vector<8x384xf32>
    %69 = arith.addf %68, %67 : vector<8x384xf32>
    %70 = arith.divf %68, %69 : vector<8x384xf32>
    %71 = vector.extract_strided_slice %70 {offsets = [0, 0], sizes = [8, 128], strides = [1, 1]} : vector<8x384xf32> to vector<8x128xf32>
    %72 = vector.extract_strided_slice %70 {offsets = [0, 128], sizes = [8, 128], strides = [1, 1]} : vector<8x384xf32> to vector<8x128xf32>
    %73 = vector.extract_strided_slice %70 {offsets = [0, 256], sizes = [8, 128], strides = [1, 1]} : vector<8x384xf32> to vector<8x128xf32>
    %74 = vector.extract_strided_slice %64 {offsets = [0, 384], sizes = [8, 128], strides = [1, 1]} : vector<8x512xf32> to vector<8x128xf32>
    %75 = math.tanh %74 : vector<8x128xf32>
    %c0_42 = arith.constant 0 : index
    %c0_43 = arith.constant 0 : index
    %76 = vector.load %arg8[%c0_42, %c0_43] : memref<8x128xf32, #tpu.memory_space<vmem>>, vector<8x128xf32>
    %77 = arith.mulf %72, %76 : vector<8x128xf32>
    %78 = arith.mulf %71, %75 : vector<8x128xf32>
    %79 = arith.addf %77, %78 : vector<8x128xf32>
    %80 = math.tanh %79 : vector<8x128xf32>
    %81 = arith.mulf %73, %80 : vector<8x128xf32>
    %c0_44 = arith.constant 0 : index
    %c0_45 = arith.constant 0 : index
    %82 = vector.load %arg8[%c0_44, %c0_45] : memref<8x128xf32, #tpu.memory_space<vmem>>, vector<8x128xf32>
    tpu.vector_store %arg8[%c0_44, %c0_45], %79 {strides = array<i32>} : memref<8x128xf32, #tpu.memory_space<vmem>>, vector<8x128xf32>,
    %c0_46 = arith.constant 0 : index
    %c0_47 = arith.constant 0 : index
    %83 = vector.load %arg7[%c0_46, %c0_47] : memref<8x128xf32, #tpu.memory_space<vmem>>, vector<8x128xf32>
    tpu.vector_store %arg7[%c0_46, %c0_47], %81 {strides = array<i32>} : memref<8x128xf32, #tpu.memory_space<vmem>>, vector<8x128xf32>,
    %c2_48 = arith.constant 2 : index
    %c0_49 = arith.constant 0 : index
    %c0_50 = arith.constant 0 : index
    %84 = vector.load %arg4[%c2_48, %c0_49, %c0_50] : memref<8x8x128xf32, #tpu.memory_space<vmem>>, vector<1x8x128xf32>
    %85 = vector.shape_cast %84 : vector<1x8x128xf32> to vector<8x128xf32>
    %86 = vector.shape_cast %81 : vector<8x128xf32> to vector<1x8x128xf32>
    tpu.vector_store %arg4[%c2_48, %c0_49, %c0_50], %86 {strides = array<i32>} : memref<8x8x128xf32, #tpu.memory_space<vmem>>, vector<1x8x128xf32>,
    %c3 = arith.constant 3 : index
    %c0_51 = arith.constant 0 : index
    %c0_52 = arith.constant 0 : index
    %87 = vector.load %arg2[%c3, %c0_51, %c0_52] : memref<8x8x512xf32, #tpu.memory_space<vmem>>, vector<1x8x512xf32>
    %88 = vector.shape_cast %87 : vector<1x8x512xf32> to vector<8x512xf32>
    %c0_53 = arith.constant 0 : index
    %c0_54 = arith.constant 0 : index
    %89 = vector.load %arg7[%c0_53, %c0_54] : memref<8x128xf32, #tpu.memory_space<vmem>>, vector<8x128xf32>
    %c0_55 = arith.constant 0 : index
    %c0_56 = arith.constant 0 : index
    %90 = vector.load %arg3[%c0_55, %c0_56] : memref<128x512xf32, #tpu.memory_space<vmem>>, vector<128x512xf32>
    %cst_57 = arith.constant dense<0.000000e+00> : vector<8x512xf32>
    %91 = tpu.matmul %89, %90, %cst_57 {dimension_numbers = #tpu.dot_dimension_numbers<[1], [0], [0], [1], [0, 0, 1, 1], [], []>} : vector<8x128xf32>, vector<128x512xf32>, vector<8x512xf32> -> vector<8x512xf32>
    %92 = arith.addf %88, %91 : vector<8x512xf32>
    %93 = vector.extract_strided_slice %92 {offsets = [0, 0], sizes = [8, 384], strides = [1, 1]} : vector<8x512xf32> to vector<8x384xf32>
    %94 = arith.negf %93 : vector<8x384xf32>
    %95 = math.exp %94 : vector<8x384xf32>
    %cst_58 = arith.constant 1.000000e+00 : f32
    %96 = vector.broadcast %cst_58 : f32 to vector<8x384xf32>
    %97 = arith.addf %96, %95 : vector<8x384xf32>
    %98 = arith.divf %96, %97 : vector<8x384xf32>
    %99 = vector.extract_strided_slice %98 {offsets = [0, 0], sizes = [8, 128], strides = [1, 1]} : vector<8x384xf32> to vector<8x128xf32>
    %100 = vector.extract_strided_slice %98 {offsets = [0, 128], sizes = [8, 128], strides = [1, 1]} : vector<8x384xf32> to vector<8x128xf32>
    %101 = vector.extract_strided_slice %98 {offsets = [0, 256], sizes = [8, 128], strides = [1, 1]} : vector<8x384xf32> to vector<8x128xf32>
    %102 = vector.extract_strided_slice %92 {offsets = [0, 384], sizes = [8, 128], strides = [1, 1]} : vector<8x512xf32> to vector<8x128xf32>
    %103 = math.tanh %102 : vector<8x128xf32>
    %c0_59 = arith.constant 0 : index
    %c0_60 = arith.constant 0 : index
    %104 = vector.load %arg8[%c0_59, %c0_60] : memref<8x128xf32, #tpu.memory_space<vmem>>, vector<8x128xf32>
    %105 = arith.mulf %100, %104 : vector<8x128xf32>
    %106 = arith.mulf %99, %103 : vector<8x128xf32>
    %107 = arith.addf %105, %106 : vector<8x128xf32>
    %108 = math.tanh %107 : vector<8x128xf32>
    %109 = arith.mulf %101, %108 : vector<8x128xf32>
    %c0_61 = arith.constant 0 : index
    %c0_62 = arith.constant 0 : index
    %110 = vector.load %arg8[%c0_61, %c0_62] : memref<8x128xf32, #tpu.memory_space<vmem>>, vector<8x128xf32>
    tpu.vector_store %arg8[%c0_61, %c0_62], %107 {strides = array<i32>} : memref<8x128xf32, #tpu.memory_space<vmem>>, vector<8x128xf32>,
    %c0_63 = arith.constant 0 : index
    %c0_64 = arith.constant 0 : index
    %111 = vector.load %arg7[%c0_63, %c0_64] : memref<8x128xf32, #tpu.memory_space<vmem>>, vector<8x128xf32>
    tpu.vector_store %arg7[%c0_63, %c0_64], %109 {strides = array<i32>} : memref<8x128xf32, #tpu.memory_space<vmem>>, vector<8x128xf32>,
    %c3_65 = arith.constant 3 : index
    %c0_66 = arith.constant 0 : index
    %c0_67 = arith.constant 0 : index
    %112 = vector.load %arg4[%c3_65, %c0_66, %c0_67] : memref<8x8x128xf32, #tpu.memory_space<vmem>>, vector<1x8x128xf32>
    %113 = vector.shape_cast %112 : vector<1x8x128xf32> to vector<8x128xf32>
    %114 = vector.shape_cast %109 : vector<8x128xf32> to vector<1x8x128xf32>
    tpu.vector_store %arg4[%c3_65, %c0_66, %c0_67], %114 {strides = array<i32>} : memref<8x8x128xf32, #tpu.memory_space<vmem>>, vector<1x8x128xf32>,
    %c4 = arith.constant 4 : index
    %c0_68 = arith.constant 0 : index
    %c0_69 = arith.constant 0 : index
    %115 = vector.load %arg2[%c4, %c0_68, %c0_69] : memref<8x8x512xf32, #tpu.memory_space<vmem>>, vector<1x8x512xf32>
    %116 = vector.shape_cast %115 : vector<1x8x512xf32> to vector<8x512xf32>
    %c0_70 = arith.constant 0 : index
    %c0_71 = arith.constant 0 : index
    %117 = vector.load %arg7[%c0_70, %c0_71] : memref<8x128xf32, #tpu.memory_space<vmem>>, vector<8x128xf32>
    %c0_72 = arith.constant 0 : index
    %c0_73 = arith.constant 0 : index
    %118 = vector.load %arg3[%c0_72, %c0_73] : memref<128x512xf32, #tpu.memory_space<vmem>>, vector<128x512xf32>
    %cst_74 = arith.constant dense<0.000000e+00> : vector<8x512xf32>
    %119 = tpu.matmul %117, %118, %cst_74 {dimension_numbers = #tpu.dot_dimension_numbers<[1], [0], [0], [1], [0, 0, 1, 1], [], []>} : vector<8x128xf32>, vector<128x512xf32>, vector<8x512xf32> -> vector<8x512xf32>
    %120 = arith.addf %116, %119 : vector<8x512xf32>
    %121 = vector.extract_strided_slice %120 {offsets = [0, 0], sizes = [8, 384], strides = [1, 1]} : vector<8x512xf32> to vector<8x384xf32>
    %122 = arith.negf %121 : vector<8x384xf32>
    %123 = math.exp %122 : vector<8x384xf32>
    %cst_75 = arith.constant 1.000000e+00 : f32
    %124 = vector.broadcast %cst_75 : f32 to vector<8x384xf32>
    %125 = arith.addf %124, %123 : vector<8x384xf32>
    %126 = arith.divf %124, %125 : vector<8x384xf32>
    %127 = vector.extract_strided_slice %126 {offsets = [0, 0], sizes = [8, 128], strides = [1, 1]} : vector<8x384xf32> to vector<8x128xf32>
    %128 = vector.extract_strided_slice %126 {offsets = [0, 128], sizes = [8, 128], strides = [1, 1]} : vector<8x384xf32> to vector<8x128xf32>
    %129 = vector.extract_strided_slice %126 {offsets = [0, 256], sizes = [8, 128], strides = [1, 1]} : vector<8x384xf32> to vector<8x128xf32>
    %130 = vector.extract_strided_slice %120 {offsets = [0, 384], sizes = [8, 128], strides = [1, 1]} : vector<8x512xf32> to vector<8x128xf32>
    %131 = math.tanh %130 : vector<8x128xf32>
    %c0_76 = arith.constant 0 : index
    %c0_77 = arith.constant 0 : index
    %132 = vector.load %arg8[%c0_76, %c0_77] : memref<8x128xf32, #tpu.memory_space<vmem>>, vector<8x128xf32>
    %133 = arith.mulf %128, %132 : vector<8x128xf32>
    %134 = arith.mulf %127, %131 : vector<8x128xf32>
    %135 = arith.addf %133, %134 : vector<8x128xf32>
    %136 = math.tanh %135 : vector<8x128xf32>
    %137 = arith.mulf %129, %136 : vector<8x128xf32>
    %c0_78 = arith.constant 0 : index
    %c0_79 = arith.constant 0 : index
    %138 = vector.load %arg8[%c0_78, %c0_79] : memref<8x128xf32, #tpu.memory_space<vmem>>, vector<8x128xf32>
    tpu.vector_store %arg8[%c0_78, %c0_79], %135 {strides = array<i32>} : memref<8x128xf32, #tpu.memory_space<vmem>>, vector<8x128xf32>,
    %c0_80 = arith.constant 0 : index
    %c0_81 = arith.constant 0 : index
    %139 = vector.load %arg7[%c0_80, %c0_81] : memref<8x128xf32, #tpu.memory_space<vmem>>, vector<8x128xf32>
    tpu.vector_store %arg7[%c0_80, %c0_81], %137 {strides = array<i32>} : memref<8x128xf32, #tpu.memory_space<vmem>>, vector<8x128xf32>,
    %c4_82 = arith.constant 4 : index
    %c0_83 = arith.constant 0 : index
    %c0_84 = arith.constant 0 : index
    %140 = vector.load %arg4[%c4_82, %c0_83, %c0_84] : memref<8x8x128xf32, #tpu.memory_space<vmem>>, vector<1x8x128xf32>
    %141 = vector.shape_cast %140 : vector<1x8x128xf32> to vector<8x128xf32>
    %142 = vector.shape_cast %137 : vector<8x128xf32> to vector<1x8x128xf32>
    tpu.vector_store %arg4[%c4_82, %c0_83, %c0_84], %142 {strides = array<i32>} : memref<8x8x128xf32, #tpu.memory_space<vmem>>, vector<1x8x128xf32>,
    %c5 = arith.constant 5 : index
    %c0_85 = arith.constant 0 : index
    %c0_86 = arith.constant 0 : index
    %143 = vector.load %arg2[%c5, %c0_85, %c0_86] : memref<8x8x512xf32, #tpu.memory_space<vmem>>, vector<1x8x512xf32>
    %144 = vector.shape_cast %143 : vector<1x8x512xf32> to vector<8x512xf32>
    %c0_87 = arith.constant 0 : index
    %c0_88 = arith.constant 0 : index
    %145 = vector.load %arg7[%c0_87, %c0_88] : memref<8x128xf32, #tpu.memory_space<vmem>>, vector<8x128xf32>
    %c0_89 = arith.constant 0 : index
    %c0_90 = arith.constant 0 : index
    %146 = vector.load %arg3[%c0_89, %c0_90] : memref<128x512xf32, #tpu.memory_space<vmem>>, vector<128x512xf32>
    %cst_91 = arith.constant dense<0.000000e+00> : vector<8x512xf32>
    %147 = tpu.matmul %145, %146, %cst_91 {dimension_numbers = #tpu.dot_dimension_numbers<[1], [0], [0], [1], [0, 0, 1, 1], [], []>} : vector<8x128xf32>, vector<128x512xf32>, vector<8x512xf32> -> vector<8x512xf32>
    %148 = arith.addf %144, %147 : vector<8x512xf32>
    %149 = vector.extract_strided_slice %148 {offsets = [0, 0], sizes = [8, 384], strides = [1, 1]} : vector<8x512xf32> to vector<8x384xf32>
    %150 = arith.negf %149 : vector<8x384xf32>
    %151 = math.exp %150 : vector<8x384xf32>
    %cst_92 = arith.constant 1.000000e+00 : f32
    %152 = vector.broadcast %cst_92 : f32 to vector<8x384xf32>
    %153 = arith.addf %152, %151 : vector<8x384xf32>
    %154 = arith.divf %152, %153 : vector<8x384xf32>
    %155 = vector.extract_strided_slice %154 {offsets = [0, 0], sizes = [8, 128], strides = [1, 1]} : vector<8x384xf32> to vector<8x128xf32>
    %156 = vector.extract_strided_slice %154 {offsets = [0, 128], sizes = [8, 128], strides = [1, 1]} : vector<8x384xf32> to vector<8x128xf32>
    %157 = vector.extract_strided_slice %154 {offsets = [0, 256], sizes = [8, 128], strides = [1, 1]} : vector<8x384xf32> to vector<8x128xf32>
    %158 = vector.extract_strided_slice %148 {offsets = [0, 384], sizes = [8, 128], strides = [1, 1]} : vector<8x512xf32> to vector<8x128xf32>
    %159 = math.tanh %158 : vector<8x128xf32>
    %c0_93 = arith.constant 0 : index
    %c0_94 = arith.constant 0 : index
    %160 = vector.load %arg8[%c0_93, %c0_94] : memref<8x128xf32, #tpu.memory_space<vmem>>, vector<8x128xf32>
    %161 = arith.mulf %156, %160 : vector<8x128xf32>
    %162 = arith.mulf %155, %159 : vector<8x128xf32>
    %163 = arith.addf %161, %162 : vector<8x128xf32>
    %164 = math.tanh %163 : vector<8x128xf32>
    %165 = arith.mulf %157, %164 : vector<8x128xf32>
    %c0_95 = arith.constant 0 : index
    %c0_96 = arith.constant 0 : index
    %166 = vector.load %arg8[%c0_95, %c0_96] : memref<8x128xf32, #tpu.memory_space<vmem>>, vector<8x128xf32>
    tpu.vector_store %arg8[%c0_95, %c0_96], %163 {strides = array<i32>} : memref<8x128xf32, #tpu.memory_space<vmem>>, vector<8x128xf32>,
    %c0_97 = arith.constant 0 : index
    %c0_98 = arith.constant 0 : index
    %167 = vector.load %arg7[%c0_97, %c0_98] : memref<8x128xf32, #tpu.memory_space<vmem>>, vector<8x128xf32>
    tpu.vector_store %arg7[%c0_97, %c0_98], %165 {strides = array<i32>} : memref<8x128xf32, #tpu.memory_space<vmem>>, vector<8x128xf32>,
    %c5_99 = arith.constant 5 : index
    %c0_100 = arith.constant 0 : index
    %c0_101 = arith.constant 0 : index
    %168 = vector.load %arg4[%c5_99, %c0_100, %c0_101] : memref<8x8x128xf32, #tpu.memory_space<vmem>>, vector<1x8x128xf32>
    %169 = vector.shape_cast %168 : vector<1x8x128xf32> to vector<8x128xf32>
    %170 = vector.shape_cast %165 : vector<8x128xf32> to vector<1x8x128xf32>
    tpu.vector_store %arg4[%c5_99, %c0_100, %c0_101], %170 {strides = array<i32>} : memref<8x8x128xf32, #tpu.memory_space<vmem>>, vector<1x8x128xf32>,
    %c6 = arith.constant 6 : index
    %c0_102 = arith.constant 0 : index
    %c0_103 = arith.constant 0 : index
    %171 = vector.load %arg2[%c6, %c0_102, %c0_103] : memref<8x8x512xf32, #tpu.memory_space<vmem>>, vector<1x8x512xf32>
    %172 = vector.shape_cast %171 : vector<1x8x512xf32> to vector<8x512xf32>
    %c0_104 = arith.constant 0 : index
    %c0_105 = arith.constant 0 : index
    %173 = vector.load %arg7[%c0_104, %c0_105] : memref<8x128xf32, #tpu.memory_space<vmem>>, vector<8x128xf32>
    %c0_106 = arith.constant 0 : index
    %c0_107 = arith.constant 0 : index
    %174 = vector.load %arg3[%c0_106, %c0_107] : memref<128x512xf32, #tpu.memory_space<vmem>>, vector<128x512xf32>
    %cst_108 = arith.constant dense<0.000000e+00> : vector<8x512xf32>
    %175 = tpu.matmul %173, %174, %cst_108 {dimension_numbers = #tpu.dot_dimension_numbers<[1], [0], [0], [1], [0, 0, 1, 1], [], []>} : vector<8x128xf32>, vector<128x512xf32>, vector<8x512xf32> -> vector<8x512xf32>
    %176 = arith.addf %172, %175 : vector<8x512xf32>
    %177 = vector.extract_strided_slice %176 {offsets = [0, 0], sizes = [8, 384], strides = [1, 1]} : vector<8x512xf32> to vector<8x384xf32>
    %178 = arith.negf %177 : vector<8x384xf32>
    %179 = math.exp %178 : vector<8x384xf32>
    %cst_109 = arith.constant 1.000000e+00 : f32
    %180 = vector.broadcast %cst_109 : f32 to vector<8x384xf32>
    %181 = arith.addf %180, %179 : vector<8x384xf32>
    %182 = arith.divf %180, %181 : vector<8x384xf32>
    %183 = vector.extract_strided_slice %182 {offsets = [0, 0], sizes = [8, 128], strides = [1, 1]} : vector<8x384xf32> to vector<8x128xf32>
    %184 = vector.extract_strided_slice %182 {offsets = [0, 128], sizes = [8, 128], strides = [1, 1]} : vector<8x384xf32> to vector<8x128xf32>
    %185 = vector.extract_strided_slice %182 {offsets = [0, 256], sizes = [8, 128], strides = [1, 1]} : vector<8x384xf32> to vector<8x128xf32>
    %186 = vector.extract_strided_slice %176 {offsets = [0, 384], sizes = [8, 128], strides = [1, 1]} : vector<8x512xf32> to vector<8x128xf32>
    %187 = math.tanh %186 : vector<8x128xf32>
    %c0_110 = arith.constant 0 : index
    %c0_111 = arith.constant 0 : index
    %188 = vector.load %arg8[%c0_110, %c0_111] : memref<8x128xf32, #tpu.memory_space<vmem>>, vector<8x128xf32>
    %189 = arith.mulf %184, %188 : vector<8x128xf32>
    %190 = arith.mulf %183, %187 : vector<8x128xf32>
    %191 = arith.addf %189, %190 : vector<8x128xf32>
    %192 = math.tanh %191 : vector<8x128xf32>
    %193 = arith.mulf %185, %192 : vector<8x128xf32>
    %c0_112 = arith.constant 0 : index
    %c0_113 = arith.constant 0 : index
    %194 = vector.load %arg8[%c0_112, %c0_113] : memref<8x128xf32, #tpu.memory_space<vmem>>, vector<8x128xf32>
    tpu.vector_store %arg8[%c0_112, %c0_113], %191 {strides = array<i32>} : memref<8x128xf32, #tpu.memory_space<vmem>>, vector<8x128xf32>,
    %c0_114 = arith.constant 0 : index
    %c0_115 = arith.constant 0 : index
    %195 = vector.load %arg7[%c0_114, %c0_115] : memref<8x128xf32, #tpu.memory_space<vmem>>, vector<8x128xf32>
    tpu.vector_store %arg7[%c0_114, %c0_115], %193 {strides = array<i32>} : memref<8x128xf32, #tpu.memory_space<vmem>>, vector<8x128xf32>,
    %c6_116 = arith.constant 6 : index
    %c0_117 = arith.constant 0 : index
    %c0_118 = arith.constant 0 : index
    %196 = vector.load %arg4[%c6_116, %c0_117, %c0_118] : memref<8x8x128xf32, #tpu.memory_space<vmem>>, vector<1x8x128xf32>
    %197 = vector.shape_cast %196 : vector<1x8x128xf32> to vector<8x128xf32>
    %198 = vector.shape_cast %193 : vector<8x128xf32> to vector<1x8x128xf32>
    tpu.vector_store %arg4[%c6_116, %c0_117, %c0_118], %198 {strides = array<i32>} : memref<8x8x128xf32, #tpu.memory_space<vmem>>, vector<1x8x128xf32>,
    %c7 = arith.constant 7 : index
    %c0_119 = arith.constant 0 : index
    %c0_120 = arith.constant 0 : index
    %199 = vector.load %arg2[%c7, %c0_119, %c0_120] : memref<8x8x512xf32, #tpu.memory_space<vmem>>, vector<1x8x512xf32>
    %200 = vector.shape_cast %199 : vector<1x8x512xf32> to vector<8x512xf32>
    %c0_121 = arith.constant 0 : index
    %c0_122 = arith.constant 0 : index
    %201 = vector.load %arg7[%c0_121, %c0_122] : memref<8x128xf32, #tpu.memory_space<vmem>>, vector<8x128xf32>
    %c0_123 = arith.constant 0 : index
    %c0_124 = arith.constant 0 : index
    %202 = vector.load %arg3[%c0_123, %c0_124] : memref<128x512xf32, #tpu.memory_space<vmem>>, vector<128x512xf32>
    %cst_125 = arith.constant dense<0.000000e+00> : vector<8x512xf32>
    %203 = tpu.matmul %201, %202, %cst_125 {dimension_numbers = #tpu.dot_dimension_numbers<[1], [0], [0], [1], [0, 0, 1, 1], [], []>} : vector<8x128xf32>, vector<128x512xf32>, vector<8x512xf32> -> vector<8x512xf32>
    %204 = arith.addf %200, %203 : vector<8x512xf32>
    %205 = vector.extract_strided_slice %204 {offsets = [0, 0], sizes = [8, 384], strides = [1, 1]} : vector<8x512xf32> to vector<8x384xf32>
    %206 = arith.negf %205 : vector<8x384xf32>
    %207 = math.exp %206 : vector<8x384xf32>
    %cst_126 = arith.constant 1.000000e+00 : f32
    %208 = vector.broadcast %cst_126 : f32 to vector<8x384xf32>
    %209 = arith.addf %208, %207 : vector<8x384xf32>
    %210 = arith.divf %208, %209 : vector<8x384xf32>
    %211 = vector.extract_strided_slice %210 {offsets = [0, 0], sizes = [8, 128], strides = [1, 1]} : vector<8x384xf32> to vector<8x128xf32>
    %212 = vector.extract_strided_slice %210 {offsets = [0, 128], sizes = [8, 128], strides = [1, 1]} : vector<8x384xf32> to vector<8x128xf32>
    %213 = vector.extract_strided_slice %210 {offsets = [0, 256], sizes = [8, 128], strides = [1, 1]} : vector<8x384xf32> to vector<8x128xf32>
    %214 = vector.extract_strided_slice %204 {offsets = [0, 384], sizes = [8, 128], strides = [1, 1]} : vector<8x512xf32> to vector<8x128xf32>
    %215 = math.tanh %214 : vector<8x128xf32>
    %c0_127 = arith.constant 0 : index
    %c0_128 = arith.constant 0 : index
    %216 = vector.load %arg8[%c0_127, %c0_128] : memref<8x128xf32, #tpu.memory_space<vmem>>, vector<8x128xf32>
    %217 = arith.mulf %212, %216 : vector<8x128xf32>
    %218 = arith.mulf %211, %215 : vector<8x128xf32>
    %219 = arith.addf %217, %218 : vector<8x128xf32>
    %220 = math.tanh %219 : vector<8x128xf32>
    %221 = arith.mulf %213, %220 : vector<8x128xf32>
    %c0_129 = arith.constant 0 : index
    %c0_130 = arith.constant 0 : index
    %222 = vector.load %arg8[%c0_129, %c0_130] : memref<8x128xf32, #tpu.memory_space<vmem>>, vector<8x128xf32>
    tpu.vector_store %arg8[%c0_129, %c0_130], %219 {strides = array<i32>} : memref<8x128xf32, #tpu.memory_space<vmem>>, vector<8x128xf32>,
    %c0_131 = arith.constant 0 : index
    %c0_132 = arith.constant 0 : index
    %223 = vector.load %arg7[%c0_131, %c0_132] : memref<8x128xf32, #tpu.memory_space<vmem>>, vector<8x128xf32>
    tpu.vector_store %arg7[%c0_131, %c0_132], %221 {strides = array<i32>} : memref<8x128xf32, #tpu.memory_space<vmem>>, vector<8x128xf32>,
    %c7_133 = arith.constant 7 : index
    %c0_134 = arith.constant 0 : index
    %c0_135 = arith.constant 0 : index
    %224 = vector.load %arg4[%c7_133, %c0_134, %c0_135] : memref<8x8x128xf32, #tpu.memory_space<vmem>>, vector<1x8x128xf32>
    %225 = vector.shape_cast %224 : vector<1x8x128xf32> to vector<8x128xf32>
    %226 = vector.shape_cast %221 : vector<8x128xf32> to vector<1x8x128xf32>
    tpu.vector_store %arg4[%c7_133, %c0_134, %c0_135], %226 {strides = array<i32>} : memref<8x8x128xf32, #tpu.memory_space<vmem>>, vector<1x8x128xf32>,
    %c0_i32_136 = arith.constant 0 : i32
    %227 = arith.cmpi eq, %arg1, %c0_i32_136 : i32
    %228 = arith.extui %227 : i1 to i32
    %c0_i32_137 = arith.constant 0 : i32
    %229 = arith.cmpi ne, %228, %c0_i32_137 : i32
    scf.if %229 {
      %c0_138 = arith.constant 0 : index
      %c0_139 = arith.constant 0 : index
      %230 = vector.load %arg7[%c0_138, %c0_139] : memref<8x128xf32, #tpu.memory_space<vmem>>, vector<8x128xf32>
      %c0_140 = arith.constant 0 : index
      %c0_141 = arith.constant 0 : index
      %231 = vector.load %arg5[%c0_140, %c0_141] : memref<8x128xf32, #tpu.memory_space<vmem>>, vector<8x128xf32>
      tpu.vector_store %arg5[%c0_140, %c0_141], %230 {strides = array<i32>} : memref<8x128xf32, #tpu.memory_space<vmem>>, vector<8x128xf32>,
      %c0_142 = arith.constant 0 : index
      %c0_143 = arith.constant 0 : index
      %232 = vector.load %arg8[%c0_142, %c0_143] : memref<8x128xf32, #tpu.memory_space<vmem>>, vector<8x128xf32>
      %c0_144 = arith.constant 0 : index
      %c0_145 = arith.constant 0 : index
      %233 = vector.load %arg6[%c0_144, %c0_145] : memref<8x128xf32, #tpu.memory_space<vmem>>, vector<8x128xf32>
      tpu.vector_store %arg6[%c0_144, %c0_145], %232 {strides = array<i32>} : memref<8x128xf32, #tpu.memory_space<vmem>>, vector<8x128xf32>,
    } else {
    }
    return
  }
  func.func @transform_0(%arg0: i32, %arg1: i32) -> (i32, i32, i32) {
    %c0_i32 = arith.constant 0 : i32
    %c0_i32_0 = arith.constant 0 : i32
    return %arg1, %arg0, %c0_i32 : i32, i32, i32
  }
  func.func @transform_1(%arg0: i32, %arg1: i32) -> (i32, i32) {
    %c0_i32 = arith.constant 0 : i32
    %c0_i32_0 = arith.constant 0 : i32
    %c0_i32_1 = arith.constant 0 : i32
    return %c0_i32, %c0_i32_0 : i32, i32
  }
  func.func @transform_2(%arg0: i32, %arg1: i32) -> (i32, i32, i32) {
    %c0_i32 = arith.constant 0 : i32
    %c0_i32_0 = arith.constant 0 : i32
    return %arg1, %arg0, %c0_i32 : i32, i32, i32
  }
  func.func @transform_3(%arg0: i32, %arg1: i32) -> (i32, i32) {
    %c0_i32 = arith.constant 0 : i32
    %c0_i32_0 = arith.constant 0 : i32
    return %arg0, %c0_i32 : i32, i32
  }
  func.func @transform_4(%arg0: i32, %arg1: i32) -> (i32, i32) {
    %c0_i32 = arith.constant 0 : i32
    %c0_i32_0 = arith.constant 0 : i32
    return %arg0, %c0_i32 : i32, i32
  }
}

module attributes {stable_mosaic.version = 11 : i64} {
  func.func @_lstm_recurrent_kernel(%arg0: i32, %arg1: i32, %arg2: memref<8x8x512xf32, #tpu.memory_space<vmem>>, %arg3: memref<128x512xf32, #tpu.memory_space<vmem>>, %arg4: memref<8x8x128xf32, #tpu.memory_space<vmem>>, %arg5: memref<8x128xf32, #tpu.memory_space<vmem>>, %arg6: memref<8x128xf32, #tpu.memory_space<vmem>>, %arg7: memref<8x128xf32, #tpu.memory_space<vmem>>, %arg8: memref<8x128xf32, #tpu.memory_space<vmem>>) attributes {dimension_semantics = [#tpu.dimension_semantics<parallel>, #tpu.dimension_semantics<arbitrary>], iteration_bounds = array<i64: 1, 1>, scalar_prefetch = 0 : i64, scratch_operands = 2 : i64, tpu.core_type = #tpu.core_type<tc>, window_params = [{transform_indices = @transform_0, window_bounds = array<i64: 8, 8, 512>}, {pipeline_mode = #tpu.pipeline_mode<synchronous>, transform_indices = @transform_1, window_bounds = array<i64: 128, 512>}, {transform_indices = @transform_2, window_bounds = array<i64: 8, 8, 128>}, {transform_indices = @transform_3, window_bounds = array<i64: 8, 128>}, {transform_indices = @transform_4, window_bounds = array<i64: 8, 128>}]} {
    %c0_i32 = arith.constant 0 : i32
    %0 = arith.cmpi eq, %arg1, %c0_i32 : i32
    %1 = arith.extui %0 : i1 to i32
    %c0_i32_0 = arith.constant 0 : i32
    %2 = arith.cmpi ne, %1, %c0_i32_0 : i32
    scf.if %2 {
      %cst_138 = arith.constant 0.000000e+00 : f32
      %230 = vector.broadcast %cst_138 : f32 to vector<8x128xf32>
      %c0_139 = arith.constant 0 : index
      %c0_140 = arith.constant 0 : index
      %231 = vector.load %arg7[%c0_139, %c0_140] : memref<8x128xf32, #tpu.memory_space<vmem>>, vector<8x128xf32>
      tpu.vector_store %arg7[%c0_139, %c0_140], %230 {strides = array<i32>} : memref<8x128xf32, #tpu.memory_space<vmem>>, vector<8x128xf32>,
      %cst_141 = arith.constant 0.000000e+00 : f32
      %232 = vector.broadcast %cst_141 : f32 to vector<8x128xf32>
      %c0_142 = arith.constant 0 : index
      %c0_143 = arith.constant 0 : index
      %233 = vector.load %arg8[%c0_142, %c0_143] : memref<8x128xf32, #tpu.memory_space<vmem>>, vector<8x128xf32>
      tpu.vector_store %arg8[%c0_142, %c0_143], %232 {strides = array<i32>} : memref<8x128xf32, #tpu.memory_space<vmem>>, vector<8x128xf32>,
    } else {
    }
    %c0 = arith.constant 0 : index
    %c0_1 = arith.constant 0 : index
    %c0_2 = arith.constant 0 : index
    %3 = vector.load %arg2[%c0, %c0_1, %c0_2] : memref<8x8x512xf32, #tpu.memory_space<vmem>>, vector<1x8x512xf32>
    %4 = vector.shape_cast %3 : vector<1x8x512xf32> to vector<8x512xf32>
    %c0_3 = arith.constant 0 : index
    %c0_4 = arith.constant 0 : index
    %5 = vector.load %arg7[%c0_3, %c0_4] : memref<8x128xf32, #tpu.memory_space<vmem>>, vector<8x128xf32>
    %c0_5 = arith.constant 0 : index
    %c0_6 = arith.constant 0 : index
    %6 = vector.load %arg3[%c0_5, %c0_6] : memref<128x512xf32, #tpu.memory_space<vmem>>, vector<128x512xf32>
    %cst = arith.constant dense<0.000000e+00> : vector<8x512xf32>
    %7 = tpu.matmul %5, %6, %cst {dimension_numbers = #tpu.dot_dimension_numbers<[1], [0], [0], [1], [0, 0, 1, 1], [], []>} : vector<8x128xf32>, vector<128x512xf32>, vector<8x512xf32> -> vector<8x512xf32>
    %8 = arith.addf %4, %7 : vector<8x512xf32>
    %9 = vector.extract_strided_slice %8 {offsets = [0, 0], sizes = [8, 384], strides = [1, 1]} : vector<8x512xf32> to vector<8x384xf32>
    %10 = arith.negf %9 : vector<8x384xf32>
    %11 = math.exp %10 : vector<8x384xf32>
    %cst_7 = arith.constant 1.000000e+00 : f32
    %12 = vector.broadcast %cst_7 : f32 to vector<8x384xf32>
    %13 = arith.addf %12, %11 : vector<8x384xf32>
    %14 = arith.divf %12, %13 : vector<8x384xf32>
    %15 = vector.extract_strided_slice %14 {offsets = [0, 0], sizes = [8, 128], strides = [1, 1]} : vector<8x384xf32> to vector<8x128xf32>
    %16 = vector.extract_strided_slice %14 {offsets = [0, 128], sizes = [8, 128], strides = [1, 1]} : vector<8x384xf32> to vector<8x128xf32>
    %17 = vector.extract_strided_slice %14 {offsets = [0, 256], sizes = [8, 128], strides = [1, 1]} : vector<8x384xf32> to vector<8x128xf32>
    %18 = vector.extract_strided_slice %8 {offsets = [0, 384], sizes = [8, 128], strides = [1, 1]} : vector<8x512xf32> to vector<8x128xf32>
    %19 = math.tanh %18 : vector<8x128xf32>
    %c0_8 = arith.constant 0 : index
    %c0_9 = arith.constant 0 : index
    %20 = vector.load %arg8[%c0_8, %c0_9] : memref<8x128xf32, #tpu.memory_space<vmem>>, vector<8x128xf32>
    %21 = arith.mulf %16, %20 : vector<8x128xf32>
    %22 = arith.mulf %15, %19 : vector<8x128xf32>
    %23 = arith.addf %21, %22 : vector<8x128xf32>
    %24 = math.tanh %23 : vector<8x128xf32>
    %25 = arith.mulf %17, %24 : vector<8x128xf32>
    %c0_10 = arith.constant 0 : index
    %c0_11 = arith.constant 0 : index
    %26 = vector.load %arg8[%c0_10, %c0_11] : memref<8x128xf32, #tpu.memory_space<vmem>>, vector<8x128xf32>
    tpu.vector_store %arg8[%c0_10, %c0_11], %23 {strides = array<i32>} : memref<8x128xf32, #tpu.memory_space<vmem>>, vector<8x128xf32>,
    %c0_12 = arith.constant 0 : index
    %c0_13 = arith.constant 0 : index
    %27 = vector.load %arg7[%c0_12, %c0_13] : memref<8x128xf32, #tpu.memory_space<vmem>>, vector<8x128xf32>
    tpu.vector_store %arg7[%c0_12, %c0_13], %25 {strides = array<i32>} : memref<8x128xf32, #tpu.memory_space<vmem>>, vector<8x128xf32>,
    %c0_14 = arith.constant 0 : index
    %c0_15 = arith.constant 0 : index
    %c0_16 = arith.constant 0 : index
    %28 = vector.load %arg4[%c0_14, %c0_15, %c0_16] : memref<8x8x128xf32, #tpu.memory_space<vmem>>, vector<1x8x128xf32>
    %29 = vector.shape_cast %28 : vector<1x8x128xf32> to vector<8x128xf32>
    %30 = vector.shape_cast %25 : vector<8x128xf32> to vector<1x8x128xf32>
    tpu.vector_store %arg4[%c0_14, %c0_15, %c0_16], %30 {strides = array<i32>} : memref<8x8x128xf32, #tpu.memory_space<vmem>>, vector<1x8x128xf32>,
    %c1 = arith.constant 1 : index
    %c0_17 = arith.constant 0 : index
    %c0_18 = arith.constant 0 : index
    %31 = vector.load %arg2[%c1, %c0_17, %c0_18] : memref<8x8x512xf32, #tpu.memory_space<vmem>>, vector<1x8x512xf32>
    %32 = vector.shape_cast %31 : vector<1x8x512xf32> to vector<8x512xf32>
    %c0_19 = arith.constant 0 : index
    %c0_20 = arith.constant 0 : index
    %33 = vector.load %arg7[%c0_19, %c0_20] : memref<8x128xf32, #tpu.memory_space<vmem>>, vector<8x128xf32>
    %c0_21 = arith.constant 0 : index
    %c0_22 = arith.constant 0 : index
    %34 = vector.load %arg3[%c0_21, %c0_22] : memref<128x512xf32, #tpu.memory_space<vmem>>, vector<128x512xf32>
    %cst_23 = arith.constant dense<0.000000e+00> : vector<8x512xf32>
    %35 = tpu.matmul %33, %34, %cst_23 {dimension_numbers = #tpu.dot_dimension_numbers<[1], [0], [0], [1], [0, 0, 1, 1], [], []>} : vector<8x128xf32>, vector<128x512xf32>, vector<8x512xf32> -> vector<8x512xf32>
    %36 = arith.addf %32, %35 : vector<8x512xf32>
    %37 = vector.extract_strided_slice %36 {offsets = [0, 0], sizes = [8, 384], strides = [1, 1]} : vector<8x512xf32> to vector<8x384xf32>
    %38 = arith.negf %37 : vector<8x384xf32>
    %39 = math.exp %38 : vector<8x384xf32>
    %cst_24 = arith.constant 1.000000e+00 : f32
    %40 = vector.broadcast %cst_24 : f32 to vector<8x384xf32>
    %41 = arith.addf %40, %39 : vector<8x384xf32>
    %42 = arith.divf %40, %41 : vector<8x384xf32>
    %43 = vector.extract_strided_slice %42 {offsets = [0, 0], sizes = [8, 128], strides = [1, 1]} : vector<8x384xf32> to vector<8x128xf32>
    %44 = vector.extract_strided_slice %42 {offsets = [0, 128], sizes = [8, 128], strides = [1, 1]} : vector<8x384xf32> to vector<8x128xf32>
    %45 = vector.extract_strided_slice %42 {offsets = [0, 256], sizes = [8, 128], strides = [1, 1]} : vector<8x384xf32> to vector<8x128xf32>
    %46 = vector.extract_strided_slice %36 {offsets = [0, 384], sizes = [8, 128], strides = [1, 1]} : vector<8x512xf32> to vector<8x128xf32>
    %47 = math.tanh %46 : vector<8x128xf32>
    %c0_25 = arith.constant 0 : index
    %c0_26 = arith.constant 0 : index
    %48 = vector.load %arg8[%c0_25, %c0_26] : memref<8x128xf32, #tpu.memory_space<vmem>>, vector<8x128xf32>
    %49 = arith.mulf %44, %48 : vector<8x128xf32>
    %50 = arith.mulf %43, %47 : vector<8x128xf32>
    %51 = arith.addf %49, %50 : vector<8x128xf32>
    %52 = math.tanh %51 : vector<8x128xf32>
    %53 = arith.mulf %45, %52 : vector<8x128xf32>
    %c0_27 = arith.constant 0 : index
    %c0_28 = arith.constant 0 : index
    %54 = vector.load %arg8[%c0_27, %c0_28] : memref<8x128xf32, #tpu.memory_space<vmem>>, vector<8x128xf32>
    tpu.vector_store %arg8[%c0_27, %c0_28], %51 {strides = array<i32>} : memref<8x128xf32, #tpu.memory_space<vmem>>, vector<8x128xf32>,
    %c0_29 = arith.constant 0 : index
    %c0_30 = arith.constant 0 : index
    %55 = vector.load %arg7[%c0_29, %c0_30] : memref<8x128xf32, #tpu.memory_space<vmem>>, vector<8x128xf32>
    tpu.vector_store %arg7[%c0_29, %c0_30], %53 {strides = array<i32>} : memref<8x128xf32, #tpu.memory_space<vmem>>, vector<8x128xf32>,
    %c1_31 = arith.constant 1 : index
    %c0_32 = arith.constant 0 : index
    %c0_33 = arith.constant 0 : index
    %56 = vector.load %arg4[%c1_31, %c0_32, %c0_33] : memref<8x8x128xf32, #tpu.memory_space<vmem>>, vector<1x8x128xf32>
    %57 = vector.shape_cast %56 : vector<1x8x128xf32> to vector<8x128xf32>
    %58 = vector.shape_cast %53 : vector<8x128xf32> to vector<1x8x128xf32>
    tpu.vector_store %arg4[%c1_31, %c0_32, %c0_33], %58 {strides = array<i32>} : memref<8x8x128xf32, #tpu.memory_space<vmem>>, vector<1x8x128xf32>,
    %c2 = arith.constant 2 : index
    %c0_34 = arith.constant 0 : index
    %c0_35 = arith.constant 0 : index
    %59 = vector.load %arg2[%c2, %c0_34, %c0_35] : memref<8x8x512xf32, #tpu.memory_space<vmem>>, vector<1x8x512xf32>
    %60 = vector.shape_cast %59 : vector<1x8x512xf32> to vector<8x512xf32>
    %c0_36 = arith.constant 0 : index
    %c0_37 = arith.constant 0 : index
    %61 = vector.load %arg7[%c0_36, %c0_37] : memref<8x128xf32, #tpu.memory_space<vmem>>, vector<8x128xf32>
    %c0_38 = arith.constant 0 : index
    %c0_39 = arith.constant 0 : index
    %62 = vector.load %arg3[%c0_38, %c0_39] : memref<128x512xf32, #tpu.memory_space<vmem>>, vector<128x512xf32>
    %cst_40 = arith.constant dense<0.000000e+00> : vector<8x512xf32>
    %63 = tpu.matmul %61, %62, %cst_40 {dimension_numbers = #tpu.dot_dimension_numbers<[1], [0], [0], [1], [0, 0, 1, 1], [], []>} : vector<8x128xf32>, vector<128x512xf32>, vector<8x512xf32> -> vector<8x512xf32>
    %64 = arith.addf %60, %63 : vector<8x512xf32>
    %65 = vector.extract_strided_slice %64 {offsets = [0, 0], sizes = [8, 384], strides = [1, 1]} : vector<8x512xf32> to vector<8x384xf32>
    %66 = arith.negf %65 : vector<8x384xf32>
    %67 = math.exp %66 : vector<8x384xf32>
    %cst_41 = arith.constant 1.000000e+00 : f32
    %68 = vector.broadcast %cst_41 : f32 to vector<8x384xf32>
    %69 = arith.addf %68, %67 : vector<8x384xf32>
    %70 = arith.divf %68, %69 : vector<8x384xf32>
    %71 = vector.extract_strided_slice %70 {offsets = [0, 0], sizes = [8, 128], strides = [1, 1]} : vector<8x384xf32> to vector<8x128xf32>
    %72 = vector.extract_strided_slice %70 {offsets = [0, 128], sizes = [8, 128], strides = [1, 1]} : vector<8x384xf32> to vector<8x128xf32>
    %73 = vector.extract_strided_slice %70 {offsets = [0, 256], sizes = [8, 128], strides = [1, 1]} : vector<8x384xf32> to vector<8x128xf32>
    %74 = vector.extract_strided_slice %64 {offsets = [0, 384], sizes = [8, 128], strides = [1, 1]} : vector<8x512xf32> to vector<8x128xf32>
    %75 = math.tanh %74 : vector<8x128xf32>
    %c0_42 = arith.constant 0 : index
    %c0_43 = arith.constant 0 : index
    %76 = vector.load %arg8[%c0_42, %c0_43] : memref<8x128xf32, #tpu.memory_space<vmem>>, vector<8x128xf32>
    %77 = arith.mulf %72, %76 : vector<8x128xf32>
    %78 = arith.mulf %71, %75 : vector<8x128xf32>
    %79 = arith.addf %77, %78 : vector<8x128xf32>
    %80 = math.tanh %79 : vector<8x128xf32>
    %81 = arith.mulf %73, %80 : vector<8x128xf32>
    %c0_44 = arith.constant 0 : index
    %c0_45 = arith.constant 0 : index
    %82 = vector.load %arg8[%c0_44, %c0_45] : memref<8x128xf32, #tpu.memory_space<vmem>>, vector<8x128xf32>
    tpu.vector_store %arg8[%c0_44, %c0_45], %79 {strides = array<i32>} : memref<8x128xf32, #tpu.memory_space<vmem>>, vector<8x128xf32>,
    %c0_46 = arith.constant 0 : index
    %c0_47 = arith.constant 0 : index
    %83 = vector.load %arg7[%c0_46, %c0_47] : memref<8x128xf32, #tpu.memory_space<vmem>>, vector<8x128xf32>
    tpu.vector_store %arg7[%c0_46, %c0_47], %81 {strides = array<i32>} : memref<8x128xf32, #tpu.memory_space<vmem>>, vector<8x128xf32>,
    %c2_48 = arith.constant 2 : index
    %c0_49 = arith.constant 0 : index
    %c0_50 = arith.constant 0 : index
    %84 = vector.load %arg4[%c2_48, %c0_49, %c0_50] : memref<8x8x128xf32, #tpu.memory_space<vmem>>, vector<1x8x128xf32>
    %85 = vector.shape_cast %84 : vector<1x8x128xf32> to vector<8x128xf32>
    %86 = vector.shape_cast %81 : vector<8x128xf32> to vector<1x8x128xf32>
    tpu.vector_store %arg4[%c2_48, %c0_49, %c0_50], %86 {strides = array<i32>} : memref<8x8x128xf32, #tpu.memory_space<vmem>>, vector<1x8x128xf32>,
    %c3 = arith.constant 3 : index
    %c0_51 = arith.constant 0 : index
    %c0_52 = arith.constant 0 : index
    %87 = vector.load %arg2[%c3, %c0_51, %c0_52] : memref<8x8x512xf32, #tpu.memory_space<vmem>>, vector<1x8x512xf32>
    %88 = vector.shape_cast %87 : vector<1x8x512xf32> to vector<8x512xf32>
    %c0_53 = arith.constant 0 : index
    %c0_54 = arith.constant 0 : index
    %89 = vector.load %arg7[%c0_53, %c0_54] : memref<8x128xf32, #tpu.memory_space<vmem>>, vector<8x128xf32>
    %c0_55 = arith.constant 0 : index
    %c0_56 = arith.constant 0 : index
    %90 = vector.load %arg3[%c0_55, %c0_56] : memref<128x512xf32, #tpu.memory_space<vmem>>, vector<128x512xf32>
    %cst_57 = arith.constant dense<0.000000e+00> : vector<8x512xf32>
    %91 = tpu.matmul %89, %90, %cst_57 {dimension_numbers = #tpu.dot_dimension_numbers<[1], [0], [0], [1], [0, 0, 1, 1], [], []>} : vector<8x128xf32>, vector<128x512xf32>, vector<8x512xf32> -> vector<8x512xf32>
    %92 = arith.addf %88, %91 : vector<8x512xf32>
    %93 = vector.extract_strided_slice %92 {offsets = [0, 0], sizes = [8, 384], strides = [1, 1]} : vector<8x512xf32> to vector<8x384xf32>
    %94 = arith.negf %93 : vector<8x384xf32>
    %95 = math.exp %94 : vector<8x384xf32>
    %cst_58 = arith.constant 1.000000e+00 : f32
    %96 = vector.broadcast %cst_58 : f32 to vector<8x384xf32>
    %97 = arith.addf %96, %95 : vector<8x384xf32>
    %98 = arith.divf %96, %97 : vector<8x384xf32>
    %99 = vector.extract_strided_slice %98 {offsets = [0, 0], sizes = [8, 128], strides = [1, 1]} : vector<8x384xf32> to vector<8x128xf32>
    %100 = vector.extract_strided_slice %98 {offsets = [0, 128], sizes = [8, 128], strides = [1, 1]} : vector<8x384xf32> to vector<8x128xf32>
    %101 = vector.extract_strided_slice %98 {offsets = [0, 256], sizes = [8, 128], strides = [1, 1]} : vector<8x384xf32> to vector<8x128xf32>
    %102 = vector.extract_strided_slice %92 {offsets = [0, 384], sizes = [8, 128], strides = [1, 1]} : vector<8x512xf32> to vector<8x128xf32>
    %103 = math.tanh %102 : vector<8x128xf32>
    %c0_59 = arith.constant 0 : index
    %c0_60 = arith.constant 0 : index
    %104 = vector.load %arg8[%c0_59, %c0_60] : memref<8x128xf32, #tpu.memory_space<vmem>>, vector<8x128xf32>
    %105 = arith.mulf %100, %104 : vector<8x128xf32>
    %106 = arith.mulf %99, %103 : vector<8x128xf32>
    %107 = arith.addf %105, %106 : vector<8x128xf32>
    %108 = math.tanh %107 : vector<8x128xf32>
    %109 = arith.mulf %101, %108 : vector<8x128xf32>
    %c0_61 = arith.constant 0 : index
    %c0_62 = arith.constant 0 : index
    %110 = vector.load %arg8[%c0_61, %c0_62] : memref<8x128xf32, #tpu.memory_space<vmem>>, vector<8x128xf32>
    tpu.vector_store %arg8[%c0_61, %c0_62], %107 {strides = array<i32>} : memref<8x128xf32, #tpu.memory_space<vmem>>, vector<8x128xf32>,
    %c0_63 = arith.constant 0 : index
    %c0_64 = arith.constant 0 : index
    %111 = vector.load %arg7[%c0_63, %c0_64] : memref<8x128xf32, #tpu.memory_space<vmem>>, vector<8x128xf32>
    tpu.vector_store %arg7[%c0_63, %c0_64], %109 {strides = array<i32>} : memref<8x128xf32, #tpu.memory_space<vmem>>, vector<8x128xf32>,
    %c3_65 = arith.constant 3 : index
    %c0_66 = arith.constant 0 : index
    %c0_67 = arith.constant 0 : index
    %112 = vector.load %arg4[%c3_65, %c0_66, %c0_67] : memref<8x8x128xf32, #tpu.memory_space<vmem>>, vector<1x8x128xf32>
    %113 = vector.shape_cast %112 : vector<1x8x128xf32> to vector<8x128xf32>
    %114 = vector.shape_cast %109 : vector<8x128xf32> to vector<1x8x128xf32>
    tpu.vector_store %arg4[%c3_65, %c0_66, %c0_67], %114 {strides = array<i32>} : memref<8x8x128xf32, #tpu.memory_space<vmem>>, vector<1x8x128xf32>,
    %c4 = arith.constant 4 : index
    %c0_68 = arith.constant 0 : index
    %c0_69 = arith.constant 0 : index
    %115 = vector.load %arg2[%c4, %c0_68, %c0_69] : memref<8x8x512xf32, #tpu.memory_space<vmem>>, vector<1x8x512xf32>
    %116 = vector.shape_cast %115 : vector<1x8x512xf32> to vector<8x512xf32>
    %c0_70 = arith.constant 0 : index
    %c0_71 = arith.constant 0 : index
    %117 = vector.load %arg7[%c0_70, %c0_71] : memref<8x128xf32, #tpu.memory_space<vmem>>, vector<8x128xf32>
    %c0_72 = arith.constant 0 : index
    %c0_73 = arith.constant 0 : index
    %118 = vector.load %arg3[%c0_72, %c0_73] : memref<128x512xf32, #tpu.memory_space<vmem>>, vector<128x512xf32>
    %cst_74 = arith.constant dense<0.000000e+00> : vector<8x512xf32>
    %119 = tpu.matmul %117, %118, %cst_74 {dimension_numbers = #tpu.dot_dimension_numbers<[1], [0], [0], [1], [0, 0, 1, 1], [], []>} : vector<8x128xf32>, vector<128x512xf32>, vector<8x512xf32> -> vector<8x512xf32>
    %120 = arith.addf %116, %119 : vector<8x512xf32>
    %121 = vector.extract_strided_slice %120 {offsets = [0, 0], sizes = [8, 384], strides = [1, 1]} : vector<8x512xf32> to vector<8x384xf32>
    %122 = arith.negf %121 : vector<8x384xf32>
    %123 = math.exp %122 : vector<8x384xf32>
    %cst_75 = arith.constant 1.000000e+00 : f32
    %124 = vector.broadcast %cst_75 : f32 to vector<8x384xf32>
    %125 = arith.addf %124, %123 : vector<8x384xf32>
    %126 = arith.divf %124, %125 : vector<8x384xf32>
    %127 = vector.extract_strided_slice %126 {offsets = [0, 0], sizes = [8, 128], strides = [1, 1]} : vector<8x384xf32> to vector<8x128xf32>
    %128 = vector.extract_strided_slice %126 {offsets = [0, 128], sizes = [8, 128], strides = [1, 1]} : vector<8x384xf32> to vector<8x128xf32>
    %129 = vector.extract_strided_slice %126 {offsets = [0, 256], sizes = [8, 128], strides = [1, 1]} : vector<8x384xf32> to vector<8x128xf32>
    %130 = vector.extract_strided_slice %120 {offsets = [0, 384], sizes = [8, 128], strides = [1, 1]} : vector<8x512xf32> to vector<8x128xf32>
    %131 = math.tanh %130 : vector<8x128xf32>
    %c0_76 = arith.constant 0 : index
    %c0_77 = arith.constant 0 : index
    %132 = vector.load %arg8[%c0_76, %c0_77] : memref<8x128xf32, #tpu.memory_space<vmem>>, vector<8x128xf32>
    %133 = arith.mulf %128, %132 : vector<8x128xf32>
    %134 = arith.mulf %127, %131 : vector<8x128xf32>
    %135 = arith.addf %133, %134 : vector<8x128xf32>
    %136 = math.tanh %135 : vector<8x128xf32>
    %137 = arith.mulf %129, %136 : vector<8x128xf32>
    %c0_78 = arith.constant 0 : index
    %c0_79 = arith.constant 0 : index
    %138 = vector.load %arg8[%c0_78, %c0_79] : memref<8x128xf32, #tpu.memory_space<vmem>>, vector<8x128xf32>
    tpu.vector_store %arg8[%c0_78, %c0_79], %135 {strides = array<i32>} : memref<8x128xf32, #tpu.memory_space<vmem>>, vector<8x128xf32>,
    %c0_80 = arith.constant 0 : index
    %c0_81 = arith.constant 0 : index
    %139 = vector.load %arg7[%c0_80, %c0_81] : memref<8x128xf32, #tpu.memory_space<vmem>>, vector<8x128xf32>
    tpu.vector_store %arg7[%c0_80, %c0_81], %137 {strides = array<i32>} : memref<8x128xf32, #tpu.memory_space<vmem>>, vector<8x128xf32>,
    %c4_82 = arith.constant 4 : index
    %c0_83 = arith.constant 0 : index
    %c0_84 = arith.constant 0 : index
    %140 = vector.load %arg4[%c4_82, %c0_83, %c0_84] : memref<8x8x128xf32, #tpu.memory_space<vmem>>, vector<1x8x128xf32>
    %141 = vector.shape_cast %140 : vector<1x8x128xf32> to vector<8x128xf32>
    %142 = vector.shape_cast %137 : vector<8x128xf32> to vector<1x8x128xf32>
    tpu.vector_store %arg4[%c4_82, %c0_83, %c0_84], %142 {strides = array<i32>} : memref<8x8x128xf32, #tpu.memory_space<vmem>>, vector<1x8x128xf32>,
    %c5 = arith.constant 5 : index
    %c0_85 = arith.constant 0 : index
    %c0_86 = arith.constant 0 : index
    %143 = vector.load %arg2[%c5, %c0_85, %c0_86] : memref<8x8x512xf32, #tpu.memory_space<vmem>>, vector<1x8x512xf32>
    %144 = vector.shape_cast %143 : vector<1x8x512xf32> to vector<8x512xf32>
    %c0_87 = arith.constant 0 : index
    %c0_88 = arith.constant 0 : index
    %145 = vector.load %arg7[%c0_87, %c0_88] : memref<8x128xf32, #tpu.memory_space<vmem>>, vector<8x128xf32>
    %c0_89 = arith.constant 0 : index
    %c0_90 = arith.constant 0 : index
    %146 = vector.load %arg3[%c0_89, %c0_90] : memref<128x512xf32, #tpu.memory_space<vmem>>, vector<128x512xf32>
    %cst_91 = arith.constant dense<0.000000e+00> : vector<8x512xf32>
    %147 = tpu.matmul %145, %146, %cst_91 {dimension_numbers = #tpu.dot_dimension_numbers<[1], [0], [0], [1], [0, 0, 1, 1], [], []>} : vector<8x128xf32>, vector<128x512xf32>, vector<8x512xf32> -> vector<8x512xf32>
    %148 = arith.addf %144, %147 : vector<8x512xf32>
    %149 = vector.extract_strided_slice %148 {offsets = [0, 0], sizes = [8, 384], strides = [1, 1]} : vector<8x512xf32> to vector<8x384xf32>
    %150 = arith.negf %149 : vector<8x384xf32>
    %151 = math.exp %150 : vector<8x384xf32>
    %cst_92 = arith.constant 1.000000e+00 : f32
    %152 = vector.broadcast %cst_92 : f32 to vector<8x384xf32>
    %153 = arith.addf %152, %151 : vector<8x384xf32>
    %154 = arith.divf %152, %153 : vector<8x384xf32>
    %155 = vector.extract_strided_slice %154 {offsets = [0, 0], sizes = [8, 128], strides = [1, 1]} : vector<8x384xf32> to vector<8x128xf32>
    %156 = vector.extract_strided_slice %154 {offsets = [0, 128], sizes = [8, 128], strides = [1, 1]} : vector<8x384xf32> to vector<8x128xf32>
    %157 = vector.extract_strided_slice %154 {offsets = [0, 256], sizes = [8, 128], strides = [1, 1]} : vector<8x384xf32> to vector<8x128xf32>
    %158 = vector.extract_strided_slice %148 {offsets = [0, 384], sizes = [8, 128], strides = [1, 1]} : vector<8x512xf32> to vector<8x128xf32>
    %159 = math.tanh %158 : vector<8x128xf32>
    %c0_93 = arith.constant 0 : index
    %c0_94 = arith.constant 0 : index
    %160 = vector.load %arg8[%c0_93, %c0_94] : memref<8x128xf32, #tpu.memory_space<vmem>>, vector<8x128xf32>
    %161 = arith.mulf %156, %160 : vector<8x128xf32>
    %162 = arith.mulf %155, %159 : vector<8x128xf32>
    %163 = arith.addf %161, %162 : vector<8x128xf32>
    %164 = math.tanh %163 : vector<8x128xf32>
    %165 = arith.mulf %157, %164 : vector<8x128xf32>
    %c0_95 = arith.constant 0 : index
    %c0_96 = arith.constant 0 : index
    %166 = vector.load %arg8[%c0_95, %c0_96] : memref<8x128xf32, #tpu.memory_space<vmem>>, vector<8x128xf32>
    tpu.vector_store %arg8[%c0_95, %c0_96], %163 {strides = array<i32>} : memref<8x128xf32, #tpu.memory_space<vmem>>, vector<8x128xf32>,
    %c0_97 = arith.constant 0 : index
    %c0_98 = arith.constant 0 : index
    %167 = vector.load %arg7[%c0_97, %c0_98] : memref<8x128xf32, #tpu.memory_space<vmem>>, vector<8x128xf32>
    tpu.vector_store %arg7[%c0_97, %c0_98], %165 {strides = array<i32>} : memref<8x128xf32, #tpu.memory_space<vmem>>, vector<8x128xf32>,
    %c5_99 = arith.constant 5 : index
    %c0_100 = arith.constant 0 : index
    %c0_101 = arith.constant 0 : index
    %168 = vector.load %arg4[%c5_99, %c0_100, %c0_101] : memref<8x8x128xf32, #tpu.memory_space<vmem>>, vector<1x8x128xf32>
    %169 = vector.shape_cast %168 : vector<1x8x128xf32> to vector<8x128xf32>
    %170 = vector.shape_cast %165 : vector<8x128xf32> to vector<1x8x128xf32>
    tpu.vector_store %arg4[%c5_99, %c0_100, %c0_101], %170 {strides = array<i32>} : memref<8x8x128xf32, #tpu.memory_space<vmem>>, vector<1x8x128xf32>,
    %c6 = arith.constant 6 : index
    %c0_102 = arith.constant 0 : index
    %c0_103 = arith.constant 0 : index
    %171 = vector.load %arg2[%c6, %c0_102, %c0_103] : memref<8x8x512xf32, #tpu.memory_space<vmem>>, vector<1x8x512xf32>
    %172 = vector.shape_cast %171 : vector<1x8x512xf32> to vector<8x512xf32>
    %c0_104 = arith.constant 0 : index
    %c0_105 = arith.constant 0 : index
    %173 = vector.load %arg7[%c0_104, %c0_105] : memref<8x128xf32, #tpu.memory_space<vmem>>, vector<8x128xf32>
    %c0_106 = arith.constant 0 : index
    %c0_107 = arith.constant 0 : index
    %174 = vector.load %arg3[%c0_106, %c0_107] : memref<128x512xf32, #tpu.memory_space<vmem>>, vector<128x512xf32>
    %cst_108 = arith.constant dense<0.000000e+00> : vector<8x512xf32>
    %175 = tpu.matmul %173, %174, %cst_108 {dimension_numbers = #tpu.dot_dimension_numbers<[1], [0], [0], [1], [0, 0, 1, 1], [], []>} : vector<8x128xf32>, vector<128x512xf32>, vector<8x512xf32> -> vector<8x512xf32>
    %176 = arith.addf %172, %175 : vector<8x512xf32>
    %177 = vector.extract_strided_slice %176 {offsets = [0, 0], sizes = [8, 384], strides = [1, 1]} : vector<8x512xf32> to vector<8x384xf32>
    %178 = arith.negf %177 : vector<8x384xf32>
    %179 = math.exp %178 : vector<8x384xf32>
    %cst_109 = arith.constant 1.000000e+00 : f32
    %180 = vector.broadcast %cst_109 : f32 to vector<8x384xf32>
    %181 = arith.addf %180, %179 : vector<8x384xf32>
    %182 = arith.divf %180, %181 : vector<8x384xf32>
    %183 = vector.extract_strided_slice %182 {offsets = [0, 0], sizes = [8, 128], strides = [1, 1]} : vector<8x384xf32> to vector<8x128xf32>
    %184 = vector.extract_strided_slice %182 {offsets = [0, 128], sizes = [8, 128], strides = [1, 1]} : vector<8x384xf32> to vector<8x128xf32>
    %185 = vector.extract_strided_slice %182 {offsets = [0, 256], sizes = [8, 128], strides = [1, 1]} : vector<8x384xf32> to vector<8x128xf32>
    %186 = vector.extract_strided_slice %176 {offsets = [0, 384], sizes = [8, 128], strides = [1, 1]} : vector<8x512xf32> to vector<8x128xf32>
    %187 = math.tanh %186 : vector<8x128xf32>
    %c0_110 = arith.constant 0 : index
    %c0_111 = arith.constant 0 : index
    %188 = vector.load %arg8[%c0_110, %c0_111] : memref<8x128xf32, #tpu.memory_space<vmem>>, vector<8x128xf32>
    %189 = arith.mulf %184, %188 : vector<8x128xf32>
    %190 = arith.mulf %183, %187 : vector<8x128xf32>
    %191 = arith.addf %189, %190 : vector<8x128xf32>
    %192 = math.tanh %191 : vector<8x128xf32>
    %193 = arith.mulf %185, %192 : vector<8x128xf32>
    %c0_112 = arith.constant 0 : index
    %c0_113 = arith.constant 0 : index
    %194 = vector.load %arg8[%c0_112, %c0_113] : memref<8x128xf32, #tpu.memory_space<vmem>>, vector<8x128xf32>
    tpu.vector_store %arg8[%c0_112, %c0_113], %191 {strides = array<i32>} : memref<8x128xf32, #tpu.memory_space<vmem>>, vector<8x128xf32>,
    %c0_114 = arith.constant 0 : index
    %c0_115 = arith.constant 0 : index
    %195 = vector.load %arg7[%c0_114, %c0_115] : memref<8x128xf32, #tpu.memory_space<vmem>>, vector<8x128xf32>
    tpu.vector_store %arg7[%c0_114, %c0_115], %193 {strides = array<i32>} : memref<8x128xf32, #tpu.memory_space<vmem>>, vector<8x128xf32>,
    %c6_116 = arith.constant 6 : index
    %c0_117 = arith.constant 0 : index
    %c0_118 = arith.constant 0 : index
    %196 = vector.load %arg4[%c6_116, %c0_117, %c0_118] : memref<8x8x128xf32, #tpu.memory_space<vmem>>, vector<1x8x128xf32>
    %197 = vector.shape_cast %196 : vector<1x8x128xf32> to vector<8x128xf32>
    %198 = vector.shape_cast %193 : vector<8x128xf32> to vector<1x8x128xf32>
    tpu.vector_store %arg4[%c6_116, %c0_117, %c0_118], %198 {strides = array<i32>} : memref<8x8x128xf32, #tpu.memory_space<vmem>>, vector<1x8x128xf32>,
    %c7 = arith.constant 7 : index
    %c0_119 = arith.constant 0 : index
    %c0_120 = arith.constant 0 : index
    %199 = vector.load %arg2[%c7, %c0_119, %c0_120] : memref<8x8x512xf32, #tpu.memory_space<vmem>>, vector<1x8x512xf32>
    %200 = vector.shape_cast %199 : vector<1x8x512xf32> to vector<8x512xf32>
    %c0_121 = arith.constant 0 : index
    %c0_122 = arith.constant 0 : index
    %201 = vector.load %arg7[%c0_121, %c0_122] : memref<8x128xf32, #tpu.memory_space<vmem>>, vector<8x128xf32>
    %c0_123 = arith.constant 0 : index
    %c0_124 = arith.constant 0 : index
    %202 = vector.load %arg3[%c0_123, %c0_124] : memref<128x512xf32, #tpu.memory_space<vmem>>, vector<128x512xf32>
    %cst_125 = arith.constant dense<0.000000e+00> : vector<8x512xf32>
    %203 = tpu.matmul %201, %202, %cst_125 {dimension_numbers = #tpu.dot_dimension_numbers<[1], [0], [0], [1], [0, 0, 1, 1], [], []>} : vector<8x128xf32>, vector<128x512xf32>, vector<8x512xf32> -> vector<8x512xf32>
    %204 = arith.addf %200, %203 : vector<8x512xf32>
    %205 = vector.extract_strided_slice %204 {offsets = [0, 0], sizes = [8, 384], strides = [1, 1]} : vector<8x512xf32> to vector<8x384xf32>
    %206 = arith.negf %205 : vector<8x384xf32>
    %207 = math.exp %206 : vector<8x384xf32>
    %cst_126 = arith.constant 1.000000e+00 : f32
    %208 = vector.broadcast %cst_126 : f32 to vector<8x384xf32>
    %209 = arith.addf %208, %207 : vector<8x384xf32>
    %210 = arith.divf %208, %209 : vector<8x384xf32>
    %211 = vector.extract_strided_slice %210 {offsets = [0, 0], sizes = [8, 128], strides = [1, 1]} : vector<8x384xf32> to vector<8x128xf32>
    %212 = vector.extract_strided_slice %210 {offsets = [0, 128], sizes = [8, 128], strides = [1, 1]} : vector<8x384xf32> to vector<8x128xf32>
    %213 = vector.extract_strided_slice %210 {offsets = [0, 256], sizes = [8, 128], strides = [1, 1]} : vector<8x384xf32> to vector<8x128xf32>
    %214 = vector.extract_strided_slice %204 {offsets = [0, 384], sizes = [8, 128], strides = [1, 1]} : vector<8x512xf32> to vector<8x128xf32>
    %215 = math.tanh %214 : vector<8x128xf32>
    %c0_127 = arith.constant 0 : index
    %c0_128 = arith.constant 0 : index
    %216 = vector.load %arg8[%c0_127, %c0_128] : memref<8x128xf32, #tpu.memory_space<vmem>>, vector<8x128xf32>
    %217 = arith.mulf %212, %216 : vector<8x128xf32>
    %218 = arith.mulf %211, %215 : vector<8x128xf32>
    %219 = arith.addf %217, %218 : vector<8x128xf32>
    %220 = math.tanh %219 : vector<8x128xf32>
    %221 = arith.mulf %213, %220 : vector<8x128xf32>
    %c0_129 = arith.constant 0 : index
    %c0_130 = arith.constant 0 : index
    %222 = vector.load %arg8[%c0_129, %c0_130] : memref<8x128xf32, #tpu.memory_space<vmem>>, vector<8x128xf32>
    tpu.vector_store %arg8[%c0_129, %c0_130], %219 {strides = array<i32>} : memref<8x128xf32, #tpu.memory_space<vmem>>, vector<8x128xf32>,
    %c0_131 = arith.constant 0 : index
    %c0_132 = arith.constant 0 : index
    %223 = vector.load %arg7[%c0_131, %c0_132] : memref<8x128xf32, #tpu.memory_space<vmem>>, vector<8x128xf32>
    tpu.vector_store %arg7[%c0_131, %c0_132], %221 {strides = array<i32>} : memref<8x128xf32, #tpu.memory_space<vmem>>, vector<8x128xf32>,
    %c7_133 = arith.constant 7 : index
    %c0_134 = arith.constant 0 : index
    %c0_135 = arith.constant 0 : index
    %224 = vector.load %arg4[%c7_133, %c0_134, %c0_135] : memref<8x8x128xf32, #tpu.memory_space<vmem>>, vector<1x8x128xf32>
    %225 = vector.shape_cast %224 : vector<1x8x128xf32> to vector<8x128xf32>
    %226 = vector.shape_cast %221 : vector<8x128xf32> to vector<1x8x128xf32>
    tpu.vector_store %arg4[%c7_133, %c0_134, %c0_135], %226 {strides = array<i32>} : memref<8x8x128xf32, #tpu.memory_space<vmem>>, vector<1x8x128xf32>,
    %c0_i32_136 = arith.constant 0 : i32
    %227 = arith.cmpi eq, %arg1, %c0_i32_136 : i32
    %228 = arith.extui %227 : i1 to i32
    %c0_i32_137 = arith.constant 0 : i32
    %229 = arith.cmpi ne, %228, %c0_i32_137 : i32
    scf.if %229 {
      %c0_138 = arith.constant 0 : index
      %c0_139 = arith.constant 0 : index
      %230 = vector.load %arg7[%c0_138, %c0_139] : memref<8x128xf32, #tpu.memory_space<vmem>>, vector<8x128xf32>
      %c0_140 = arith.constant 0 : index
      %c0_141 = arith.constant 0 : index
      %231 = vector.load %arg5[%c0_140, %c0_141] : memref<8x128xf32, #tpu.memory_space<vmem>>, vector<8x128xf32>
      tpu.vector_store %arg5[%c0_140, %c0_141], %230 {strides = array<i32>} : memref<8x128xf32, #tpu.memory_space<vmem>>, vector<8x128xf32>,
      %c0_142 = arith.constant 0 : index
      %c0_143 = arith.constant 0 : index
      %232 = vector.load %arg8[%c0_142, %c0_143] : memref<8x128xf32, #tpu.memory_space<vmem>>, vector<8x128xf32>
      %c0_144 = arith.constant 0 : index
      %c0_145 = arith.constant 0 : index
      %233 = vector.load %arg6[%c0_144, %c0_145] : memref<8x128xf32, #tpu.memory_space<vmem>>, vector<8x128xf32>
      tpu.vector_store %arg6[%c0_144, %c0_145], %232 {strides = array<i32>} : memref<8x128xf32, #tpu.memory_space<vmem>>, vector<8x128xf32>,
    } else {
    }
    return
  }
  func.func @transform_0(%arg0: i32, %arg1: i32) -> (i32, i32, i32) {
    %c0_i32 = arith.constant 0 : i32
    %c0_i32_0 = arith.constant 0 : i32
    return %arg1, %arg0, %c0_i32 : i32, i32, i32
  }
  func.func @transform_1(%arg0: i32, %arg1: i32) -> (i32, i32) {
    %c0_i32 = arith.constant 0 : i32
    %c0_i32_0 = arith.constant 0 : i32
    %c0_i32_1 = arith.constant 0 : i32
    return %c0_i32, %c0_i32_0 : i32, i32
  }
  func.func @transform_2(%arg0: i32, %arg1: i32) -> (i32, i32, i32) {
    %c0_i32 = arith.constant 0 : i32
    %c0_i32_0 = arith.constant 0 : i32
    return %arg1, %arg0, %c0_i32 : i32, i32, i32
  }
  func.func @transform_3(%arg0: i32, %arg1: i32) -> (i32, i32) {
    %c0_i32 = arith.constant 0 : i32
    %c0_i32_0 = arith.constant 0 : i32
    return %arg0, %c0_i32 : i32, i32
  }
  func.func @transform_4(%arg0: i32, %arg1: i32) -> (i32, i32) {
    %c0_i32 = arith.constant 0 : i32
    %c0_i32_0 = arith.constant 0 : i32
    return %arg0, %c0_i32 : i32, i32
  }
}

</mosaic_0001>

<llo_original>
// kernel: tpu_custom_call.1
$region0: #{tpu_custom_call.1}
  #allocation0 [shape = 'u32[]', space=smem, size = 0x4, offset = 0x4, fixed_abs, tag = 'smem constant byte address 0x4 - core index']
  #allocation1 [shape = 'u32[72,128]{1,0:T(1,128)}', space=vmem, size = 0x9000, scoped, tag = 'internal scratch']
  %s0 = inlined_call_operand.hbm [shape: f32[8,128], index: 0, kind: input, shape index: {}]
  %s1 = inlined_call_operand.hbm [shape: f32[8,128], index: 1, kind: output, shape index: {}]
  %s2 = sld [smem:[#allocation0]]
  $region18: #{tpu_custom_call.1} parent=0
    _
  %s4 = ssub.s32 1, %s2
  %s5 = scalar_select 0, %s4, %s2
  $region1: #{tpu_custom_call.1} parent=0
    #allocation2 [shape = 'u8[4096]{0}', space=vmem, size = 0x1000, scoped, tag = 'input window, operand 0, single buffered']
    #allocation3 [shape = 's32[1]{0}', space=sflag, size = 0x4, scoped, tag = 'scoped memory for tpu_custom_call.1']
    #allocation4 [shape = 's32[1]{0}', space=sflag, size = 0x4, scoped, tag = 'scoped memory for tpu_custom_call.1']
    #allocation5 [shape = 'u8[4096]{0}', space=vmem, size = 0x1000, scoped, tag = 'output window, operand 0, single buffered']
    %6 = vsyncpa [#allocation3], 0
    %7 = vsyncpa [#allocation4], 0
    // Predicated region
    $region2: #{tpu_custom_call.1} parent=1 // pred_check
      _
    $region3: #{tpu_custom_call.1} parent=1 // pred_check_branch
      %9 = sbr.rel (0) target = $region5
    $region4: #{tpu_custom_call.1} parent=1 // pred_region
      %11 = vsyncadd [#allocation3], 0
      %s13 = sshll.u32 %s0, 4
      %s14 = int_to_ptr.hbm [resolvable:$true] %s13
      %s15 = sshll.u32 [#allocation2], 4
      %s16 = int_to_ptr.vmem [resolvable:$true] %s15
      %18 = dma.hbm_to_vmem [thread:$0]  %s14, 128, %s16, [#allocation3]
    $region5: #{tpu_custom_call.1} parent=1 // pred_fallthru
      _
    // Predicated region
    $region6: #{tpu_custom_call.1} parent=1 // pred_check
      _
    $region7: #{tpu_custom_call.1} parent=1 // pred_check_branch
      %20 = sbr.rel (0) target = $region9
    $region8: #{tpu_custom_call.1} parent=1 // pred_region
      %22 = dma.done [#allocation3], 128
    $region9: #{tpu_custom_call.1} parent=1 // pred_fallthru
      _
    %v23 = vld [vmem:[#allocation2] sm:$0xff]
    %v24 = vadd.f32 %v23, 1.0
    %25 = vst [vmem:[#allocation5] sm:$0xff] %v24
    // Predicated region
    $region10: #{tpu_custom_call.1} parent=1 // pred_check
      _
    $region11: #{tpu_custom_call.1} parent=1 // pred_check_branch
      %27 = sbr.rel (0) target = $region13
    $region12: #{tpu_custom_call.1} parent=1 // pred_region
      %29 = vsyncadd [#allocation4], 0
      %s31 = sshll.u32 [#allocation5], 4
      %s32 = int_to_ptr.vmem [resolvable:$true] %s31
      %s33 = sshll.u32 %s1, 4
      %s34 = int_to_ptr.hbm [resolvable:$true] %s33
      %36 = dma.vmem_to_hbm [thread:$0]  %s32, 128, %s34, [#allocation4]
    $region13: #{tpu_custom_call.1} parent=1 // pred_fallthru
      _
    // Predicated region
    $region14: #{tpu_custom_call.1} parent=1 // pred_check
      _
    $region15: #{tpu_custom_call.1} parent=1 // pred_check_branch
      %38 = sbr.rel (0) target = $region17
    $region16: #{tpu_custom_call.1} parent=1 // pred_region
      %40 = dma.done [#allocation4], 128
    $region17: #{tpu_custom_call.1} parent=1 // pred_fallthru
      _
    %41 = vsyncpa [#allocation3], 1
    %42 = vsyncpa [#allocation4], 1

// kernel: rnn_model_forward.2
$region0: #{rnn_model_forward.2}
  #allocation0 [shape = 'u32[]', space=smem, size = 0x4, offset = 0x4, fixed_abs, tag = 'smem constant byte address 0x4 - core index']
  #allocation1 [shape = 'u32[72,128]{1,0:T(1,128)}', space=vmem, size = 0x9000, scoped, tag = 'internal scratch']
  #allocation2 [shape = 'f32[8,128]{1,0:T(8,128)}', space=vmem, size = 0x1000, scoped, tag = 'scratch operand']
  #allocation3 [shape = 'f32[8,128]{1,0:T(8,128)}', space=vmem, size = 0x1000, scoped, tag = 'scratch operand']
  %s0 = inlined_call_operand.vmem [shape: f32[8,8,512], index: 0, kind: input, shape index: {}]
  %s1 = inlined_call_operand.hbm [shape: f32[128,512], index: 1, kind: input, shape index: {}]
  %s2 = inlined_call_operand.vmem [shape: f32[8,8,128], index: 2, kind: output, shape index: {0}]
  %s3 = inlined_call_operand.vmem [shape: f32[8,128], index: 3, kind: output, shape index: {1}]
  %s4 = inlined_call_operand.vmem [shape: f32[8,128], index: 4, kind: output, shape index: {2}]
  %5 = xla_tuple %s2, %s3, %s4
  %s6 = sld [smem:[#allocation0]]
  $region46: #{rnn_model_forward.2} parent=0
    _
  %s8 = ssub.s32 1, %s6
  %s9 = scalar_select 0, %s8, %s6
  $region1: #{rnn_model_forward.2} parent=0
    #allocation4 [shape = 'u8[262144]{0}', space=vmem, size = 0x40000, scoped, tag = 'input window, operand 1, single buffered']
    #allocation5 [shape = 's32[1]{0}', space=sflag, size = 0x4, scoped, tag = 'scoped memory for rnn_model_forward.2']
    %10 = vsyncpa [#allocation5], 0
    // Predicated region
    $region2: #{rnn_model_forward.2} parent=1 // pred_check
      _
    $region3: #{rnn_model_forward.2} parent=1 // pred_check_branch
      %12 = sbr.rel (0) target = $region5
    $region4: #{rnn_model_forward.2} parent=1 // pred_region
      _
    $region5: #{rnn_model_forward.2} parent=1 // pred_fallthru
      _
    // Predicated region
    $region6: #{rnn_model_forward.2} parent=1 // pred_check
      _
    $region7: #{rnn_model_forward.2} parent=1 // pred_check_branch
      %14 = sbr.rel (0) target = $region9
    $region8: #{rnn_model_forward.2} parent=1 // pred_region
      %16 = vsyncadd [#allocation5], 0
      %s17 = sshll.u32 %s1, 4
      %s18 = int_to_ptr.hbm [resolvable:$true] %s17
      %s19 = sshll.u32 [#allocation4], 4
      %s20 = int_to_ptr.vmem [resolvable:$true] %s19
      %25 = dma.hbm_to_vmem [thread:$0]  %s18, 8192, %s20, [#allocation5], 512, 512, 32
    $region9: #{rnn_model_forward.2} parent=1 // pred_fallthru
      _
    // Predicated region
    $region10: #{rnn_model_forward.2} parent=1 // pred_check
      _
    $region11: #{rnn_model_forward.2} parent=1 // pred_check_branch
      %27 = sbr.rel (0) target = $region13
    $region12: #{rnn_model_forward.2} parent=1 // pred_region
      %29 = dma.done [#allocation5], 8192
    $region13: #{rnn_model_forward.2} parent=1 // pred_fallthru
      _
    %p30 = scmp.eq.s32.totalorder 0, 0
    // Predicated region
    $region14: #{rnn_model_forward.2} parent=1 // pred_check
      %p31 = pneg %p30
    $region15: #{rnn_model_forward.2} parent=1 // pred_check_branch
      %33 = sbr.rel (%p31) target = $region17
    $region16: #{rnn_model_forward.2} parent=1 // pred_region
      %34 = vst [vmem:[#allocation2] sm:$0xff] 0.0
      %35 = vst [vmem:[#allocation3] sm:$0xff] 0.0
    $region17: #{rnn_model_forward.2} parent=1 // pred_fallthru
      _
    %v36 = vld [vmem:[%s0] sm:$0xff]
    %v37 = vld [vmem:[%s0 + $0x8] sm:$0xff]
    %v38 = vld [vmem:[%s0 + $0x10] sm:$0xff]
    %v39 = vld [vmem:[%s0 + $0x18] sm:$0xff]
    %v40 = vld [vmem:[#allocation2] sm:$0xff]
    %v41 = vld [vmem:[#allocation4] sm:$0xff]
    %v42 = vld [vmem:[#allocation4 + $0x8] sm:$0xff]
    %v43 = vld [vmem:[#allocation4 + $0x10] sm:$0xff]
    %v44 = vld [vmem:[#allocation4 + $0x18] sm:$0xff]
    %v45 = vld [vmem:[#allocation4 + $0x20] sm:$0xff]
    %v46 = vld [vmem:[#allocation4 + $0x28] sm:$0xff]
    %v47 = vld [vmem:[#allocation4 + $0x30] sm:$0xff]
    %v48 = vld [vmem:[#allocation4 + $0x38] sm:$0xff]
    %v49 = vld [vmem:[#allocation4 + $0x40] sm:$0xff]
    %v50 = vld [vmem:[#allocation4 + $0x48] sm:$0xff]
    %v51 = vld [vmem:[#allocation4 + $0x50] sm:$0xff]
    %v52 = vld [vmem:[#allocation4 + $0x58] sm:$0xff]
    %v53 = vld [vmem:[#allocation4 + $0x60] sm:$0xff]
    %v54 = vld [vmem:[#allocation4 + $0x68] sm:$0xff]
    %v55 = vld [vmem:[#allocation4 + $0x70] sm:$0xff]
    %v56 = vld [vmem:[#allocation4 + $0x78] sm:$0xff]
    %v57 = vld [vmem:[#allocation4 + $0x80] sm:$0xff]
    %v58 = vld [vmem:[#allocation4 + $0x88] sm:$0xff]
    %v59 = vld [vmem:[#allocation4 + $0x90] sm:$0xff]
    %v60 = vld [vmem:[#allocation4 + $0x98] sm:$0xff]
    %v61 = vld [vmem:[#allocation4 + $0xa0] sm:$0xff]
    %v62 = vld [vmem:[#allocation4 + $0xa8] sm:$0xff]
    %v63 = vld [vmem:[#allocation4 + $0xb0] sm:$0xff]
    %v64 = vld [vmem:[#allocation4 + $0xb8] sm:$0xff]
    %v65 = vld [vmem:[#allocation4 + $0xc0] sm:$0xff]
    %v66 = vld [vmem:[#allocation4 + $0xc8] sm:$0xff]
    %v67 = vld [vmem:[#allocation4 + $0xd0] sm:$0xff]
    %v68 = vld [vmem:[#allocation4 + $0xd8] sm:$0xff]
    %v69 = vld [vmem:[#allocation4 + $0xe0] sm:$0xff]
    %v70 = vld [vmem:[#allocation4 + $0xe8] sm:$0xff]
    %v71 = vld [vmem:[#allocation4 + $0xf0] sm:$0xff]
    %v72 = vld [vmem:[#allocation4 + $0xf8] sm:$0xff]
    %v73 = vld [vmem:[#allocation4 + $0x100] sm:$0xff]
    %v74 = vld [vmem:[#allocation4 + $0x108] sm:$0xff]
    %v75 = vld [vmem:[#allocation4 + $0x110] sm:$0xff]
    %v76 = vld [vmem:[#allocation4 + $0x118] sm:$0xff]
    %v77 = vld [vmem:[#allocation4 + $0x120] sm:$0xff]
    %v78 = vld [vmem:[#allocation4 + $0x128] sm:$0xff]
    %v79 = vld [vmem:[#allocation4 + $0x130] sm:$0xff]
    %v80 = vld [vmem:[#allocation4 + $0x138] sm:$0xff]
    %v81 = vld [vmem:[#allocation4 + $0x140] sm:$0xff]
    %v82 = vld [vmem:[#allocation4 + $0x148] sm:$0xff]
    %v83 = vld [vmem:[#allocation4 + $0x150] sm:$0xff]
    %v84 = vld [vmem:[#allocation4 + $0x158] sm:$0xff]
    %v85 = vld [vmem:[#allocation4 + $0x160] sm:$0xff]
    %v86 = vld [vmem:[#allocation4 + $0x168] sm:$0xff]
    %v87 = vld [vmem:[#allocation4 + $0x170] sm:$0xff]
    %v88 = vld [vmem:[#allocation4 + $0x178] sm:$0xff]
    %v89 = vld [vmem:[#allocation4 + $0x180] sm:$0xff]
    %v90 = vld [vmem:[#allocation4 + $0x188] sm:$0xff]
    %v91 = vld [vmem:[#allocation4 + $0x190] sm:$0xff]
    %v92 = vld [vmem:[#allocation4 + $0x198] sm:$0xff]
    %v93 = vld [vmem:[#allocation4 + $0x1a0] sm:$0xff]
    %v94 = vld [vmem:[#allocation4 + $0x1a8] sm:$0xff]
    %v95 = vld [vmem:[#allocation4 + $0x1b0] sm:$0xff]
    %v96 = vld [vmem:[#allocation4 + $0x1b8] sm:$0xff]
    %v97 = vld [vmem:[#allocation4 + $0x1c0] sm:$0xff]
    %v98 = vld [vmem:[#allocation4 + $0x1c8] sm:$0xff]
    %v99 = vld [vmem:[#allocation4 + $0x1d0] sm:$0xff]
    %v100 = vld [vmem:[#allocation4 + $0x1d8] sm:$0xff]
    %v101 = vld [vmem:[#allocation4 + $0x1e0] sm:$0xff]
    %v102 = vld [vmem:[#allocation4 + $0x1e8] sm:$0xff]
    %v103 = vld [vmem:[#allocation4 + $0x1f0] sm:$0xff]
    %v104 = vld [vmem:[#allocation4 + $0x1f8] sm:$0xff]
    %105 = vmatpush.msra.mxu0 %v101
    %106 = vmatpush.msra.mxu0 %v97
    %107 = vmatpush.msra.mxu0 %v93
    %108 = vmatpush.msra.mxu0 %v89
    %109 = vmatpush.msra.mxu0 %v85
    %110 = vmatpush.msra.mxu0 %v81
    %111 = vmatpush.msra.mxu0 %v77
    %112 = vmatpush.msra.mxu0 %v73
    %113 = vmatpush.msra.mxu0 %v69
    %114 = vmatpush.msra.mxu0 %v65
    %115 = vmatpush.msra.mxu0 %v61
    %116 = vmatpush.msra.mxu0 %v57
    %117 = vmatpush.msra.mxu0 %v53
    %118 = vmatpush.msra.mxu0 %v49
    %119 = vmatpush.msra.mxu0 %v45
    %120 = vmatpush.msra.mxu0 %v41
    %121 = vmatmul.f32.gmra.mxu0 %v40
    %v122 = vpop.f32.mrf.mxu0
    %v123 = vadd.f32 0.0, %v122
    %124 = vdwg.mxu0
    %125 = vmatpush.msra.mxu0 %v102
    %126 = vmatpush.msra.mxu0 %v98
    %127 = vmatpush.msra.mxu0 %v94
    %128 = vmatpush.msra.mxu0 %v90
    %129 = vmatpush.msra.mxu0 %v86
    %130 = vmatpush.msra.mxu0 %v82
    %131 = vmatpush.msra.mxu0 %v78
    %132 = vmatpush.msra.mxu0 %v74
    %133 = vmatpush.msra.mxu0 %v70
    %134 = vmatpush.msra.mxu0 %v66
    %135 = vmatpush.msra.mxu0 %v62
    %136 = vmatpush.msra.mxu0 %v58
    %137 = vmatpush.msra.mxu0 %v54
    %138 = vmatpush.msra.mxu0 %v50
    %139 = vmatpush.msra.mxu0 %v46
    %140 = vmatpush.msra.mxu0 %v42
    %141 = vmatmul.f32.gmra.mxu0 %v40
    %v142 = vpop.f32.mrf.mxu0
    %v143 = vadd.f32 0.0, %v142
    %144 = vdwg.mxu0
    %145 = vmatpush.msra.mxu0 %v103
    %146 = vmatpush.msra.mxu0 %v99
    %147 = vmatpush.msra.mxu0 %v95
    %148 = vmatpush.msra.mxu0 %v91
    %149 = vmatpush.msra.mxu0 %v87
    %150 = vmatpush.msra.mxu0 %v83
    %151 = vmatpush.msra.mxu0 %v79
    %152 = vmatpush.msra.mxu0 %v75
    %153 = vmatpush.msra.mxu0 %v71
    %154 = vmatpush.msra.mxu0 %v67
    %155 = vmatpush.msra.mxu0 %v63
    %156 = vmatpush.msra.mxu0 %v59
    %157 = vmatpush.msra.mxu0 %v55
    %158 = vmatpush.msra.mxu0 %v51
    %159 = vmatpush.msra.mxu0 %v47
    %160 = vmatpush.msra.mxu0 %v43
    %161 = vmatmul.f32.gmra.mxu0 %v40
    %v162 = vpop.f32.mrf.mxu0
    %v163 = vadd.f32 0.0, %v162
    %164 = vdwg.mxu0
    %165 = vmatpush.msra.mxu0 %v104
    %166 = vmatpush.msra.mxu0 %v100
    %167 = vmatpush.msra.mxu0 %v96
    %168 = vmatpush.msra.mxu0 %v92
    %169 = vmatpush.msra.mxu0 %v88
    %170 = vmatpush.msra.mxu0 %v84
    %171 = vmatpush.msra.mxu0 %v80
    %172 = vmatpush.msra.mxu0 %v76
    %173 = vmatpush.msra.mxu0 %v72
    %174 = vmatpush.msra.mxu0 %v68
    %175 = vmatpush.msra.mxu0 %v64
    %176 = vmatpush.msra.mxu0 %v60
    %177 = vmatpush.msra.mxu0 %v56
    %178 = vmatpush.msra.mxu0 %v52
    %179 = vmatpush.msra.mxu0 %v48
    %180 = vmatpush.msra.mxu0 %v44
    %181 = vmatmul.f32.gmra.mxu0 %v40
    %v182 = vpop.f32.mrf.mxu0
    %v183 = vadd.f32 0.0, %v182
    %184 = vdwg.mxu0
    %v185 = vadd.f32 %v36, %v123
    %v186 = vadd.f32 %v37, %v143
    %v187 = vadd.f32 %v38, %v163
    %v188 = vadd.f32 %v39, %v183
    %v189 = vxor.u32 %v185, 2147483648
    %v190 = vxor.u32 %v186, 2147483648
    %v191 = vxor.u32 %v187, 2147483648
    %v192 = vmul.f32 %v189, 1.442695
    %v193 = vpow.pop %v192
    %v194 = vmul.f32 %v190, 1.442695
    %v195 = vpow.pop %v194
    %v196 = vmul.f32 %v191, 1.442695
    %v197 = vpow.pop %v196
    %v198 = vadd.f32 %v193, 1.0
    %v199 = vadd.f32 %v195, 1.0
    %v200 = vadd.f32 %v197, 1.0
    %v201 = vrcp.pop %v198
    %v202 = vmul.f32 %v198, %v201
    %v203 = vsub.f32 1.0, %v202
    %v204 = vmul.f32 %v201, %v203
    %v205 = vadd.f32 %v201, %v204
    %vm206 = vweird.f32 %v198
    %vm207 = vweird.f32 %v201
    %vm208 = vmor %vm206, %vm207
    %v209 = vsel %vm208, %v201, %v205
    %v210 = vand.u32 2147483647, %v198
    %vm211 = vcmp.eq.f32.partialorder %v210, 8.507059e+37
    %v212 = vand.u32 %v198, 2147483648
    %v213 = vor.u32 1.1754944e-38, %v212
    %v214 = vsel %vm211, %v213, %v209
    %v215 = vmul.f32 1.0, %v214
    %v216 = vrcp.pop %v199
    %v217 = vmul.f32 %v199, %v216
    %v218 = vsub.f32 1.0, %v217
    %v219 = vmul.f32 %v216, %v218
    %v220 = vadd.f32 %v216, %v219
    %vm221 = vweird.f32 %v199
    %vm222 = vweird.f32 %v216
    %vm223 = vmor %vm221, %vm222
    %v224 = vsel %vm223, %v216, %v220
    %v225 = vand.u32 2147483647, %v199
    %vm226 = vcmp.eq.f32.partialorder %v225, 8.507059e+37
    %v227 = vand.u32 %v199, 2147483648
    %v228 = vor.u32 1.1754944e-38, %v227
    %v229 = vsel %vm226, %v228, %v224
    %v230 = vmul.f32 1.0, %v229
    %v231 = vrcp.pop %v200
    %v232 = vmul.f32 %v200, %v231
    %v233 = vsub.f32 1.0, %v232
    %v234 = vmul.f32 %v231, %v233
    %v235 = vadd.f32 %v231, %v234
    %vm236 = vweird.f32 %v200
    %vm237 = vweird.f32 %v231
    %vm238 = vmor %vm236, %vm237
    %v239 = vsel %vm238, %v231, %v235
    %v240 = vand.u32 2147483647, %v200
    %vm241 = vcmp.eq.f32.partialorder %v240, 8.507059e+37
    %v242 = vand.u32 %v200, 2147483648
    %v243 = vor.u32 1.1754944e-38, %v242
    %v244 = vsel %vm241, %v243, %v239
    %v245 = vmul.f32 1.0, %v244
    %v246 = vtanh.pop %v188
    %v247 = vld [vmem:[#allocation3] sm:$0xff]
    %v248 = vmul.f32 %v230, %v247
    %v249 = vmul.f32 %v215, %v246
    %v250 = vadd.f32 %v248, %v249
    %v251 = vtanh.pop %v250
    %v252 = vmul.f32 %v245, %v251
    %253 = vst [vmem:[#allocation3] sm:$0xff] %v250
    %254 = vst [vmem:[#allocation2] sm:$0xff] %v252
    %255 = vst [vmem:[%s2] sm:$0xff] %v252
    %s256 = scalar_lea.vmem %s0, 32
    %v257 = vld [vmem:[%s256] sm:$0xff]
    %v258 = vld [vmem:[%s256 + $0x8] sm:$0xff]
    %v259 = vld [vmem:[%s256 + $0x10] sm:$0xff]
    %v260 = vld [vmem:[%s256 + $0x18] sm:$0xff]
    %v261 = vld [vmem:[#allocation2] sm:$0xff]
    %v262 = vld [vmem:[#allocation4] sm:$0xff]
    %v263 = vld [vmem:[#allocation4 + $0x8] sm:$0xff]
    %v264 = vld [vmem:[#allocation4 + $0x10] sm:$0xff]
    %v265 = vld [vmem:[#allocation4 + $0x18] sm:$0xff]
    %v266 = vld [vmem:[#allocation4 + $0x20] sm:$0xff]
    %v267 = vld [vmem:[#allocation4 + $0x28] sm:$0xff]
    %v268 = vld [vmem:[#allocation4 + $0x30] sm:$0xff]
    %v269 = vld [vmem:[#allocation4 + $0x38] sm:$0xff]
    %v270 = vld [vmem:[#allocation4 + $0x40] sm:$0xff]
    %v271 = vld [vmem:[#allocation4 + $0x48] sm:$0xff]
    %v272 = vld [vmem:[#allocation4 + $0x50] sm:$0xff]
    %v273 = vld [vmem:[#allocation4 + $0x58] sm:$0xff]
    %v274 = vld [vmem:[#allocation4 + $0x60] sm:$0xff]
    %v275 = vld [vmem:[#allocation4 + $0x68] sm:$0xff]
    %v276 = vld [vmem:[#allocation4 + $0x70] sm:$0xff]
    %v277 = vld [vmem:[#allocation4 + $0x78] sm:$0xff]
    %v278 = vld [vmem:[#allocation4 + $0x80] sm:$0xff]
    %v279 = vld [vmem:[#allocation4 + $0x88] sm:$0xff]
    %v280 = vld [vmem:[#allocation4 + $0x90] sm:$0xff]
    %v281 = vld [vmem:[#allocation4 + $0x98] sm:$0xff]
    %v282 = vld [vmem:[#allocation4 + $0xa0] sm:$0xff]
    %v283 = vld [vmem:[#allocation4 + $0xa8] sm:$0xff]
    %v284 = vld [vmem:[#allocation4 + $0xb0] sm:$0xff]
    %v285 = vld [vmem:[#allocation4 + $0xb8] sm:$0xff]
    %v286 = vld [vmem:[#allocation4 + $0xc0] sm:$0xff]
    %v287 = vld [vmem:[#allocation4 + $0xc8] sm:$0xff]
    %v288 = vld [vmem:[#allocation4 + $0xd0] sm:$0xff]
    %v289 = vld [vmem:[#allocation4 + $0xd8] sm:$0xff]
    %v290 = vld [vmem:[#allocation4 + $0xe0] sm:$0xff]
    %v291 = vld [vmem:[#allocation4 + $0xe8] sm:$0xff]
    %v292 = vld [vmem:[#allocation4 + $0xf0] sm:$0xff]
    %v293 = vld [vmem:[#allocation4 + $0xf8] sm:$0xff]
    %v294 = vld [vmem:[#allocation4 + $0x100] sm:$0xff]
    %v295 = vld [vmem:[#allocation4 + $0x108] sm:$0xff]
    %v296 = vld [vmem:[#allocation4 + $0x110] sm:$0xff]
    %v297 = vld [vmem:[#allocation4 + $0x118] sm:$0xff]
    %v298 = vld [vmem:[#allocation4 + $0x120] sm:$0xff]
    %v299 = vld [vmem:[#allocation4 + $0x128] sm:$0xff]
    %v300 = vld [vmem:[#allocation4 + $0x130] sm:$0xff]
    %v301 = vld [vmem:[#allocation4 + $0x138] sm:$0xff]
    %v302 = vld [vmem:[#allocation4 + $0x140] sm:$0xff]
    %v303 = vld [vmem:[#allocation4 + $0x148] sm:$0xff]
    %v304 = vld [vmem:[#allocation4 + $0x150] sm:$0xff]
    %v305 = vld [vmem:[#allocation4 + $0x158] sm:$0xff]
    %v306 = vld [vmem:[#allocation4 + $0x160] sm:$0xff]
    %v307 = vld [vmem:[#allocation4 + $0x168] sm:$0xff]
    %v308 = vld [vmem:[#allocation4 + $0x170] sm:$0xff]
    %v309 = vld [vmem:[#allocation4 + $0x178] sm:$0xff]
    %v310 = vld [vmem:[#allocation4 + $0x180] sm:$0xff]
    %v311 = vld [vmem:[#allocation4 + $0x188] sm:$0xff]
    %v312 = vld [vmem:[#allocation4 + $0x190] sm:$0xff]
    %v313 = vld [vmem:[#allocation4 + $0x198] sm:$0xff]
    %v314 = vld [vmem:[#allocation4 + $0x1a0] sm:$0xff]
    %v315 = vld [vmem:[#allocation4 + $0x1a8] sm:$0xff]
    %v316 = vld [vmem:[#allocation4 + $0x1b0] sm:$0xff]
    %v317 = vld [vmem:[#allocation4 + $0x1b8] sm:$0xff]
    %v318 = vld [vmem:[#allocation4 + $0x1c0] sm:$0xff]
    %v319 = vld [vmem:[#allocation4 + $0x1c8] sm:$0xff]
    %v320 = vld [vmem:[#allocation4 + $0x1d0] sm:$0xff]
    %v321 = vld [vmem:[#allocation4 + $0x1d8] sm:$0xff]
    %v322 = vld [vmem:[#allocation4 + $0x1e0] sm:$0xff]
    %v323 = vld [vmem:[#allocation4 + $0x1e8] sm:$0xff]
    %v324 = vld [vmem:[#allocation4 + $0x1f0] sm:$0xff]
    %v325 = vld [vmem:[#allocation4 + $0x1f8] sm:$0xff]
    %326 = vmatpush.msra.mxu0 %v322
    %327 = vmatpush.msra.mxu0 %v318
    %328 = vmatpush.msra.mxu0 %v314
    %329 = vmatpush.msra.mxu0 %v310
    %330 = vmatpush.msra.mxu0 %v306
    %331 = vmatpush.msra.mxu0 %v302
    %332 = vmatpush.msra.mxu0 %v298
    %333 = vmatpush.msra.mxu0 %v294
    %334 = vmatpush.msra.mxu0 %v290
    %335 = vmatpush.msra.mxu0 %v286
    %336 = vmatpush.msra.mxu0 %v282
    %337 = vmatpush.msra.mxu0 %v278
    %338 = vmatpush.msra.mxu0 %v274
    %339 = vmatpush.msra.mxu0 %v270
    %340 = vmatpush.msra.mxu0 %v266
    %341 = vmatpush.msra.mxu0 %v262
    %342 = vmatmul.f32.gmra.mxu0 %v261
    %v343 = vpop.f32.mrf.mxu0
    %v344 = vadd.f32 0.0, %v343
    %345 = vdwg.mxu0
    %346 = vmatpush.msra.mxu0 %v323
    %347 = vmatpush.msra.mxu0 %v319
    %348 = vmatpush.msra.mxu0 %v315
    %349 = vmatpush.msra.mxu0 %v311
    %350 = vmatpush.msra.mxu0 %v307
    %351 = vmatpush.msra.mxu0 %v303
    %352 = vmatpush.msra.mxu0 %v299
    %353 = vmatpush.msra.mxu0 %v295
    %354 = vmatpush.msra.mxu0 %v291
    %355 = vmatpush.msra.mxu0 %v287
    %356 = vmatpush.msra.mxu0 %v283
    %357 = vmatpush.msra.mxu0 %v279
    %358 = vmatpush.msra.mxu0 %v275
    %359 = vmatpush.msra.mxu0 %v271
    %360 = vmatpush.msra.mxu0 %v267
    %361 = vmatpush.msra.mxu0 %v263
    %362 = vmatmul.f32.gmra.mxu0 %v261
    %v363 = vpop.f32.mrf.mxu0
    %v364 = vadd.f32 0.0, %v363
    %365 = vdwg.mxu0
    %366 = vmatpush.msra.mxu0 %v324
    %367 = vmatpush.msra.mxu0 %v320
    %368 = vmatpush.msra.mxu0 %v316
    %369 = vmatpush.msra.mxu0 %v312
    %370 = vmatpush.msra.mxu0 %v308
    %371 = vmatpush.msra.mxu0 %v304
    %372 = vmatpush.msra.mxu0 %v300
    %373 = vmatpush.msra.mxu0 %v296
    %374 = vmatpush.msra.mxu0 %v292
    %375 = vmatpush.msra.mxu0 %v288
    %376 = vmatpush.msra.mxu0 %v284
    %377 = vmatpush.msra.mxu0 %v280
    %378 = vmatpush.msra.mxu0 %v276
    %379 = vmatpush.msra.mxu0 %v272
    %380 = vmatpush.msra.mxu0 %v268
    %381 = vmatpush.msra.mxu0 %v264
    %382 = vmatmul.f32.gmra.mxu0 %v261
    %v383 = vpop.f32.mrf.mxu0
    %v384 = vadd.f32 0.0, %v383
    %385 = vdwg.mxu0
    %386 = vmatpush.msra.mxu0 %v325
    %387 = vmatpush.msra.mxu0 %v321
    %388 = vmatpush.msra.mxu0 %v317
    %389 = vmatpush.msra.mxu0 %v313
    %390 = vmatpush.msra.mxu0 %v309
    %391 = vmatpush.msra.mxu0 %v305
    %392 = vmatpush.msra.mxu0 %v301
    %393 = vmatpush.msra.mxu0 %v297
    %394 = vmatpush.msra.mxu0 %v293
    %395 = vmatpush.msra.mxu0 %v289
    %396 = vmatpush.msra.mxu0 %v285
    %397 = vmatpush.msra.mxu0 %v281
    %398 = vmatpush.msra.mxu0 %v277
    %399 = vmatpush.msra.mxu0 %v273
    %400 = vmatpush.msra.mxu0 %v269
    %401 = vmatpush.msra.mxu0 %v265
    %402 = vmatmul.f32.gmra.mxu0 %v261
    %v403 = vpop.f32.mrf.mxu0
    %v404 = vadd.f32 0.0, %v403
    %405 = vdwg.mxu0
    %v406 = vadd.f32 %v257, %v344
    %v407 = vadd.f32 %v258, %v364
    %v408 = vadd.f32 %v259, %v384
    %v409 = vadd.f32 %v260, %v404
    %v410 = vxor.u32 %v406, 2147483648
    %v411 = vxor.u32 %v407, 2147483648
    %v412 = vxor.u32 %v408, 2147483648
    %v413 = vmul.f32 %v410, 1.442695
    %v414 = vpow.pop %v413
    %v415 = vmul.f32 %v411, 1.442695
    %v416 = vpow.pop %v415
    %v417 = vmul.f32 %v412, 1.442695
    %v418 = vpow.pop %v417
    %v419 = vadd.f32 %v414, 1.0
    %v420 = vadd.f32 %v416, 1.0
    %v421 = vadd.f32 %v418, 1.0
    %v422 = vrcp.pop %v419
    %v423 = vmul.f32 %v419, %v422
    %v424 = vsub.f32 1.0, %v423
    %v425 = vmul.f32 %v422, %v424
    %v426 = vadd.f32 %v422, %v425
    %vm427 = vweird.f32 %v419
    %vm428 = vweird.f32 %v422
    %vm429 = vmor %vm427, %vm428
    %v430 = vsel %vm429, %v422, %v426
    %v431 = vand.u32 2147483647, %v419
    %vm432 = vcmp.eq.f32.partialorder %v431, 8.507059e+37
    %v433 = vand.u32 %v419, 2147483648
    %v434 = vor.u32 1.1754944e-38, %v433
    %v435 = vsel %vm432, %v434, %v430
    %v436 = vmul.f32 1.0, %v435
    %v437 = vrcp.pop %v420
    %v438 = vmul.f32 %v420, %v437
    %v439 = vsub.f32 1.0, %v438
    %v440 = vmul.f32 %v437, %v439
    %v441 = vadd.f32 %v437, %v440
    %vm442 = vweird.f32 %v420
    %vm443 = vweird.f32 %v437
    %vm444 = vmor %vm442, %vm443
    %v445 = vsel %vm444, %v437, %v441
    %v446 = vand.u32 2147483647, %v420
    %vm447 = vcmp.eq.f32.partialorder %v446, 8.507059e+37
    %v448 = vand.u32 %v420, 2147483648
    %v449 = vor.u32 1.1754944e-38, %v448
    %v450 = vsel %vm447, %v449, %v445
    %v451 = vmul.f32 1.0, %v450
    %v452 = vrcp.pop %v421
    %v453 = vmul.f32 %v421, %v452
    %v454 = vsub.f32 1.0, %v453
    %v455 = vmul.f32 %v452, %v454
    %v456 = vadd.f32 %v452, %v455
    %vm457 = vweird.f32 %v421
    %vm458 = vweird.f32 %v452
    %vm459 = vmor %vm457, %vm458
    %v460 = vsel %vm459, %v452, %v456
    %v461 = vand.u32 2147483647, %v421
    %vm462 = vcmp.eq.f32.partialorder %v461, 8.507059e+37
    %v463 = vand.u32 %v421, 2147483648
    %v464 = vor.u32 1.1754944e-38, %v463
    %v465 = vsel %vm462, %v464, %v460
    %v466 = vmul.f32 1.0, %v465
    %v467 = vtanh.pop %v409
    %v468 = vld [vmem:[#allocation3] sm:$0xff]
    %v469 = vmul.f32 %v451, %v468
    %v470 = vmul.f32 %v436, %v467
    %v471 = vadd.f32 %v469, %v470
    %v472 = vtanh.pop %v471
    %v473 = vmul.f32 %v466, %v472
    %474 = vst [vmem:[#allocation3] sm:$0xff] %v471
    %475 = vst [vmem:[#allocation2] sm:$0xff] %v473
    %s476 = scalar_lea.vmem %s2, 8
    %477 = vst [vmem:[%s476] sm:$0xff] %v473
    %s478 = scalar_lea.vmem %s0, 64
    %v479 = vld [vmem:[%s478] sm:$0xff]
    %v480 = vld [vmem:[%s478 + $0x8] sm:$0xff]
    %v481 = vld [vmem:[%s478 + $0x10] sm:$0xff]
    %v482 = vld [vmem:[%s478 + $0x18] sm:$0xff]
    %v483 = vld [vmem:[#allocation2] sm:$0xff]
    %v484 = vld [vmem:[#allocation4] sm:$0xff]
    %v485 = vld [vmem:[#allocation4 + $0x8] sm:$0xff]
    %v486 = vld [vmem:[#allocation4 + $0x10] sm:$0xff]
    %v487 = vld [vmem:[#allocation4 + $0x18] sm:$0xff]
    %v488 = vld [vmem:[#allocation4 + $0x20] sm:$0xff]
    %v489 = vld [vmem:[#allocation4 + $0x28] sm:$0xff]
    %v490 = vld [vmem:[#allocation4 + $0x30] sm:$0xff]
    %v491 = vld [vmem:[#allocation4 + $0x38] sm:$0xff]
    %v492 = vld [vmem:[#allocation4 + $0x40] sm:$0xff]
    %v493 = vld [vmem:[#allocation4 + $0x48] sm:$0xff]
    %v494 = vld [vmem:[#allocation4 + $0x50] sm:$0xff]
    %v495 = vld [vmem:[#allocation4 + $0x58] sm:$0xff]
    %v496 = vld [vmem:[#allocation4 + $0x60] sm:$0xff]
    %v497 = vld [vmem:[#allocation4 + $0x68] sm:$0xff]
    %v498 = vld [vmem:[#allocation4 + $0x70] sm:$0xff]
    %v499 = vld [vmem:[#allocation4 + $0x78] sm:$0xff]
    %v500 = vld [vmem:[#allocation4 + $0x80] sm:$0xff]
    %v501 = vld [vmem:[#allocation4 + $0x88] sm:$0xff]
    %v502 = vld [vmem:[#allocation4 + $0x90] sm:$0xff]
    %v503 = vld [vmem:[#allocation4 + $0x98] sm:$0xff]
    %v504 = vld [vmem:[#allocation4 + $0xa0] sm:$0xff]
    %v505 = vld [vmem:[#allocation4 + $0xa8] sm:$0xff]
    %v506 = vld [vmem:[#allocation4 + $0xb0] sm:$0xff]
    %v507 = vld [vmem:[#allocation4 + $0xb8] sm:$0xff]
    %v508 = vld [vmem:[#allocation4 + $0xc0] sm:$0xff]
    %v509 = vld [vmem:[#allocation4 + $0xc8] sm:$0xff]
    %v510 = vld [vmem:[#allocation4 + $0xd0] sm:$0xff]
    %v511 = vld [vmem:[#allocation4 + $0xd8] sm:$0xff]
    %v512 = vld [vmem:[#allocation4 + $0xe0] sm:$0xff]
    %v513 = vld [vmem:[#allocation4 + $0xe8] sm:$0xff]
    %v514 = vld [vmem:[#allocation4 + $0xf0] sm:$0xff]
    %v515 = vld [vmem:[#allocation4 + $0xf8] sm:$0xff]
    %v516 = vld [vmem:[#allocation4 + $0x100] sm:$0xff]
    %v517 = vld [vmem:[#allocation4 + $0x108] sm:$0xff]
    %v518 = vld [vmem:[#allocation4 + $0x110] sm:$0xff]
    %v519 = vld [vmem:[#allocation4 + $0x118] sm:$0xff]
    %v520 = vld [vmem:[#allocation4 + $0x120] sm:$0xff]
    %v521 = vld [vmem:[#allocation4 + $0x128] sm:$0xff]
    %v522 = vld [vmem:[#allocation4 + $0x130] sm:$0xff]
    %v523 = vld [vmem:[#allocation4 + $0x138] sm:$0xff]
    %v524 = vld [vmem:[#allocation4 + $0x140] sm:$0xff]
    %v525 = vld [vmem:[#allocation4 + $0x148] sm:$0xff]
    %v526 = vld [vmem:[#allocation4 + $0x150] sm:$0xff]
    %v527 = vld [vmem:[#allocation4 + $0x158] sm:$0xff]
    %v528 = vld [vmem:[#allocation4 + $0x160] sm:$0xff]
    %v529 = vld [vmem:[#allocation4 + $0x168] sm:$0xff]
    %v530 = vld [vmem:[#allocation4 + $0x170] sm:$0xff]
    %v531 = vld [vmem:[#allocation4 + $0x178] sm:$0xff]
    %v532 = vld [vmem:[#allocation4 + $0x180] sm:$0xff]
    %v533 = vld [vmem:[#allocation4 + $0x188] sm:$0xff]
    %v534 = vld [vmem:[#allocation4 + $0x190] sm:$0xff]
    %v535 = vld [vmem:[#allocation4 + $0x198] sm:$0xff]
    %v536 = vld [vmem:[#allocation4 + $0x1a0] sm:$0xff]
    %v537 = vld [vmem:[#allocation4 + $0x1a8] sm:$0xff]
    %v538 = vld [vmem:[#allocation4 + $0x1b0] sm:$0xff]
    %v539 = vld [vmem:[#allocation4 + $0x1b8] sm:$0xff]
    %v540 = vld [vmem:[#allocation4 + $0x1c0] sm:$0xff]
    %v541 = vld [vmem:[#allocation4 + $0x1c8] sm:$0xff]
    %v542 = vld [vmem:[#allocation4 + $0x1d0] sm:$0xff]
    %v543 = vld [vmem:[#allocation4 + $0x1d8] sm:$0xff]
    %v544 = vld [vmem:[#allocation4 + $0x1e0] sm:$0xff]
    %v545 = vld [vmem:[#allocation4 + $0x1e8] sm:$0xff]
    %v546 = vld [vmem:[#allocation4 + $0x1f0] sm:$0xff]
    %v547 = vld [vmem:[#allocation4 + $0x1f8] sm:$0xff]
    %548 = vmatpush.msra.mxu0 %v544
    %549 = vmatpush.msra.mxu0 %v540
    %550 = vmatpush.msra.mxu0 %v536
    %551 = vmatpush.msra.mxu0 %v532
    %552 = vmatpush.msra.mxu0 %v528
    %553 = vmatpush.msra.mxu0 %v524
    %554 = vmatpush.msra.mxu0 %v520
    %555 = vmatpush.msra.mxu0 %v516
    %556 = vmatpush.msra.mxu0 %v512
    %557 = vmatpush.msra.mxu0 %v508
    %558 = vmatpush.msra.mxu0 %v504
    %559 = vmatpush.msra.mxu0 %v500
    %560 = vmatpush.msra.mxu0 %v496
    %561 = vmatpush.msra.mxu0 %v492
    %562 = vmatpush.msra.mxu0 %v488
    %563 = vmatpush.msra.mxu0 %v484
    %564 = vmatmul.f32.gmra.mxu0 %v483
    %v565 = vpop.f32.mrf.mxu0
    %v566 = vadd.f32 0.0, %v565
    %567 = vdwg.mxu0
    %568 = vmatpush.msra.mxu0 %v545
    %569 = vmatpush.msra.mxu0 %v541
    %570 = vmatpush.msra.mxu0 %v537
    %571 = vmatpush.msra.mxu0 %v533
    %572 = vmatpush.msra.mxu0 %v529
    %573 = vmatpush.msra.mxu0 %v525
    %574 = vmatpush.msra.mxu0 %v521
    %575 = vmatpush.msra.mxu0 %v517
    %576 = vmatpush.msra.mxu0 %v513
    %577 = vmatpush.msra.mxu0 %v509
    %578 = vmatpush.msra.mxu0 %v505
    %579 = vmatpush.msra.mxu0 %v501
    %580 = vmatpush.msra.mxu0 %v497
    %581 = vmatpush.msra.mxu0 %v493
    %582 = vmatpush.msra.mxu0 %v489
    %583 = vmatpush.msra.mxu0 %v485
    %584 = vmatmul.f32.gmra.mxu0 %v483
    %v585 = vpop.f32.mrf.mxu0
    %v586 = vadd.f32 0.0, %v585
    %587 = vdwg.mxu0
    %588 = vmatpush.msra.mxu0 %v546
    %589 = vmatpush.msra.mxu0 %v542
    %590 = vmatpush.msra.mxu0 %v538
    %591 = vmatpush.msra.mxu0 %v534
    %592 = vmatpush.msra.mxu0 %v530
    %593 = vmatpush.msra.mxu0 %v526
    %594 = vmatpush.msra.mxu0 %v522
    %595 = vmatpush.msra.mxu0 %v518
    %596 = vmatpush.msra.mxu0 %v514
    %597 = vmatpush.msra.mxu0 %v510
    %598 = vmatpush.msra.mxu0 %v506
    %599 = vmatpush.msra.mxu0 %v502
    %600 = vmatpush.msra.mxu0 %v498
    %601 = vmatpush.msra.mxu0 %v494
    %602 = vmatpush.msra.mxu0 %v490
    %603 = vmatpush.msra.mxu0 %v486
    %604 = vmatmul.f32.gmra.mxu0 %v483
    %v605 = vpop.f32.mrf.mxu0
    %v606 = vadd.f32 0.0, %v605
    %607 = vdwg.mxu0
    %608 = vmatpush.msra.mxu0 %v547
    %609 = vmatpush.msra.mxu0 %v543
    %610 = vmatpush.msra.mxu0 %v539
    %611 = vmatpush.msra.mxu0 %v535
    %612 = vmatpush.msra.mxu0 %v531
    %613 = vmatpush.msra.mxu0 %v527
    %614 = vmatpush.msra.mxu0 %v523
    %615 = vmatpush.msra.mxu0 %v519
    %616 = vmatpush.msra.mxu0 %v515
    %617 = vmatpush.msra.mxu0 %v511
    %618 = vmatpush.msra.mxu0 %v507
    %619 = vmatpush.msra.mxu0 %v503
    %620 = vmatpush.msra.mxu0 %v499
    %621 = vmatpush.msra.mxu0 %v495
    %622 = vmatpush.msra.mxu0 %v491
    %623 = vmatpush.msra.mxu0 %v487
    %624 = vmatmul.f32.gmra.mxu0 %v483
    %v625 = vpop.f32.mrf.mxu0
    %v626 = vadd.f32 0.0, %v625
    %627 = vdwg.mxu0
    %v628 = vadd.f32 %v479, %v566
    %v629 = vadd.f32 %v480, %v586
    %v630 = vadd.f32 %v481, %v606
    %v631 = vadd.f32 %v482, %v626
    %v632 = vxor.u32 %v628, 2147483648
    %v633 = vxor.u32 %v629, 2147483648
    %v634 = vxor.u32 %v630, 2147483648
    %v635 = vmul.f32 %v632, 1.442695
    %v636 = vpow.pop %v635
    %v637 = vmul.f32 %v633, 1.442695
    %v638 = vpow.pop %v637
    %v639 = vmul.f32 %v634, 1.442695
    %v640 = vpow.pop %v639
    %v641 = vadd.f32 %v636, 1.0
    %v642 = vadd.f32 %v638, 1.0
    %v643 = vadd.f32 %v640, 1.0
    %v644 = vrcp.pop %v641
    %v645 = vmul.f32 %v641, %v644
    %v646 = vsub.f32 1.0, %v645
    %v647 = vmul.f32 %v644, %v646
    %v648 = vadd.f32 %v644, %v647
    %vm649 = vweird.f32 %v641
    %vm650 = vweird.f32 %v644
    %vm651 = vmor %vm649, %vm650
    %v652 = vsel %vm651, %v644, %v648
    %v653 = vand.u32 2147483647, %v641
    %vm654 = vcmp.eq.f32.partialorder %v653, 8.507059e+37
    %v655 = vand.u32 %v641, 2147483648
    %v656 = vor.u32 1.1754944e-38, %v655
    %v657 = vsel %vm654, %v656, %v652
    %v658 = vmul.f32 1.0, %v657
    %v659 = vrcp.pop %v642
    %v660 = vmul.f32 %v642, %v659
    %v661 = vsub.f32 1.0, %v660
    %v662 = vmul.f32 %v659, %v661
    %v663 = vadd.f32 %v659, %v662
    %vm664 = vweird.f32 %v642
    %vm665 = vweird.f32 %v659
    %vm666 = vmor %vm664, %vm665
    %v667 = vsel %vm666, %v659, %v663
    %v668 = vand.u32 2147483647, %v642
    %vm669 = vcmp.eq.f32.partialorder %v668, 8.507059e+37
    %v670 = vand.u32 %v642, 2147483648
    %v671 = vor.u32 1.1754944e-38, %v670
    %v672 = vsel %vm669, %v671, %v667
    %v673 = vmul.f32 1.0, %v672
    %v674 = vrcp.pop %v643
    %v675 = vmul.f32 %v643, %v674
    %v676 = vsub.f32 1.0, %v675
    %v677 = vmul.f32 %v674, %v676
    %v678 = vadd.f32 %v674, %v677
    %vm679 = vweird.f32 %v643
    %vm680 = vweird.f32 %v674
    %vm681 = vmor %vm679, %vm680
    %v682 = vsel %vm681, %v674, %v678
    %v683 = vand.u32 2147483647, %v643
    %vm684 = vcmp.eq.f32.partialorder %v683, 8.507059e+37
    %v685 = vand.u32 %v643, 2147483648
    %v686 = vor.u32 1.1754944e-38, %v685
    %v687 = vsel %vm684, %v686, %v682
    %v688 = vmul.f32 1.0, %v687
    %v689 = vtanh.pop %v631
    %v690 = vld [vmem:[#allocation3] sm:$0xff]
    %v691 = vmul.f32 %v673, %v690
    %v692 = vmul.f32 %v658, %v689
    %v693 = vadd.f32 %v691, %v692
    %v694 = vtanh.pop %v693
    %v695 = vmul.f32 %v688, %v694
    %696 = vst [vmem:[#allocation3] sm:$0xff] %v693
    %697 = vst [vmem:[#allocation2] sm:$0xff] %v695
    %s698 = scalar_lea.vmem %s2, 16
    %699 = vst [vmem:[%s698] sm:$0xff] %v695
    %s700 = scalar_lea.vmem %s0, 96
    %v701 = vld [vmem:[%s700] sm:$0xff]
    %v702 = vld [vmem:[%s700 + $0x8] sm:$0xff]
    %v703 = vld [vmem:[%s700 + $0x10] sm:$0xff]
    %v704 = vld [vmem:[%s700 + $0x18] sm:$0xff]
    %v705 = vld [vmem:[#allocation2] sm:$0xff]
    %v706 = vld [vmem:[#allocation4] sm:$0xff]
    %v707 = vld [vmem:[#allocation4 + $0x8] sm:$0xff]
    %v708 = vld [vmem:[#allocation4 + $0x10] sm:$0xff]
    %v709 = vld [vmem:[#allocation4 + $0x18] sm:$0xff]
    %v710 = vld [vmem:[#allocation4 + $0x20] sm:$0xff]
    %v711 = vld [vmem:[#allocation4 + $0x28] sm:$0xff]
    %v712 = vld [vmem:[#allocation4 + $0x30] sm:$0xff]
    %v713 = vld [vmem:[#allocation4 + $0x38] sm:$0xff]
    %v714 = vld [vmem:[#allocation4 + $0x40] sm:$0xff]
    %v715 = vld [vmem:[#allocation4 + $0x48] sm:$0xff]
    %v716 = vld [vmem:[#allocation4 + $0x50] sm:$0xff]
    %v717 = vld [vmem:[#allocation4 + $0x58] sm:$0xff]
    %v718 = vld [vmem:[#allocation4 + $0x60] sm:$0xff]
    %v719 = vld [vmem:[#allocation4 + $0x68] sm:$0xff]
    %v720 = vld [vmem:[#allocation4 + $0x70] sm:$0xff]
    %v721 = vld [vmem:[#allocation4 + $0x78] sm:$0xff]
    %v722 = vld [vmem:[#allocation4 + $0x80] sm:$0xff]
    %v723 = vld [vmem:[#allocation4 + $0x88] sm:$0xff]
    %v724 = vld [vmem:[#allocation4 + $0x90] sm:$0xff]
    %v725 = vld [vmem:[#allocation4 + $0x98] sm:$0xff]
    %v726 = vld [vmem:[#allocation4 + $0xa0] sm:$0xff]
    %v727 = vld [vmem:[#allocation4 + $0xa8] sm:$0xff]
    %v728 = vld [vmem:[#allocation4 + $0xb0] sm:$0xff]
    %v729 = vld [vmem:[#allocation4 + $0xb8] sm:$0xff]
    %v730 = vld [vmem:[#allocation4 + $0xc0] sm:$0xff]
    %v731 = vld [vmem:[#allocation4 + $0xc8] sm:$0xff]
    %v732 = vld [vmem:[#allocation4 + $0xd0] sm:$0xff]
    %v733 = vld [vmem:[#allocation4 + $0xd8] sm:$0xff]
    %v734 = vld [vmem:[#allocation4 + $0xe0] sm:$0xff]
    %v735 = vld [vmem:[#allocation4 + $0xe8] sm:$0xff]
    %v736 = vld [vmem:[#allocation4 + $0xf0] sm:$0xff]
    %v737 = vld [vmem:[#allocation4 + $0xf8] sm:$0xff]
    %v738 = vld [vmem:[#allocation4 + $0x100] sm:$0xff]
    %v739 = vld [vmem:[#allocation4 + $0x108] sm:$0xff]
    %v740 = vld [vmem:[#allocation4 + $0x110] sm:$0xff]
    %v741 = vld [vmem:[#allocation4 + $0x118] sm:$0xff]
    %v742 = vld [vmem:[#allocation4 + $0x120] sm:$0xff]
    %v743 = vld [vmem:[#allocation4 + $0x128] sm:$0xff]
    %v744 = vld [vmem:[#allocation4 + $0x130] sm:$0xff]
    %v745 = vld [vmem:[#allocation4 + $0x138] sm:$0xff]
    %v746 = vld [vmem:[#allocation4 + $0x140] sm:$0xff]
    %v747 = vld [vmem:[#allocation4 + $0x148] sm:$0xff]
    %v748 = vld [vmem:[#allocation4 + $0x150] sm:$0xff]
    %v749 = vld [vmem:[#allocation4 + $0x158] sm:$0xff]
    %v750 = vld [vmem:[#allocation4 + $0x160] sm:$0xff]
    %v751 = vld [vmem:[#allocation4 + $0x168] sm:$0xff]
    %v752 = vld [vmem:[#allocation4 + $0x170] sm:$0xff]
    %v753 = vld [vmem:[#allocation4 + $0x178] sm:$0xff]
    %v754 = vld [vmem:[#allocation4 + $0x180] sm:$0xff]
    %v755 = vld [vmem:[#allocation4 + $0x188] sm:$0xff]
    %v756 = vld [vmem:[#allocation4 + $0x190] sm:$0xff]
    %v757 = vld [vmem:[#allocation4 + $0x198] sm:$0xff]
    %v758 = vld [vmem:[#allocation4 + $0x1a0] sm:$0xff]
    %v759 = vld [vmem:[#allocation4 + $0x1a8] sm:$0xff]
    %v760 = vld [vmem:[#allocation4 + $0x1b0] sm:$0xff]
    %v761 = vld [vmem:[#allocation4 + $0x1b8] sm:$0xff]
    %v762 = vld [vmem:[#allocation4 + $0x1c0] sm:$0xff]
    %v763 = vld [vmem:[#allocation4 + $0x1c8] sm:$0xff]
    %v764 = vld [vmem:[#allocation4 + $0x1d0] sm:$0xff]
    %v765 = vld [vmem:[#allocation4 + $0x1d8] sm:$0xff]
    %v766 = vld [vmem:[#allocation4 + $0x1e0] sm:$0xff]
    %v767 = vld [vmem:[#allocation4 + $0x1e8] sm:$0xff]
    %v768 = vld [vmem:[#allocation4 + $0x1f0] sm:$0xff]
    %v769 = vld [vmem:[#allocation4 + $0x1f8] sm:$0xff]
    %770 = vmatpush.msra.mxu0 %v766
    %771 = vmatpush.msra.mxu0 %v762
    %772 = vmatpush.msra.mxu0 %v758
    %773 = vmatpush.msra.mxu0 %v754
    %774 = vmatpush.msra.mxu0 %v750
    %775 = vmatpush.msra.mxu0 %v746
    %776 = vmatpush.msra.mxu0 %v742
    %777 = vmatpush.msra.mxu0 %v738
    %778 = vmatpush.msra.mxu0 %v734
    %779 = vmatpush.msra.mxu0 %v730
    %780 = vmatpush.msra.mxu0 %v726
    %781 = vmatpush.msra.mxu0 %v722
    %782 = vmatpush.msra.mxu0 %v718
    %783 = vmatpush.msra.mxu0 %v714
    %784 = vmatpush.msra.mxu0 %v710
    %785 = vmatpush.msra.mxu0 %v706
    %786 = vmatmul.f32.gmra.mxu0 %v705
    %v787 = vpop.f32.mrf.mxu0
    %v788 = vadd.f32 0.0, %v787
    %789 = vdwg.mxu0
    %790 = vmatpush.msra.mxu0 %v767
    %791 = vmatpush.msra.mxu0 %v763
    %792 = vmatpush.msra.mxu0 %v759
    %793 = vmatpush.msra.mxu0 %v755
    %794 = vmatpush.msra.mxu0 %v751
    %795 = vmatpush.msra.mxu0 %v747
    %796 = vmatpush.msra.mxu0 %v743
    %797 = vmatpush.msra.mxu0 %v739
    %798 = vmatpush.msra.mxu0 %v735
    %799 = vmatpush.msra.mxu0 %v731
    %800 = vmatpush.msra.mxu0 %v727
    %801 = vmatpush.msra.mxu0 %v723
    %802 = vmatpush.msra.mxu0 %v719
    %803 = vmatpush.msra.mxu0 %v715
    %804 = vmatpush.msra.mxu0 %v711
    %805 = vmatpush.msra.mxu0 %v707
    %806 = vmatmul.f32.gmra.mxu0 %v705
    %v807 = vpop.f32.mrf.mxu0
    %v808 = vadd.f32 0.0, %v807
    %809 = vdwg.mxu0
    %810 = vmatpush.msra.mxu0 %v768
    %811 = vmatpush.msra.mxu0 %v764
    %812 = vmatpush.msra.mxu0 %v760
    %813 = vmatpush.msra.mxu0 %v756
    %814 = vmatpush.msra.mxu0 %v752
    %815 = vmatpush.msra.mxu0 %v748
    %816 = vmatpush.msra.mxu0 %v744
    %817 = vmatpush.msra.mxu0 %v740
    %818 = vmatpush.msra.mxu0 %v736
    %819 = vmatpush.msra.mxu0 %v732
    %820 = vmatpush.msra.mxu0 %v728
    %821 = vmatpush.msra.mxu0 %v724
    %822 = vmatpush.msra.mxu0 %v720
    %823 = vmatpush.msra.mxu0 %v716
    %824 = vmatpush.msra.mxu0 %v712
    %825 = vmatpush.msra.mxu0 %v708
    %826 = vmatmul.f32.gmra.mxu0 %v705
    %v827 = vpop.f32.mrf.mxu0
    %v828 = vadd.f32 0.0, %v827
    %829 = vdwg.mxu0
    %830 = vmatpush.msra.mxu0 %v769
    %831 = vmatpush.msra.mxu0 %v765
    %832 = vmatpush.msra.mxu0 %v761
    %833 = vmatpush.msra.mxu0 %v757
    %834 = vmatpush.msra.mxu0 %v753
    %835 = vmatpush.msra.mxu0 %v749
    %836 = vmatpush.msra.mxu0 %v745
    %837 = vmatpush.msra.mxu0 %v741
    %838 = vmatpush.msra.mxu0 %v737
    %839 = vmatpush.msra.mxu0 %v733
    %840 = vmatpush.msra.mxu0 %v729
    %841 = vmatpush.msra.mxu0 %v725
    %842 = vmatpush.msra.mxu0 %v721
    %843 = vmatpush.msra.mxu0 %v717
    %844 = vmatpush.msra.mxu0 %v713
    %845 = vmatpush.msra.mxu0 %v709
    %846 = vmatmul.f32.gmra.mxu0 %v705
    %v847 = vpop.f32.mrf.mxu0
    %v848 = vadd.f32 0.0, %v847
    %849 = vdwg.mxu0
    %v850 = vadd.f32 %v701, %v788
    %v851 = vadd.f32 %v702, %v808
    %v852 = vadd.f32 %v703, %v828
    %v853 = vadd.f32 %v704, %v848
    %v854 = vxor.u32 %v850, 2147483648
    %v855 = vxor.u32 %v851, 2147483648
    %v856 = vxor.u32 %v852, 2147483648
    %v857 = vmul.f32 %v854, 1.442695
    %v858 = vpow.pop %v857
    %v859 = vmul.f32 %v855, 1.442695
    %v860 = vpow.pop %v859
    %v861 = vmul.f32 %v856, 1.442695
    %v862 = vpow.pop %v861
    %v863 = vadd.f32 %v858, 1.0
    %v864 = vadd.f32 %v860, 1.0
    %v865 = vadd.f32 %v862, 1.0
    %v866 = vrcp.pop %v863
    %v867 = vmul.f32 %v863, %v866
    %v868 = vsub.f32 1.0, %v867
    %v869 = vmul.f32 %v866, %v868
    %v870 = vadd.f32 %v866, %v869
    %vm871 = vweird.f32 %v863
    %vm872 = vweird.f32 %v866
    %vm873 = vmor %vm871, %vm872
    %v874 = vsel %vm873, %v866, %v870
    %v875 = vand.u32 2147483647, %v863
    %vm876 = vcmp.eq.f32.partialorder %v875, 8.507059e+37
    %v877 = vand.u32 %v863, 2147483648
    %v878 = vor.u32 1.1754944e-38, %v877
    %v879 = vsel %vm876, %v878, %v874
    %v880 = vmul.f32 1.0, %v879
    %v881 = vrcp.pop %v864
    %v882 = vmul.f32 %v864, %v881
    %v883 = vsub.f32 1.0, %v882
    %v884 = vmul.f32 %v881, %v883
    %v885 = vadd.f32 %v881, %v884
    %vm886 = vweird.f32 %v864
    %vm887 = vweird.f32 %v881
    %vm888 = vmor %vm886, %vm887
    %v889 = vsel %vm888, %v881, %v885
    %v890 = vand.u32 2147483647, %v864
    %vm891 = vcmp.eq.f32.partialorder %v890, 8.507059e+37
    %v892 = vand.u32 %v864, 2147483648
    %v893 = vor.u32 1.1754944e-38, %v892
    %v894 = vsel %vm891, %v893, %v889
    %v895 = vmul.f32 1.0, %v894
    %v896 = vrcp.pop %v865
    %v897 = vmul.f32 %v865, %v896
    %v898 = vsub.f32 1.0, %v897
    %v899 = vmul.f32 %v896, %v898
    %v900 = vadd.f32 %v896, %v899
    %vm901 = vweird.f32 %v865
    %vm902 = vweird.f32 %v896
    %vm903 = vmor %vm901, %vm902
    %v904 = vsel %vm903, %v896, %v900
    %v905 = vand.u32 2147483647, %v865
    %vm906 = vcmp.eq.f32.partialorder %v905, 8.507059e+37
    %v907 = vand.u32 %v865, 2147483648
    %v908 = vor.u32 1.1754944e-38, %v907
    %v909 = vsel %vm906, %v908, %v904
    %v910 = vmul.f32 1.0, %v909
    %v911 = vtanh.pop %v853
    %v912 = vld [vmem:[#allocation3] sm:$0xff]
    %v913 = vmul.f32 %v895, %v912
    %v914 = vmul.f32 %v880, %v911
    %v915 = vadd.f32 %v913, %v914
    %v916 = vtanh.pop %v915
    %v917 = vmul.f32 %v910, %v916
    %918 = vst [vmem:[#allocation3] sm:$0xff] %v915
    %919 = vst [vmem:[#allocation2] sm:$0xff] %v917
    %s920 = scalar_lea.vmem %s2, 24
    %921 = vst [vmem:[%s920] sm:$0xff] %v917
    %s922 = scalar_lea.vmem %s0, 128
    %v923 = vld [vmem:[%s922] sm:$0xff]
    %v924 = vld [vmem:[%s922 + $0x8] sm:$0xff]
    %v925 = vld [vmem:[%s922 + $0x10] sm:$0xff]
    %v926 = vld [vmem:[%s922 + $0x18] sm:$0xff]
    %v927 = vld [vmem:[#allocation2] sm:$0xff]
    %v928 = vld [vmem:[#allocation4] sm:$0xff]
    %v929 = vld [vmem:[#allocation4 + $0x8] sm:$0xff]
    %v930 = vld [vmem:[#allocation4 + $0x10] sm:$0xff]
    %v931 = vld [vmem:[#allocation4 + $0x18] sm:$0xff]
    %v932 = vld [vmem:[#allocation4 + $0x20] sm:$0xff]
    %v933 = vld [vmem:[#allocation4 + $0x28] sm:$0xff]
    %v934 = vld [vmem:[#allocation4 + $0x30] sm:$0xff]
    %v935 = vld [vmem:[#allocation4 + $0x38] sm:$0xff]
    %v936 = vld [vmem:[#allocation4 + $0x40] sm:$0xff]
    %v937 = vld [vmem:[#allocation4 + $0x48] sm:$0xff]
    %v938 = vld [vmem:[#allocation4 + $0x50] sm:$0xff]
    %v939 = vld [vmem:[#allocation4 + $0x58] sm:$0xff]
    %v940 = vld [vmem:[#allocation4 + $0x60] sm:$0xff]
    %v941 = vld [vmem:[#allocation4 + $0x68] sm:$0xff]
    %v942 = vld [vmem:[#allocation4 + $0x70] sm:$0xff]
    %v943 = vld [vmem:[#allocation4 + $0x78] sm:$0xff]
    %v944 = vld [vmem:[#allocation4 + $0x80] sm:$0xff]
    %v945 = vld [vmem:[#allocation4 + $0x88] sm:$0xff]
    %v946 = vld [vmem:[#allocation4 + $0x90] sm:$0xff]
    %v947 = vld [vmem:[#allocation4 + $0x98] sm:$0xff]
    %v948 = vld [vmem:[#allocation4 + $0xa0] sm:$0xff]
    %v949 = vld [vmem:[#allocation4 + $0xa8] sm:$0xff]
    %v950 = vld [vmem:[#allocation4 + $0xb0] sm:$0xff]
    %v951 = vld [vmem:[#allocation4 + $0xb8] sm:$0xff]
    %v952 = vld [vmem:[#allocation4 + $0xc0] sm:$0xff]
    %v953 = vld [vmem:[#allocation4 + $0xc8] sm:$0xff]
    %v954 = vld [vmem:[#allocation4 + $0xd0] sm:$0xff]
    %v955 = vld [vmem:[#allocation4 + $0xd8] sm:$0xff]
    %v956 = vld [vmem:[#allocation4 + $0xe0] sm:$0xff]
    %v957 = vld [vmem:[#allocation4 + $0xe8] sm:$0xff]
    %v958 = vld [vmem:[#allocation4 + $0xf0] sm:$0xff]
    %v959 = vld [vmem:[#allocation4 + $0xf8] sm:$0xff]
    %v960 = vld [vmem:[#allocation4 + $0x100] sm:$0xff]
    %v961 = vld [vmem:[#allocation4 + $0x108] sm:$0xff]
    %v962 = vld [vmem:[#allocation4 + $0x110] sm:$0xff]
    %v963 = vld [vmem:[#allocation4 + $0x118] sm:$0xff]
    %v964 = vld [vmem:[#allocation4 + $0x120] sm:$0xff]
    %v965 = vld [vmem:[#allocation4 + $0x128] sm:$0xff]
    %v966 = vld [vmem:[#allocation4 + $0x130] sm:$0xff]
    %v967 = vld [vmem:[#allocation4 + $0x138] sm:$0xff]
    %v968 = vld [vmem:[#allocation4 + $0x140] sm:$0xff]
    %v969 = vld [vmem:[#allocation4 + $0x148] sm:$0xff]
    %v970 = vld [vmem:[#allocation4 + $0x150] sm:$0xff]
    %v971 = vld [vmem:[#allocation4 + $0x158] sm:$0xff]
    %v972 = vld [vmem:[#allocation4 + $0x160] sm:$0xff]
    %v973 = vld [vmem:[#allocation4 + $0x168] sm:$0xff]
    %v974 = vld [vmem:[#allocation4 + $0x170] sm:$0xff]
    %v975 = vld [vmem:[#allocation4 + $0x178] sm:$0xff]
    %v976 = vld [vmem:[#allocation4 + $0x180] sm:$0xff]
    %v977 = vld [vmem:[#allocation4 + $0x188] sm:$0xff]
    %v978 = vld [vmem:[#allocation4 + $0x190] sm:$0xff]
    %v979 = vld [vmem:[#allocation4 + $0x198] sm:$0xff]
    %v980 = vld [vmem:[#allocation4 + $0x1a0] sm:$0xff]
    %v981 = vld [vmem:[#allocation4 + $0x1a8] sm:$0xff]
    %v982 = vld [vmem:[#allocation4 + $0x1b0] sm:$0xff]
    %v983 = vld [vmem:[#allocation4 + $0x1b8] sm:$0xff]
    %v984 = vld [vmem:[#allocation4 + $0x1c0] sm:$0xff]
    %v985 = vld [vmem:[#allocation4 + $0x1c8] sm:$0xff]
    %v986 = vld [vmem:[#allocation4 + $0x1d0] sm:$0xff]
    %v987 = vld [vmem:[#allocation4 + $0x1d8] sm:$0xff]
    %v988 = vld [vmem:[#allocation4 + $0x1e0] sm:$0xff]
    %v989 = vld [vmem:[#allocation4 + $0x1e8] sm:$0xff]
    %v990 = vld [vmem:[#allocation4 + $0x1f0] sm:$0xff]
    %v991 = vld [vmem:[#allocation4 + $0x1f8] sm:$0xff]
    %992 = vmatpush.msra.mxu0 %v988
    %993 = vmatpush.msra.mxu0 %v984
    %994 = vmatpush.msra.mxu0 %v980
    %995 = vmatpush.msra.mxu0 %v976
    %996 = vmatpush.msra.mxu0 %v972
    %997 = vmatpush.msra.mxu0 %v968
    %998 = vmatpush.msra.mxu0 %v964
    %999 = vmatpush.msra.mxu0 %v960
    %1000 = vmatpush.msra.mxu0 %v956
    %1001 = vmatpush.msra.mxu0 %v952
    %1002 = vmatpush.msra.mxu0 %v948
    %1003 = vmatpush.msra.mxu0 %v944
    %1004 = vmatpush.msra.mxu0 %v940
    %1005 = vmatpush.msra.mxu0 %v936
    %1006 = vmatpush.msra.mxu0 %v932
    %1007 = vmatpush.msra.mxu0 %v928
    %1008 = vmatmul.f32.gmra.mxu0 %v927
    %v1009 = vpop.f32.mrf.mxu0
    %v1010 = vadd.f32 0.0, %v1009
    %1011 = vdwg.mxu0
    %1012 = vmatpush.msra.mxu0 %v989
    %1013 = vmatpush.msra.mxu0 %v985
    %1014 = vmatpush.msra.mxu0 %v981
    %1015 = vmatpush.msra.mxu0 %v977
    %1016 = vmatpush.msra.mxu0 %v973
    %1017 = vmatpush.msra.mxu0 %v969
    %1018 = vmatpush.msra.mxu0 %v965
    %1019 = vmatpush.msra.mxu0 %v961
    %1020 = vmatpush.msra.mxu0 %v957
    %1021 = vmatpush.msra.mxu0 %v953
    %1022 = vmatpush.msra.mxu0 %v949
    %1023 = vmatpush.msra.mxu0 %v945
    %1024 = vmatpush.msra.mxu0 %v941
    %1025 = vmatpush.msra.mxu0 %v937
    %1026 = vmatpush.msra.mxu0 %v933
    %1027 = vmatpush.msra.mxu0 %v929
    %1028 = vmatmul.f32.gmra.mxu0 %v927
    %v1029 = vpop.f32.mrf.mxu0
    %v1030 = vadd.f32 0.0, %v1029
    %1031 = vdwg.mxu0
    %1032 = vmatpush.msra.mxu0 %v990
    %1033 = vmatpush.msra.mxu0 %v986
    %1034 = vmatpush.msra.mxu0 %v982
    %1035 = vmatpush.msra.mxu0 %v978
    %1036 = vmatpush.msra.mxu0 %v974
    %1037 = vmatpush.msra.mxu0 %v970
    %1038 = vmatpush.msra.mxu0 %v966
    %1039 = vmatpush.msra.mxu0 %v962
    %1040 = vmatpush.msra.mxu0 %v958
    %1041 = vmatpush.msra.mxu0 %v954
    %1042 = vmatpush.msra.mxu0 %v950
    %1043 = vmatpush.msra.mxu0 %v946
    %1044 = vmatpush.msra.mxu0 %v942
    %1045 = vmatpush.msra.mxu0 %v938
    %1046 = vmatpush.msra.mxu0 %v934
    %1047 = vmatpush.msra.mxu0 %v930
    %1048 = vmatmul.f32.gmra.mxu0 %v927
    %v1049 = vpop.f32.mrf.mxu0
    %v1050 = vadd.f32 0.0, %v1049
    %1051 = vdwg.mxu0
    %1052 = vmatpush.msra.mxu0 %v991
    %1053 = vmatpush.msra.mxu0 %v987
    %1054 = vmatpush.msra.mxu0 %v983
    %1055 = vmatpush.msra.mxu0 %v979
    %1056 = vmatpush.msra.mxu0 %v975
    %1057 = vmatpush.msra.mxu0 %v971
    %1058 = vmatpush.msra.mxu0 %v967
    %1059 = vmatpush.msra.mxu0 %v963
    %1060 = vmatpush.msra.mxu0 %v959
    %1061 = vmatpush.msra.mxu0 %v955
    %1062 = vmatpush.msra.mxu0 %v951
    %1063 = vmatpush.msra.mxu0 %v947
    %1064 = vmatpush.msra.mxu0 %v943
    %1065 = vmatpush.msra.mxu0 %v939
    %1066 = vmatpush.msra.mxu0 %v935
    %1067 = vmatpush.msra.mxu0 %v931
    %1068 = vmatmul.f32.gmra.mxu0 %v927
    %v1069 = vpop.f32.mrf.mxu0
    %v1070 = vadd.f32 0.0, %v1069
    %1071 = vdwg.mxu0
    %v1072 = vadd.f32 %v923, %v1010
    %v1073 = vadd.f32 %v924, %v1030
    %v1074 = vadd.f32 %v925, %v1050
    %v1075 = vadd.f32 %v926, %v1070
    %v1076 = vxor.u32 %v1072, 2147483648
    %v1077 = vxor.u32 %v1073, 2147483648
    %v1078 = vxor.u32 %v1074, 2147483648
    %v1079 = vmul.f32 %v1076, 1.442695
    %v1080 = vpow.pop %v1079
    %v1081 = vmul.f32 %v1077, 1.442695
    %v1082 = vpow.pop %v1081
    %v1083 = vmul.f32 %v1078, 1.442695
    %v1084 = vpow.pop %v1083
    %v1085 = vadd.f32 %v1080, 1.0
    %v1086 = vadd.f32 %v1082, 1.0
    %v1087 = vadd.f32 %v1084, 1.0
    %v1088 = vrcp.pop %v1085
    %v1089 = vmul.f32 %v1085, %v1088
    %v1090 = vsub.f32 1.0, %v1089
    %v1091 = vmul.f32 %v1088, %v1090
    %v1092 = vadd.f32 %v1088, %v1091
    %vm1093 = vweird.f32 %v1085
    %vm1094 = vweird.f32 %v1088
    %vm1095 = vmor %vm1093, %vm1094
    %v1096 = vsel %vm1095, %v1088, %v1092
    %v1097 = vand.u32 2147483647, %v1085
    %vm1098 = vcmp.eq.f32.partialorder %v1097, 8.507059e+37
    %v1099 = vand.u32 %v1085, 2147483648
    %v1100 = vor.u32 1.1754944e-38, %v1099
    %v1101 = vsel %vm1098, %v1100, %v1096
    %v1102 = vmul.f32 1.0, %v1101
    %v1103 = vrcp.pop %v1086
    %v1104 = vmul.f32 %v1086, %v1103
    %v1105 = vsub.f32 1.0, %v1104
    %v1106 = vmul.f32 %v1103, %v1105
    %v1107 = vadd.f32 %v1103, %v1106
    %vm1108 = vweird.f32 %v1086
    %vm1109 = vweird.f32 %v1103
    %vm1110 = vmor %vm1108, %vm1109
    %v1111 = vsel %vm1110, %v1103, %v1107
    %v1112 = vand.u32 2147483647, %v1086
    %vm1113 = vcmp.eq.f32.partialorder %v1112, 8.507059e+37
    %v1114 = vand.u32 %v1086, 2147483648
    %v1115 = vor.u32 1.1754944e-38, %v1114
    %v1116 = vsel %vm1113, %v1115, %v1111
    %v1117 = vmul.f32 1.0, %v1116
    %v1118 = vrcp.pop %v1087
    %v1119 = vmul.f32 %v1087, %v1118
    %v1120 = vsub.f32 1.0, %v1119
    %v1121 = vmul.f32 %v1118, %v1120
    %v1122 = vadd.f32 %v1118, %v1121
    %vm1123 = vweird.f32 %v1087
    %vm1124 = vweird.f32 %v1118
    %vm1125 = vmor %vm1123, %vm1124
    %v1126 = vsel %vm1125, %v1118, %v1122
    %v1127 = vand.u32 2147483647, %v1087
    %vm1128 = vcmp.eq.f32.partialorder %v1127, 8.507059e+37
    %v1129 = vand.u32 %v1087, 2147483648
    %v1130 = vor.u32 1.1754944e-38, %v1129
    %v1131 = vsel %vm1128, %v1130, %v1126
    %v1132 = vmul.f32 1.0, %v1131
    %v1133 = vtanh.pop %v1075
    %v1134 = vld [vmem:[#allocation3] sm:$0xff]
    %v1135 = vmul.f32 %v1117, %v1134
    %v1136 = vmul.f32 %v1102, %v1133
    %v1137 = vadd.f32 %v1135, %v1136
    %v1138 = vtanh.pop %v1137
    %v1139 = vmul.f32 %v1132, %v1138
    %1140 = vst [vmem:[#allocation3] sm:$0xff] %v1137
    %1141 = vst [vmem:[#allocation2] sm:$0xff] %v1139
    %s1142 = scalar_lea.vmem %s2, 32
    %1143 = vst [vmem:[%s1142] sm:$0xff] %v1139
    %s1144 = scalar_lea.vmem %s0, 160
    %v1145 = vld [vmem:[%s1144] sm:$0xff]
    %v1146 = vld [vmem:[%s1144 + $0x8] sm:$0xff]
    %v1147 = vld [vmem:[%s1144 + $0x10] sm:$0xff]
    %v1148 = vld [vmem:[%s1144 + $0x18] sm:$0xff]
    %v1149 = vld [vmem:[#allocation2] sm:$0xff]
    %v1150 = vld [vmem:[#allocation4] sm:$0xff]
    %v1151 = vld [vmem:[#allocation4 + $0x8] sm:$0xff]
    %v1152 = vld [vmem:[#allocation4 + $0x10] sm:$0xff]
    %v1153 = vld [vmem:[#allocation4 + $0x18] sm:$0xff]
    %v1154 = vld [vmem:[#allocation4 + $0x20] sm:$0xff]
    %v1155 = vld [vmem:[#allocation4 + $0x28] sm:$0xff]
    %v1156 = vld [vmem:[#allocation4 + $0x30] sm:$0xff]
    %v1157 = vld [vmem:[#allocation4 + $0x38] sm:$0xff]
    %v1158 = vld [vmem:[#allocation4 + $0x40] sm:$0xff]
    %v1159 = vld [vmem:[#allocation4 + $0x48] sm:$0xff]
    %v1160 = vld [vmem:[#allocation4 + $0x50] sm:$0xff]
    %v1161 = vld [vmem:[#allocation4 + $0x58] sm:$0xff]
    %v1162 = vld [vmem:[#allocation4 + $0x60] sm:$0xff]
    %v1163 = vld [vmem:[#allocation4 + $0x68] sm:$0xff]
    %v1164 = vld [vmem:[#allocation4 + $0x70] sm:$0xff]
    %v1165 = vld [vmem:[#allocation4 + $0x78] sm:$0xff]
    %v1166 = vld [vmem:[#allocation4 + $0x80] sm:$0xff]
    %v1167 = vld [vmem:[#allocation4 + $0x88] sm:$0xff]
    %v1168 = vld [vmem:[#allocation4 + $0x90] sm:$0xff]
    %v1169 = vld [vmem:[#allocation4 + $0x98] sm:$0xff]
    %v1170 = vld [vmem:[#allocation4 + $0xa0] sm:$0xff]
    %v1171 = vld [vmem:[#allocation4 + $0xa8] sm:$0xff]
    %v1172 = vld [vmem:[#allocation4 + $0xb0] sm:$0xff]
    %v1173 = vld [vmem:[#allocation4 + $0xb8] sm:$0xff]
    %v1174 = vld [vmem:[#allocation4 + $0xc0] sm:$0xff]
    %v1175 = vld [vmem:[#allocation4 + $0xc8] sm:$0xff]
    %v1176 = vld [vmem:[#allocation4 + $0xd0] sm:$0xff]
    %v1177 = vld [vmem:[#allocation4 + $0xd8] sm:$0xff]
    %v1178 = vld [vmem:[#allocation4 + $0xe0] sm:$0xff]
    %v1179 = vld [vmem:[#allocation4 + $0xe8] sm:$0xff]
    %v1180 = vld [vmem:[#allocation4 + $0xf0] sm:$0xff]
    %v1181 = vld [vmem:[#allocation4 + $0xf8] sm:$0xff]
    %v1182 = vld [vmem:[#allocation4 + $0x100] sm:$0xff]
    %v1183 = vld [vmem:[#allocation4 + $0x108] sm:$0xff]
    %v1184 = vld [vmem:[#allocation4 + $0x110] sm:$0xff]
    %v1185 = vld [vmem:[#allocation4 + $0x118] sm:$0xff]
    %v1186 = vld [vmem:[#allocation4 + $0x120] sm:$0xff]
    %v1187 = vld [vmem:[#allocation4 + $0x128] sm:$0xff]
    %v1188 = vld [vmem:[#allocation4 + $0x130] sm:$0xff]
    %v1189 = vld [vmem:[#allocation4 + $0x138] sm:$0xff]
    %v1190 = vld [vmem:[#allocation4 + $0x140] sm:$0xff]
    %v1191 = vld [vmem:[#allocation4 + $0x148] sm:$0xff]
    %v1192 = vld [vmem:[#allocation4 + $0x150] sm:$0xff]
    %v1193 = vld [vmem:[#allocation4 + $0x158] sm:$0xff]
    %v1194 = vld [vmem:[#allocation4 + $0x160] sm:$0xff]
    %v1195 = vld [vmem:[#allocation4 + $0x168] sm:$0xff]
    %v1196 = vld [vmem:[#allocation4 + $0x170] sm:$0xff]
    %v1197 = vld [vmem:[#allocation4 + $0x178] sm:$0xff]
    %v1198 = vld [vmem:[#allocation4 + $0x180] sm:$0xff]
    %v1199 = vld [vmem:[#allocation4 + $0x188] sm:$0xff]
    %v1200 = vld [vmem:[#allocation4 + $0x190] sm:$0xff]
    %v1201 = vld [vmem:[#allocation4 + $0x198] sm:$0xff]
    %v1202 = vld [vmem:[#allocation4 + $0x1a0] sm:$0xff]
    %v1203 = vld [vmem:[#allocation4 + $0x1a8] sm:$0xff]
    %v1204 = vld [vmem:[#allocation4 + $0x1b0] sm:$0xff]
    %v1205 = vld [vmem:[#allocation4 + $0x1b8] sm:$0xff]
    %v1206 = vld [vmem:[#allocation4 + $0x1c0] sm:$0xff]
    %v1207 = vld [vmem:[#allocation4 + $0x1c8] sm:$0xff]
    %v1208 = vld [vmem:[#allocation4 + $0x1d0] sm:$0xff]
    %v1209 = vld [vmem:[#allocation4 + $0x1d8] sm:$0xff]
    %v1210 = vld [vmem:[#allocation4 + $0x1e0] sm:$0xff]
    %v1211 = vld [vmem:[#allocation4 + $0x1e8] sm:$0xff]
    %v1212 = vld [vmem:[#allocation4 + $0x1f0] sm:$0xff]
    %v1213 = vld [vmem:[#allocation4 + $0x1f8] sm:$0xff]
    %1214 = vmatpush.msra.mxu0 %v1210
    %1215 = vmatpush.msra.mxu0 %v1206
    %1216 = vmatpush.msra.mxu0 %v1202
    %1217 = vmatpush.msra.mxu0 %v1198
    %1218 = vmatpush.msra.mxu0 %v1194
    %1219 = vmatpush.msra.mxu0 %v1190
    %1220 = vmatpush.msra.mxu0 %v1186
    %1221 = vmatpush.msra.mxu0 %v1182
    %1222 = vmatpush.msra.mxu0 %v1178
    %1223 = vmatpush.msra.mxu0 %v1174
    %1224 = vmatpush.msra.mxu0 %v1170
    %1225 = vmatpush.msra.mxu0 %v1166
    %1226 = vmatpush.msra.mxu0 %v1162
    %1227 = vmatpush.msra.mxu0 %v1158
    %1228 = vmatpush.msra.mxu0 %v1154
    %1229 = vmatpush.msra.mxu0 %v1150
    %1230 = vmatmul.f32.gmra.mxu0 %v1149
    %v1231 = vpop.f32.mrf.mxu0
    %v1232 = vadd.f32 0.0, %v1231
    %1233 = vdwg.mxu0
    %1234 = vmatpush.msra.mxu0 %v1211
    %1235 = vmatpush.msra.mxu0 %v1207
    %1236 = vmatpush.msra.mxu0 %v1203
    %1237 = vmatpush.msra.mxu0 %v1199
    %1238 = vmatpush.msra.mxu0 %v1195
    %1239 = vmatpush.msra.mxu0 %v1191
    %1240 = vmatpush.msra.mxu0 %v1187
    %1241 = vmatpush.msra.mxu0 %v1183
    %1242 = vmatpush.msra.mxu0 %v1179
    %1243 = vmatpush.msra.mxu0 %v1175
    %1244 = vmatpush.msra.mxu0 %v1171
    %1245 = vmatpush.msra.mxu0 %v1167
    %1246 = vmatpush.msra.mxu0 %v1163
    %1247 = vmatpush.msra.mxu0 %v1159
    %1248 = vmatpush.msra.mxu0 %v1155
    %1249 = vmatpush.msra.mxu0 %v1151
    %1250 = vmatmul.f32.gmra.mxu0 %v1149
    %v1251 = vpop.f32.mrf.mxu0
    %v1252 = vadd.f32 0.0, %v1251
    %1253 = vdwg.mxu0
    %1254 = vmatpush.msra.mxu0 %v1212
    %1255 = vmatpush.msra.mxu0 %v1208
    %1256 = vmatpush.msra.mxu0 %v1204
    %1257 = vmatpush.msra.mxu0 %v1200
    %1258 = vmatpush.msra.mxu0 %v1196
    %1259 = vmatpush.msra.mxu0 %v1192
    %1260 = vmatpush.msra.mxu0 %v1188
    %1261 = vmatpush.msra.mxu0 %v1184
    %1262 = vmatpush.msra.mxu0 %v1180
    %1263 = vmatpush.msra.mxu0 %v1176
    %1264 = vmatpush.msra.mxu0 %v1172
    %1265 = vmatpush.msra.mxu0 %v1168
    %1266 = vmatpush.msra.mxu0 %v1164
    %1267 = vmatpush.msra.mxu0 %v1160
    %1268 = vmatpush.msra.mxu0 %v1156
    %1269 = vmatpush.msra.mxu0 %v1152
    %1270 = vmatmul.f32.gmra.mxu0 %v1149
    %v1271 = vpop.f32.mrf.mxu0
    %v1272 = vadd.f32 0.0, %v1271
    %1273 = vdwg.mxu0
    %1274 = vmatpush.msra.mxu0 %v1213
    %1275 = vmatpush.msra.mxu0 %v1209
    %1276 = vmatpush.msra.mxu0 %v1205
    %1277 = vmatpush.msra.mxu0 %v1201
    %1278 = vmatpush.msra.mxu0 %v1197
    %1279 = vmatpush.msra.mxu0 %v1193
    %1280 = vmatpush.msra.mxu0 %v1189
    %1281 = vmatpush.msra.mxu0 %v1185
    %1282 = vmatpush.msra.mxu0 %v1181
    %1283 = vmatpush.msra.mxu0 %v1177
    %1284 = vmatpush.msra.mxu0 %v1173
    %1285 = vmatpush.msra.mxu0 %v1169
    %1286 = vmatpush.msra.mxu0 %v1165
    %1287 = vmatpush.msra.mxu0 %v1161
    %1288 = vmatpush.msra.mxu0 %v1157
    %1289 = vmatpush.msra.mxu0 %v1153
    %1290 = vmatmul.f32.gmra.mxu0 %v1149
    %v1291 = vpop.f32.mrf.mxu0
    %v1292 = vadd.f32 0.0, %v1291
    %1293 = vdwg.mxu0
    %v1294 = vadd.f32 %v1145, %v1232
    %v1295 = vadd.f32 %v1146, %v1252
    %v1296 = vadd.f32 %v1147, %v1272
    %v1297 = vadd.f32 %v1148, %v1292
    %v1298 = vxor.u32 %v1294, 2147483648
    %v1299 = vxor.u32 %v1295, 2147483648
    %v1300 = vxor.u32 %v1296, 2147483648
    %v1301 = vmul.f32 %v1298, 1.442695
    %v1302 = vpow.pop %v1301
    %v1303 = vmul.f32 %v1299, 1.442695
    %v1304 = vpow.pop %v1303
    %v1305 = vmul.f32 %v1300, 1.442695
    %v1306 = vpow.pop %v1305
    %v1307 = vadd.f32 %v1302, 1.0
    %v1308 = vadd.f32 %v1304, 1.0
    %v1309 = vadd.f32 %v1306, 1.0
    %v1310 = vrcp.pop %v1307
    %v1311 = vmul.f32 %v1307, %v1310
    %v1312 = vsub.f32 1.0, %v1311
    %v1313 = vmul.f32 %v1310, %v1312
    %v1314 = vadd.f32 %v1310, %v1313
    %vm1315 = vweird.f32 %v1307
    %vm1316 = vweird.f32 %v1310
    %vm1317 = vmor %vm1315, %vm1316
    %v1318 = vsel %vm1317, %v1310, %v1314
    %v1319 = vand.u32 2147483647, %v1307
    %vm1320 = vcmp.eq.f32.partialorder %v1319, 8.507059e+37
    %v1321 = vand.u32 %v1307, 2147483648
    %v1322 = vor.u32 1.1754944e-38, %v1321
    %v1323 = vsel %vm1320, %v1322, %v1318
    %v1324 = vmul.f32 1.0, %v1323
    %v1325 = vrcp.pop %v1308
    %v1326 = vmul.f32 %v1308, %v1325
    %v1327 = vsub.f32 1.0, %v1326
    %v1328 = vmul.f32 %v1325, %v1327
    %v1329 = vadd.f32 %v1325, %v1328
    %vm1330 = vweird.f32 %v1308
    %vm1331 = vweird.f32 %v1325
    %vm1332 = vmor %vm1330, %vm1331
    %v1333 = vsel %vm1332, %v1325, %v1329
    %v1334 = vand.u32 2147483647, %v1308
    %vm1335 = vcmp.eq.f32.partialorder %v1334, 8.507059e+37
    %v1336 = vand.u32 %v1308, 2147483648
    %v1337 = vor.u32 1.1754944e-38, %v1336
    %v1338 = vsel %vm1335, %v1337, %v1333
    %v1339 = vmul.f32 1.0, %v1338
    %v1340 = vrcp.pop %v1309
    %v1341 = vmul.f32 %v1309, %v1340
    %v1342 = vsub.f32 1.0, %v1341
    %v1343 = vmul.f32 %v1340, %v1342
    %v1344 = vadd.f32 %v1340, %v1343
    %vm1345 = vweird.f32 %v1309
    %vm1346 = vweird.f32 %v1340
    %vm1347 = vmor %vm1345, %vm1346
    %v1348 = vsel %vm1347, %v1340, %v1344
    %v1349 = vand.u32 2147483647, %v1309
    %vm1350 = vcmp.eq.f32.partialorder %v1349, 8.507059e+37
    %v1351 = vand.u32 %v1309, 2147483648
    %v1352 = vor.u32 1.1754944e-38, %v1351
    %v1353 = vsel %vm1350, %v1352, %v1348
    %v1354 = vmul.f32 1.0, %v1353
    %v1355 = vtanh.pop %v1297
    %v1356 = vld [vmem:[#allocation3] sm:$0xff]
    %v1357 = vmul.f32 %v1339, %v1356
    %v1358 = vmul.f32 %v1324, %v1355
    %v1359 = vadd.f32 %v1357, %v1358
    %v1360 = vtanh.pop %v1359
    %v1361 = vmul.f32 %v1354, %v1360
    %1362 = vst [vmem:[#allocation3] sm:$0xff] %v1359
    %1363 = vst [vmem:[#allocation2] sm:$0xff] %v1361
    %s1364 = scalar_lea.vmem %s2, 40
    %1365 = vst [vmem:[%s1364] sm:$0xff] %v1361
    %s1366 = scalar_lea.vmem %s0, 192
    %v1367 = vld [vmem:[%s1366] sm:$0xff]
    %v1368 = vld [vmem:[%s1366 + $0x8] sm:$0xff]
    %v1369 = vld [vmem:[%s1366 + $0x10] sm:$0xff]
    %v1370 = vld [vmem:[%s1366 + $0x18] sm:$0xff]
    %v1371 = vld [vmem:[#allocation2] sm:$0xff]
    %v1372 = vld [vmem:[#allocation4] sm:$0xff]
    %v1373 = vld [vmem:[#allocation4 + $0x8] sm:$0xff]
    %v1374 = vld [vmem:[#allocation4 + $0x10] sm:$0xff]
    %v1375 = vld [vmem:[#allocation4 + $0x18] sm:$0xff]
    %v1376 = vld [vmem:[#allocation4 + $0x20] sm:$0xff]
    %v1377 = vld [vmem:[#allocation4 + $0x28] sm:$0xff]
    %v1378 = vld [vmem:[#allocation4 + $0x30] sm:$0xff]
    %v1379 = vld [vmem:[#allocation4 + $0x38] sm:$0xff]
    %v1380 = vld [vmem:[#allocation4 + $0x40] sm:$0xff]
    %v1381 = vld [vmem:[#allocation4 + $0x48] sm:$0xff]
    %v1382 = vld [vmem:[#allocation4 + $0x50] sm:$0xff]
    %v1383 = vld [vmem:[#allocation4 + $0x58] sm:$0xff]
    %v1384 = vld [vmem:[#allocation4 + $0x60] sm:$0xff]
    %v1385 = vld [vmem:[#allocation4 + $0x68] sm:$0xff]
    %v1386 = vld [vmem:[#allocation4 + $0x70] sm:$0xff]
    %v1387 = vld [vmem:[#allocation4 + $0x78] sm:$0xff]
    %v1388 = vld [vmem:[#allocation4 + $0x80] sm:$0xff]
    %v1389 = vld [vmem:[#allocation4 + $0x88] sm:$0xff]
    %v1390 = vld [vmem:[#allocation4 + $0x90] sm:$0xff]
    %v1391 = vld [vmem:[#allocation4 + $0x98] sm:$0xff]
    %v1392 = vld [vmem:[#allocation4 + $0xa0] sm:$0xff]
    %v1393 = vld [vmem:[#allocation4 + $0xa8] sm:$0xff]
    %v1394 = vld [vmem:[#allocation4 + $0xb0] sm:$0xff]
    %v1395 = vld [vmem:[#allocation4 + $0xb8] sm:$0xff]
    %v1396 = vld [vmem:[#allocation4 + $0xc0] sm:$0xff]
    %v1397 = vld [vmem:[#allocation4 + $0xc8] sm:$0xff]
    %v1398 = vld [vmem:[#allocation4 + $0xd0] sm:$0xff]
    %v1399 = vld [vmem:[#allocation4 + $0xd8] sm:$0xff]
    %v1400 = vld [vmem:[#allocation4 + $0xe0] sm:$0xff]
    %v1401 = vld [vmem:[#allocation4 + $0xe8] sm:$0xff]
    %v1402 = vld [vmem:[#allocation4 + $0xf0] sm:$0xff]
    %v1403 = vld [vmem:[#allocation4 + $0xf8] sm:$0xff]
    %v1404 = vld [vmem:[#allocation4 + $0x100] sm:$0xff]
    %v1405 = vld [vmem:[#allocation4 + $0x108] sm:$0xff]
    %v1406 = vld [vmem:[#allocation4 + $0x110] sm:$0xff]
    %v1407 = vld [vmem:[#allocation4 + $0x118] sm:$0xff]
    %v1408 = vld [vmem:[#allocation4 + $0x120] sm:$0xff]
    %v1409 = vld [vmem:[#allocation4 + $0x128] sm:$0xff]
    %v1410 = vld [vmem:[#allocation4 + $0x130] sm:$0xff]
    %v1411 = vld [vmem:[#allocation4 + $0x138] sm:$0xff]
    %v1412 = vld [vmem:[#allocation4 + $0x140] sm:$0xff]
    %v1413 = vld [vmem:[#allocation4 + $0x148] sm:$0xff]
    %v1414 = vld [vmem:[#allocation4 + $0x150] sm:$0xff]
    %v1415 = vld [vmem:[#allocation4 + $0x158] sm:$0xff]
    %v1416 = vld [vmem:[#allocation4 + $0x160] sm:$0xff]
    %v1417 = vld [vmem:[#allocation4 + $0x168] sm:$0xff]
    %v1418 = vld [vmem:[#allocation4 + $0x170] sm:$0xff]
    %v1419 = vld [vmem:[#allocation4 + $0x178] sm:$0xff]
    %v1420 = vld [vmem:[#allocation4 + $0x180] sm:$0xff]
    %v1421 = vld [vmem:[#allocation4 + $0x188] sm:$0xff]
    %v1422 = vld [vmem:[#allocation4 + $0x190] sm:$0xff]
    %v1423 = vld [vmem:[#allocation4 + $0x198] sm:$0xff]
    %v1424 = vld [vmem:[#allocation4 + $0x1a0] sm:$0xff]
    %v1425 = vld [vmem:[#allocation4 + $0x1a8] sm:$0xff]
    %v1426 = vld [vmem:[#allocation4 + $0x1b0] sm:$0xff]
    %v1427 = vld [vmem:[#allocation4 + $0x1b8] sm:$0xff]
    %v1428 = vld [vmem:[#allocation4 + $0x1c0] sm:$0xff]
    %v1429 = vld [vmem:[#allocation4 + $0x1c8] sm:$0xff]
    %v1430 = vld [vmem:[#allocation4 + $0x1d0] sm:$0xff]
    %v1431 = vld [vmem:[#allocation4 + $0x1d8] sm:$0xff]
    %v1432 = vld [vmem:[#allocation4 + $0x1e0] sm:$0xff]
    %v1433 = vld [vmem:[#allocation4 + $0x1e8] sm:$0xff]
    %v1434 = vld [vmem:[#allocation4 + $0x1f0] sm:$0xff]
    %v1435 = vld [vmem:[#allocation4 + $0x1f8] sm:$0xff]
    %1436 = vmatpush.msra.mxu0 %v1432
    %1437 = vmatpush.msra.mxu0 %v1428
    %1438 = vmatpush.msra.mxu0 %v1424
    %1439 = vmatpush.msra.mxu0 %v1420
    %1440 = vmatpush.msra.mxu0 %v1416
    %1441 = vmatpush.msra.mxu0 %v1412
    %1442 = vmatpush.msra.mxu0 %v1408
    %1443 = vmatpush.msra.mxu0 %v1404
    %1444 = vmatpush.msra.mxu0 %v1400
    %1445 = vmatpush.msra.mxu0 %v1396
    %1446 = vmatpush.msra.mxu0 %v1392
    %1447 = vmatpush.msra.mxu0 %v1388
    %1448 = vmatpush.msra.mxu0 %v1384
    %1449 = vmatpush.msra.mxu0 %v1380
    %1450 = vmatpush.msra.mxu0 %v1376
    %1451 = vmatpush.msra.mxu0 %v1372
    %1452 = vmatmul.f32.gmra.mxu0 %v1371
    %v1453 = vpop.f32.mrf.mxu0
    %v1454 = vadd.f32 0.0, %v1453
    %1455 = vdwg.mxu0
    %1456 = vmatpush.msra.mxu0 %v1433
    %1457 = vmatpush.msra.mxu0 %v1429
    %1458 = vmatpush.msra.mxu0 %v1425
    %1459 = vmatpush.msra.mxu0 %v1421
    %1460 = vmatpush.msra.mxu0 %v1417
    %1461 = vmatpush.msra.mxu0 %v1413
    %1462 = vmatpush.msra.mxu0 %v1409
    %1463 = vmatpush.msra.mxu0 %v1405
    %1464 = vmatpush.msra.mxu0 %v1401
    %1465 = vmatpush.msra.mxu0 %v1397
    %1466 = vmatpush.msra.mxu0 %v1393
    %1467 = vmatpush.msra.mxu0 %v1389
    %1468 = vmatpush.msra.mxu0 %v1385
    %1469 = vmatpush.msra.mxu0 %v1381
    %1470 = vmatpush.msra.mxu0 %v1377
    %1471 = vmatpush.msra.mxu0 %v1373
    %1472 = vmatmul.f32.gmra.mxu0 %v1371
    %v1473 = vpop.f32.mrf.mxu0
    %v1474 = vadd.f32 0.0, %v1473
    %1475 = vdwg.mxu0
    %1476 = vmatpush.msra.mxu0 %v1434
    %1477 = vmatpush.msra.mxu0 %v1430
    %1478 = vmatpush.msra.mxu0 %v1426
    %1479 = vmatpush.msra.mxu0 %v1422
    %1480 = vmatpush.msra.mxu0 %v1418
    %1481 = vmatpush.msra.mxu0 %v1414
    %1482 = vmatpush.msra.mxu0 %v1410
    %1483 = vmatpush.msra.mxu0 %v1406
    %1484 = vmatpush.msra.mxu0 %v1402
    %1485 = vmatpush.msra.mxu0 %v1398
    %1486 = vmatpush.msra.mxu0 %v1394
    %1487 = vmatpush.msra.mxu0 %v1390
    %1488 = vmatpush.msra.mxu0 %v1386
    %1489 = vmatpush.msra.mxu0 %v1382
    %1490 = vmatpush.msra.mxu0 %v1378
    %1491 = vmatpush.msra.mxu0 %v1374
    %1492 = vmatmul.f32.gmra.mxu0 %v1371
    %v1493 = vpop.f32.mrf.mxu0
    %v1494 = vadd.f32 0.0, %v1493
    %1495 = vdwg.mxu0
    %1496 = vmatpush.msra.mxu0 %v1435
    %1497 = vmatpush.msra.mxu0 %v1431
    %1498 = vmatpush.msra.mxu0 %v1427
    %1499 = vmatpush.msra.mxu0 %v1423
    %1500 = vmatpush.msra.mxu0 %v1419
    %1501 = vmatpush.msra.mxu0 %v1415
    %1502 = vmatpush.msra.mxu0 %v1411
    %1503 = vmatpush.msra.mxu0 %v1407
    %1504 = vmatpush.msra.mxu0 %v1403
    %1505 = vmatpush.msra.mxu0 %v1399
    %1506 = vmatpush.msra.mxu0 %v1395
    %1507 = vmatpush.msra.mxu0 %v1391
    %1508 = vmatpush.msra.mxu0 %v1387
    %1509 = vmatpush.msra.mxu0 %v1383
    %1510 = vmatpush.msra.mxu0 %v1379
    %1511 = vmatpush.msra.mxu0 %v1375
    %1512 = vmatmul.f32.gmra.mxu0 %v1371
    %v1513 = vpop.f32.mrf.mxu0
    %v1514 = vadd.f32 0.0, %v1513
    %1515 = vdwg.mxu0
    %v1516 = vadd.f32 %v1367, %v1454
    %v1517 = vadd.f32 %v1368, %v1474
    %v1518 = vadd.f32 %v1369, %v1494
    %v1519 = vadd.f32 %v1370, %v1514
    %v1520 = vxor.u32 %v1516, 2147483648
    %v1521 = vxor.u32 %v1517, 2147483648
    %v1522 = vxor.u32 %v1518, 2147483648
    %v1523 = vmul.f32 %v1520, 1.442695
    %v1524 = vpow.pop %v1523
    %v1525 = vmul.f32 %v1521, 1.442695
    %v1526 = vpow.pop %v1525
    %v1527 = vmul.f32 %v1522, 1.442695
    %v1528 = vpow.pop %v1527
    %v1529 = vadd.f32 %v1524, 1.0
    %v1530 = vadd.f32 %v1526, 1.0
    %v1531 = vadd.f32 %v1528, 1.0
    %v1532 = vrcp.pop %v1529
    %v1533 = vmul.f32 %v1529, %v1532
    %v1534 = vsub.f32 1.0, %v1533
    %v1535 = vmul.f32 %v1532, %v1534
    %v1536 = vadd.f32 %v1532, %v1535
    %vm1537 = vweird.f32 %v1529
    %vm1538 = vweird.f32 %v1532
    %vm1539 = vmor %vm1537, %vm1538
    %v1540 = vsel %vm1539, %v1532, %v1536
    %v1541 = vand.u32 2147483647, %v1529
    %vm1542 = vcmp.eq.f32.partialorder %v1541, 8.507059e+37
    %v1543 = vand.u32 %v1529, 2147483648
    %v1544 = vor.u32 1.1754944e-38, %v1543
    %v1545 = vsel %vm1542, %v1544, %v1540
    %v1546 = vmul.f32 1.0, %v1545
    %v1547 = vrcp.pop %v1530
    %v1548 = vmul.f32 %v1530, %v1547
    %v1549 = vsub.f32 1.0, %v1548
    %v1550 = vmul.f32 %v1547, %v1549
    %v1551 = vadd.f32 %v1547, %v1550
    %vm1552 = vweird.f32 %v1530
    %vm1553 = vweird.f32 %v1547
    %vm1554 = vmor %vm1552, %vm1553
    %v1555 = vsel %vm1554, %v1547, %v1551
    %v1556 = vand.u32 2147483647, %v1530
    %vm1557 = vcmp.eq.f32.partialorder %v1556, 8.507059e+37
    %v1558 = vand.u32 %v1530, 2147483648
    %v1559 = vor.u32 1.1754944e-38, %v1558
    %v1560 = vsel %vm1557, %v1559, %v1555
    %v1561 = vmul.f32 1.0, %v1560
    %v1562 = vrcp.pop %v1531
    %v1563 = vmul.f32 %v1531, %v1562
    %v1564 = vsub.f32 1.0, %v1563
    %v1565 = vmul.f32 %v1562, %v1564
    %v1566 = vadd.f32 %v1562, %v1565
    %vm1567 = vweird.f32 %v1531
    %vm1568 = vweird.f32 %v1562
    %vm1569 = vmor %vm1567, %vm1568
    %v1570 = vsel %vm1569, %v1562, %v1566
    %v1571 = vand.u32 2147483647, %v1531
    %vm1572 = vcmp.eq.f32.partialorder %v1571, 8.507059e+37
    %v1573 = vand.u32 %v1531, 2147483648
    %v1574 = vor.u32 1.1754944e-38, %v1573
    %v1575 = vsel %vm1572, %v1574, %v1570
    %v1576 = vmul.f32 1.0, %v1575
    %v1577 = vtanh.pop %v1519
    %v1578 = vld [vmem:[#allocation3] sm:$0xff]
    %v1579 = vmul.f32 %v1561, %v1578
    %v1580 = vmul.f32 %v1546, %v1577
    %v1581 = vadd.f32 %v1579, %v1580
    %v1582 = vtanh.pop %v1581
    %v1583 = vmul.f32 %v1576, %v1582
    %1584 = vst [vmem:[#allocation3] sm:$0xff] %v1581
    %1585 = vst [vmem:[#allocation2] sm:$0xff] %v1583
    %s1586 = scalar_lea.vmem %s2, 48
    %1587 = vst [vmem:[%s1586] sm:$0xff] %v1583
    %s1588 = scalar_lea.vmem %s0, 224
    %v1589 = vld [vmem:[%s1588] sm:$0xff]
    %v1590 = vld [vmem:[%s1588 + $0x8] sm:$0xff]
    %v1591 = vld [vmem:[%s1588 + $0x10] sm:$0xff]
    %v1592 = vld [vmem:[%s1588 + $0x18] sm:$0xff]
    %v1593 = vld [vmem:[#allocation2] sm:$0xff]
    %v1594 = vld [vmem:[#allocation4] sm:$0xff]
    %v1595 = vld [vmem:[#allocation4 + $0x8] sm:$0xff]
    %v1596 = vld [vmem:[#allocation4 + $0x10] sm:$0xff]
    %v1597 = vld [vmem:[#allocation4 + $0x18] sm:$0xff]
    %v1598 = vld [vmem:[#allocation4 + $0x20] sm:$0xff]
    %v1599 = vld [vmem:[#allocation4 + $0x28] sm:$0xff]
    %v1600 = vld [vmem:[#allocation4 + $0x30] sm:$0xff]
    %v1601 = vld [vmem:[#allocation4 + $0x38] sm:$0xff]
    %v1602 = vld [vmem:[#allocation4 + $0x40] sm:$0xff]
    %v1603 = vld [vmem:[#allocation4 + $0x48] sm:$0xff]
    %v1604 = vld [vmem:[#allocation4 + $0x50] sm:$0xff]
    %v1605 = vld [vmem:[#allocation4 + $0x58] sm:$0xff]
    %v1606 = vld [vmem:[#allocation4 + $0x60] sm:$0xff]
    %v1607 = vld [vmem:[#allocation4 + $0x68] sm:$0xff]
    %v1608 = vld [vmem:[#allocation4 + $0x70] sm:$0xff]
    %v1609 = vld [vmem:[#allocation4 + $0x78] sm:$0xff]
    %v1610 = vld [vmem:[#allocation4 + $0x80] sm:$0xff]
    %v1611 = vld [vmem:[#allocation4 + $0x88] sm:$0xff]
    %v1612 = vld [vmem:[#allocation4 + $0x90] sm:$0xff]
    %v1613 = vld [vmem:[#allocation4 + $0x98] sm:$0xff]
    %v1614 = vld [vmem:[#allocation4 + $0xa0] sm:$0xff]
    %v1615 = vld [vmem:[#allocation4 + $0xa8] sm:$0xff]
    %v1616 = vld [vmem:[#allocation4 + $0xb0] sm:$0xff]
    %v1617 = vld [vmem:[#allocation4 + $0xb8] sm:$0xff]
    %v1618 = vld [vmem:[#allocation4 + $0xc0] sm:$0xff]
    %v1619 = vld [vmem:[#allocation4 + $0xc8] sm:$0xff]
    %v1620 = vld [vmem:[#allocation4 + $0xd0] sm:$0xff]
    %v1621 = vld [vmem:[#allocation4 + $0xd8] sm:$0xff]
    %v1622 = vld [vmem:[#allocation4 + $0xe0] sm:$0xff]
    %v1623 = vld [vmem:[#allocation4 + $0xe8] sm:$0xff]
    %v1624 = vld [vmem:[#allocation4 + $0xf0] sm:$0xff]
    %v1625 = vld [vmem:[#allocation4 + $0xf8] sm:$0xff]
    %v1626 = vld [vmem:[#allocation4 + $0x100] sm:$0xff]
    %v1627 = vld [vmem:[#allocation4 + $0x108] sm:$0xff]
    %v1628 = vld [vmem:[#allocation4 + $0x110] sm:$0xff]
    %v1629 = vld [vmem:[#allocation4 + $0x118] sm:$0xff]
    %v1630 = vld [vmem:[#allocation4 + $0x120] sm:$0xff]
    %v1631 = vld [vmem:[#allocation4 + $0x128] sm:$0xff]
    %v1632 = vld [vmem:[#allocation4 + $0x130] sm:$0xff]
    %v1633 = vld [vmem:[#allocation4 + $0x138] sm:$0xff]
    %v1634 = vld [vmem:[#allocation4 + $0x140] sm:$0xff]
    %v1635 = vld [vmem:[#allocation4 + $0x148] sm:$0xff]
    %v1636 = vld [vmem:[#allocation4 + $0x150] sm:$0xff]
    %v1637 = vld [vmem:[#allocation4 + $0x158] sm:$0xff]
    %v1638 = vld [vmem:[#allocation4 + $0x160] sm:$0xff]
    %v1639 = vld [vmem:[#allocation4 + $0x168] sm:$0xff]
    %v1640 = vld [vmem:[#allocation4 + $0x170] sm:$0xff]
    %v1641 = vld [vmem:[#allocation4 + $0x178] sm:$0xff]
    %v1642 = vld [vmem:[#allocation4 + $0x180] sm:$0xff]
    %v1643 = vld [vmem:[#allocation4 + $0x188] sm:$0xff]
    %v1644 = vld [vmem:[#allocation4 + $0x190] sm:$0xff]
    %v1645 = vld [vmem:[#allocation4 + $0x198] sm:$0xff]
    %v1646 = vld [vmem:[#allocation4 + $0x1a0] sm:$0xff]
    %v1647 = vld [vmem:[#allocation4 + $0x1a8] sm:$0xff]
    %v1648 = vld [vmem:[#allocation4 + $0x1b0] sm:$0xff]
    %v1649 = vld [vmem:[#allocation4 + $0x1b8] sm:$0xff]
    %v1650 = vld [vmem:[#allocation4 + $0x1c0] sm:$0xff]
    %v1651 = vld [vmem:[#allocation4 + $0x1c8] sm:$0xff]
    %v1652 = vld [vmem:[#allocation4 + $0x1d0] sm:$0xff]
    %v1653 = vld [vmem:[#allocation4 + $0x1d8] sm:$0xff]
    %v1654 = vld [vmem:[#allocation4 + $0x1e0] sm:$0xff]
    %v1655 = vld [vmem:[#allocation4 + $0x1e8] sm:$0xff]
    %v1656 = vld [vmem:[#allocation4 + $0x1f0] sm:$0xff]
    %v1657 = vld [vmem:[#allocation4 + $0x1f8] sm:$0xff]
    %1658 = vmatpush.msra.mxu0 %v1654
    %1659 = vmatpush.msra.mxu0 %v1650
    %1660 = vmatpush.msra.mxu0 %v1646
    %1661 = vmatpush.msra.mxu0 %v1642
    %1662 = vmatpush.msra.mxu0 %v1638
    %1663 = vmatpush.msra.mxu0 %v1634
    %1664 = vmatpush.msra.mxu0 %v1630
    %1665 = vmatpush.msra.mxu0 %v1626
    %1666 = vmatpush.msra.mxu0 %v1622
    %1667 = vmatpush.msra.mxu0 %v1618
    %1668 = vmatpush.msra.mxu0 %v1614
    %1669 = vmatpush.msra.mxu0 %v1610
    %1670 = vmatpush.msra.mxu0 %v1606
    %1671 = vmatpush.msra.mxu0 %v1602
    %1672 = vmatpush.msra.mxu0 %v1598
    %1673 = vmatpush.msra.mxu0 %v1594
    %1674 = vmatmul.f32.gmra.mxu0 %v1593
    %v1675 = vpop.f32.mrf.mxu0
    %v1676 = vadd.f32 0.0, %v1675
    %1677 = vdwg.mxu0
    %1678 = vmatpush.msra.mxu0 %v1655
    %1679 = vmatpush.msra.mxu0 %v1651
    %1680 = vmatpush.msra.mxu0 %v1647
    %1681 = vmatpush.msra.mxu0 %v1643
    %1682 = vmatpush.msra.mxu0 %v1639
    %1683 = vmatpush.msra.mxu0 %v1635
    %1684 = vmatpush.msra.mxu0 %v1631
    %1685 = vmatpush.msra.mxu0 %v1627
    %1686 = vmatpush.msra.mxu0 %v1623
    %1687 = vmatpush.msra.mxu0 %v1619
    %1688 = vmatpush.msra.mxu0 %v1615
    %1689 = vmatpush.msra.mxu0 %v1611
    %1690 = vmatpush.msra.mxu0 %v1607
    %1691 = vmatpush.msra.mxu0 %v1603
    %1692 = vmatpush.msra.mxu0 %v1599
    %1693 = vmatpush.msra.mxu0 %v1595
    %1694 = vmatmul.f32.gmra.mxu0 %v1593
    %v1695 = vpop.f32.mrf.mxu0
    %v1696 = vadd.f32 0.0, %v1695
    %1697 = vdwg.mxu0
    %1698 = vmatpush.msra.mxu0 %v1656
    %1699 = vmatpush.msra.mxu0 %v1652
    %1700 = vmatpush.msra.mxu0 %v1648
    %1701 = vmatpush.msra.mxu0 %v1644
    %1702 = vmatpush.msra.mxu0 %v1640
    %1703 = vmatpush.msra.mxu0 %v1636
    %1704 = vmatpush.msra.mxu0 %v1632
    %1705 = vmatpush.msra.mxu0 %v1628
    %1706 = vmatpush.msra.mxu0 %v1624
    %1707 = vmatpush.msra.mxu0 %v1620
    %1708 = vmatpush.msra.mxu0 %v1616
    %1709 = vmatpush.msra.mxu0 %v1612
    %1710 = vmatpush.msra.mxu0 %v1608
    %1711 = vmatpush.msra.mxu0 %v1604
    %1712 = vmatpush.msra.mxu0 %v1600
    %1713 = vmatpush.msra.mxu0 %v1596
    %1714 = vmatmul.f32.gmra.mxu0 %v1593
    %v1715 = vpop.f32.mrf.mxu0
    %v1716 = vadd.f32 0.0, %v1715
    %1717 = vdwg.mxu0
    %1718 = vmatpush.msra.mxu0 %v1657
    %1719 = vmatpush.msra.mxu0 %v1653
    %1720 = vmatpush.msra.mxu0 %v1649
    %1721 = vmatpush.msra.mxu0 %v1645
    %1722 = vmatpush.msra.mxu0 %v1641
    %1723 = vmatpush.msra.mxu0 %v1637
    %1724 = vmatpush.msra.mxu0 %v1633
    %1725 = vmatpush.msra.mxu0 %v1629
    %1726 = vmatpush.msra.mxu0 %v1625
    %1727 = vmatpush.msra.mxu0 %v1621
    %1728 = vmatpush.msra.mxu0 %v1617
    %1729 = vmatpush.msra.mxu0 %v1613
    %1730 = vmatpush.msra.mxu0 %v1609
    %1731 = vmatpush.msra.mxu0 %v1605
    %1732 = vmatpush.msra.mxu0 %v1601
    %1733 = vmatpush.msra.mxu0 %v1597
    %1734 = vmatmul.f32.gmra.mxu0 %v1593
    %v1735 = vpop.f32.mrf.mxu0
    %v1736 = vadd.f32 0.0, %v1735
    %1737 = vdwg.mxu0
    %v1738 = vadd.f32 %v1589, %v1676
    %v1739 = vadd.f32 %v1590, %v1696
    %v1740 = vadd.f32 %v1591, %v1716
    %v1741 = vadd.f32 %v1592, %v1736
    %v1742 = vxor.u32 %v1738, 2147483648
    %v1743 = vxor.u32 %v1739, 2147483648
    %v1744 = vxor.u32 %v1740, 2147483648
    %v1745 = vmul.f32 %v1742, 1.442695
    %v1746 = vpow.pop %v1745
    %v1747 = vmul.f32 %v1743, 1.442695
    %v1748 = vpow.pop %v1747
    %v1749 = vmul.f32 %v1744, 1.442695
    %v1750 = vpow.pop %v1749
    %v1751 = vadd.f32 %v1746, 1.0
    %v1752 = vadd.f32 %v1748, 1.0
    %v1753 = vadd.f32 %v1750, 1.0
    %v1754 = vrcp.pop %v1751
    %v1755 = vmul.f32 %v1751, %v1754
    %v1756 = vsub.f32 1.0, %v1755
    %v1757 = vmul.f32 %v1754, %v1756
    %v1758 = vadd.f32 %v1754, %v1757
    %vm1759 = vweird.f32 %v1751
    %vm1760 = vweird.f32 %v1754
    %vm1761 = vmor %vm1759, %vm1760
    %v1762 = vsel %vm1761, %v1754, %v1758
    %v1763 = vand.u32 2147483647, %v1751
    %vm1764 = vcmp.eq.f32.partialorder %v1763, 8.507059e+37
    %v1765 = vand.u32 %v1751, 2147483648
    %v1766 = vor.u32 1.1754944e-38, %v1765
    %v1767 = vsel %vm1764, %v1766, %v1762
    %v1768 = vmul.f32 1.0, %v1767
    %v1769 = vrcp.pop %v1752
    %v1770 = vmul.f32 %v1752, %v1769
    %v1771 = vsub.f32 1.0, %v1770
    %v1772 = vmul.f32 %v1769, %v1771
    %v1773 = vadd.f32 %v1769, %v1772
    %vm1774 = vweird.f32 %v1752
    %vm1775 = vweird.f32 %v1769
    %vm1776 = vmor %vm1774, %vm1775
    %v1777 = vsel %vm1776, %v1769, %v1773
    %v1778 = vand.u32 2147483647, %v1752
    %vm1779 = vcmp.eq.f32.partialorder %v1778, 8.507059e+37
    %v1780 = vand.u32 %v1752, 2147483648
    %v1781 = vor.u32 1.1754944e-38, %v1780
    %v1782 = vsel %vm1779, %v1781, %v1777
    %v1783 = vmul.f32 1.0, %v1782
    %v1784 = vrcp.pop %v1753
    %v1785 = vmul.f32 %v1753, %v1784
    %v1786 = vsub.f32 1.0, %v1785
    %v1787 = vmul.f32 %v1784, %v1786
    %v1788 = vadd.f32 %v1784, %v1787
    %vm1789 = vweird.f32 %v1753
    %vm1790 = vweird.f32 %v1784
    %vm1791 = vmor %vm1789, %vm1790
    %v1792 = vsel %vm1791, %v1784, %v1788
    %v1793 = vand.u32 2147483647, %v1753
    %vm1794 = vcmp.eq.f32.partialorder %v1793, 8.507059e+37
    %v1795 = vand.u32 %v1753, 2147483648
    %v1796 = vor.u32 1.1754944e-38, %v1795
    %v1797 = vsel %vm1794, %v1796, %v1792
    %v1798 = vmul.f32 1.0, %v1797
    %v1799 = vtanh.pop %v1741
    %v1800 = vld [vmem:[#allocation3] sm:$0xff]
    %v1801 = vmul.f32 %v1783, %v1800
    %v1802 = vmul.f32 %v1768, %v1799
    %v1803 = vadd.f32 %v1801, %v1802
    %v1804 = vtanh.pop %v1803
    %v1805 = vmul.f32 %v1798, %v1804
    %1806 = vst [vmem:[#allocation3] sm:$0xff] %v1803
    %1807 = vst [vmem:[#allocation2] sm:$0xff] %v1805
    %s1808 = scalar_lea.vmem %s2, 56
    %1809 = vst [vmem:[%s1808] sm:$0xff] %v1805
    // Predicated region
    $region18: #{rnn_model_forward.2} parent=1 // pred_check
      %p1810 = pneg %p30
    $region19: #{rnn_model_forward.2} parent=1 // pred_check_branch
      %1812 = sbr.rel (%p1810) target = $region21
    $region20: #{rnn_model_forward.2} parent=1 // pred_region
      %v1813 = vld [vmem:[#allocation2] sm:$0xff]
      %1814 = vst [vmem:[%s3] sm:$0xff] %v1813
      %v1815 = vld [vmem:[#allocation3] sm:$0xff]
      %1816 = vst [vmem:[%s4] sm:$0xff] %v1815
    $region21: #{rnn_model_forward.2} parent=1 // pred_fallthru
      _
    // Predicated region
    $region22: #{rnn_model_forward.2} parent=1 // pred_check
      _
    $region23: #{rnn_model_forward.2} parent=1 // pred_check_branch
      %1818 = sbr.rel (0) target = $region25
    $region24: #{rnn_model_forward.2} parent=1 // pred_region
      _
    $region25: #{rnn_model_forward.2} parent=1 // pred_fallthru
      _
    // Predicated region
    $region26: #{rnn_model_forward.2} parent=1 // pred_check
      _
    $region27: #{rnn_model_forward.2} parent=1 // pred_check_branch
      %1820 = sbr.rel (0) target = $region29
    $region28: #{rnn_model_forward.2} parent=1 // pred_region
      _
    $region29: #{rnn_model_forward.2} parent=1 // pred_fallthru
      _
    // Predicated region
    $region30: #{rnn_model_forward.2} parent=1 // pred_check
      _
    $region31: #{rnn_model_forward.2} parent=1 // pred_check_branch
      %1822 = sbr.rel (0) target = $region33
    $region32: #{rnn_model_forward.2} parent=1 // pred_region
      _
    $region33: #{rnn_model_forward.2} parent=1 // pred_fallthru
      _
    // Predicated region
    $region34: #{rnn_model_forward.2} parent=1 // pred_check
      _
    $region35: #{rnn_model_forward.2} parent=1 // pred_check_branch
      %1824 = sbr.rel (0) target = $region37
    $region36: #{rnn_model_forward.2} parent=1 // pred_region
      _
    $region37: #{rnn_model_forward.2} parent=1 // pred_fallthru
      _
    // Predicated region
    $region38: #{rnn_model_forward.2} parent=1 // pred_check
      _
    $region39: #{rnn_model_forward.2} parent=1 // pred_check_branch
      %1826 = sbr.rel (0) target = $region41
    $region40: #{rnn_model_forward.2} parent=1 // pred_region
      _
    $region41: #{rnn_model_forward.2} parent=1 // pred_fallthru
      _
    // Predicated region
    $region42: #{rnn_model_forward.2} parent=1 // pred_check
      _
    $region43: #{rnn_model_forward.2} parent=1 // pred_check_branch
      %1828 = sbr.rel (0) target = $region45
    $region44: #{rnn_model_forward.2} parent=1 // pred_region
      _
    $region45: #{rnn_model_forward.2} parent=1 // pred_fallthru
      _
    %1829 = vsyncpa [#allocation5], 1

// kernel: rnn_model_forward.3
$region0: #{rnn_model_forward.3}
  #allocation0 [shape = 'u32[]', space=smem, size = 0x4, offset = 0x4, fixed_abs, tag = 'smem constant byte address 0x4 - core index']
  #allocation1 [shape = 'u32[72,128]{1,0:T(1,128)}', space=vmem, size = 0x9000, scoped, tag = 'internal scratch']
  #allocation2 [shape = 'f32[8,128]{1,0:T(8,128)}', space=vmem, size = 0x1000, scoped, tag = 'scratch operand']
  #allocation3 [shape = 'f32[8,128]{1,0:T(8,128)}', space=vmem, size = 0x1000, scoped, tag = 'scratch operand']
  %s0 = inlined_call_operand.vmem [shape: f32[8,8,512], index: 0, kind: input, shape index: {}]
  %s1 = inlined_call_operand.vmem [shape: f32[128,512], index: 1, kind: input, shape index: {}]
  %s2 = inlined_call_operand.vmem [shape: f32[8,8,128], index: 2, kind: output, shape index: {0}]
  %s3 = inlined_call_operand.vmem [shape: f32[8,128], index: 3, kind: output, shape index: {1}]
  %s4 = inlined_call_operand.vmem [shape: f32[8,128], index: 4, kind: output, shape index: {2}]
  %5 = xla_tuple %s2, %s3, %s4
  %s6 = sld [smem:[#allocation0]]
  $region42: #{rnn_model_forward.3} parent=0
    _
  %s8 = ssub.s32 1, %s6
  %s9 = scalar_select 0, %s8, %s6
  // Predicated region
  $region2: #{rnn_model_forward.3} parent=0 // pred_check
    _
  $region3: #{rnn_model_forward.3} parent=0 // pred_check_branch
    %11 = sbr.rel (0) target = $region5
  $region4: #{rnn_model_forward.3} parent=0 // pred_region
    _
  $region5: #{rnn_model_forward.3} parent=0 // pred_fallthru
    _
  // Predicated region
  $region6: #{rnn_model_forward.3} parent=0 // pred_check
    _
  $region7: #{rnn_model_forward.3} parent=0 // pred_check_branch
    %13 = sbr.rel (0) target = $region9
  $region8: #{rnn_model_forward.3} parent=0 // pred_region
    _
  $region9: #{rnn_model_forward.3} parent=0 // pred_fallthru
    _
  %p14 = scmp.eq.s32.totalorder 0, 0
  // Predicated region
  $region10: #{rnn_model_forward.3} parent=0 // pred_check
    %p15 = pneg %p14
  $region11: #{rnn_model_forward.3} parent=0 // pred_check_branch
    %17 = sbr.rel (%p15) target = $region13
  $region12: #{rnn_model_forward.3} parent=0 // pred_region
    %18 = vst [vmem:[#allocation2] sm:$0xff] 0.0
    %19 = vst [vmem:[#allocation3] sm:$0xff] 0.0
  $region13: #{rnn_model_forward.3} parent=0 // pred_fallthru
    _
  %v20 = vld [vmem:[%s0] sm:$0xff]
  %v21 = vld [vmem:[%s0 + $0x8] sm:$0xff]
  %v22 = vld [vmem:[%s0 + $0x10] sm:$0xff]
  %v23 = vld [vmem:[%s0 + $0x18] sm:$0xff]
  %v24 = vld [vmem:[#allocation2] sm:$0xff]
  %v25 = vld [vmem:[%s1] sm:$0xff]
  %v26 = vld [vmem:[%s1 + $0x8] sm:$0xff]
  %v27 = vld [vmem:[%s1 + $0x10] sm:$0xff]
  %v28 = vld [vmem:[%s1 + $0x18] sm:$0xff]
  %v29 = vld [vmem:[%s1 + $0x20] sm:$0xff]
  %v30 = vld [vmem:[%s1 + $0x28] sm:$0xff]
  %v31 = vld [vmem:[%s1 + $0x30] sm:$0xff]
  %v32 = vld [vmem:[%s1 + $0x38] sm:$0xff]
  %v33 = vld [vmem:[%s1 + $0x40] sm:$0xff]
  %v34 = vld [vmem:[%s1 + $0x48] sm:$0xff]
  %v35 = vld [vmem:[%s1 + $0x50] sm:$0xff]
  %v36 = vld [vmem:[%s1 + $0x58] sm:$0xff]
  %v37 = vld [vmem:[%s1 + $0x60] sm:$0xff]
  %v38 = vld [vmem:[%s1 + $0x68] sm:$0xff]
  %v39 = vld [vmem:[%s1 + $0x70] sm:$0xff]
  %v40 = vld [vmem:[%s1 + $0x78] sm:$0xff]
  %v41 = vld [vmem:[%s1 + $0x80] sm:$0xff]
  %v42 = vld [vmem:[%s1 + $0x88] sm:$0xff]
  %v43 = vld [vmem:[%s1 + $0x90] sm:$0xff]
  %v44 = vld [vmem:[%s1 + $0x98] sm:$0xff]
  %v45 = vld [vmem:[%s1 + $0xa0] sm:$0xff]
  %v46 = vld [vmem:[%s1 + $0xa8] sm:$0xff]
  %v47 = vld [vmem:[%s1 + $0xb0] sm:$0xff]
  %v48 = vld [vmem:[%s1 + $0xb8] sm:$0xff]
  %v49 = vld [vmem:[%s1 + $0xc0] sm:$0xff]
  %v50 = vld [vmem:[%s1 + $0xc8] sm:$0xff]
  %v51 = vld [vmem:[%s1 + $0xd0] sm:$0xff]
  %v52 = vld [vmem:[%s1 + $0xd8] sm:$0xff]
  %v53 = vld [vmem:[%s1 + $0xe0] sm:$0xff]
  %v54 = vld [vmem:[%s1 + $0xe8] sm:$0xff]
  %v55 = vld [vmem:[%s1 + $0xf0] sm:$0xff]
  %v56 = vld [vmem:[%s1 + $0xf8] sm:$0xff]
  %v57 = vld [vmem:[%s1 + $0x100] sm:$0xff]
  %v58 = vld [vmem:[%s1 + $0x108] sm:$0xff]
  %v59 = vld [vmem:[%s1 + $0x110] sm:$0xff]
  %v60 = vld [vmem:[%s1 + $0x118] sm:$0xff]
  %v61 = vld [vmem:[%s1 + $0x120] sm:$0xff]
  %v62 = vld [vmem:[%s1 + $0x128] sm:$0xff]
  %v63 = vld [vmem:[%s1 + $0x130] sm:$0xff]
  %v64 = vld [vmem:[%s1 + $0x138] sm:$0xff]
  %v65 = vld [vmem:[%s1 + $0x140] sm:$0xff]
  %v66 = vld [vmem:[%s1 + $0x148] sm:$0xff]
  %v67 = vld [vmem:[%s1 + $0x150] sm:$0xff]
  %v68 = vld [vmem:[%s1 + $0x158] sm:$0xff]
  %v69 = vld [vmem:[%s1 + $0x160] sm:$0xff]
  %v70 = vld [vmem:[%s1 + $0x168] sm:$0xff]
  %v71 = vld [vmem:[%s1 + $0x170] sm:$0xff]
  %v72 = vld [vmem:[%s1 + $0x178] sm:$0xff]
  %v73 = vld [vmem:[%s1 + $0x180] sm:$0xff]
  %v74 = vld [vmem:[%s1 + $0x188] sm:$0xff]
  %v75 = vld [vmem:[%s1 + $0x190] sm:$0xff]
  %v76 = vld [vmem:[%s1 + $0x198] sm:$0xff]
  %v77 = vld [vmem:[%s1 + $0x1a0] sm:$0xff]
  %v78 = vld [vmem:[%s1 + $0x1a8] sm:$0xff]
  %v79 = vld [vmem:[%s1 + $0x1b0] sm:$0xff]
  %v80 = vld [vmem:[%s1 + $0x1b8] sm:$0xff]
  %v81 = vld [vmem:[%s1 + $0x1c0] sm:$0xff]
  %v82 = vld [vmem:[%s1 + $0x1c8] sm:$0xff]
  %v83 = vld [vmem:[%s1 + $0x1d0] sm:$0xff]
  %v84 = vld [vmem:[%s1 + $0x1d8] sm:$0xff]
  %v85 = vld [vmem:[%s1 + $0x1e0] sm:$0xff]
  %v86 = vld [vmem:[%s1 + $0x1e8] sm:$0xff]
  %v87 = vld [vmem:[%s1 + $0x1f0] sm:$0xff]
  %v88 = vld [vmem:[%s1 + $0x1f8] sm:$0xff]
  %89 = vmatpush.msra.mxu0 %v85
  %90 = vmatpush.msra.mxu0 %v81
  %91 = vmatpush.msra.mxu0 %v77
  %92 = vmatpush.msra.mxu0 %v73
  %93 = vmatpush.msra.mxu0 %v69
  %94 = vmatpush.msra.mxu0 %v65
  %95 = vmatpush.msra.mxu0 %v61
  %96 = vmatpush.msra.mxu0 %v57
  %97 = vmatpush.msra.mxu0 %v53
  %98 = vmatpush.msra.mxu0 %v49
  %99 = vmatpush.msra.mxu0 %v45
  %100 = vmatpush.msra.mxu0 %v41
  %101 = vmatpush.msra.mxu0 %v37
  %102 = vmatpush.msra.mxu0 %v33
  %103 = vmatpush.msra.mxu0 %v29
  %104 = vmatpush.msra.mxu0 %v25
  %105 = vmatmul.f32.gmra.mxu0 %v24
  %v106 = vpop.f32.mrf.mxu0
  %v107 = vadd.f32 0.0, %v106
  %108 = vdwg.mxu0
  %109 = vmatpush.msra.mxu0 %v86
  %110 = vmatpush.msra.mxu0 %v82
  %111 = vmatpush.msra.mxu0 %v78
  %112 = vmatpush.msra.mxu0 %v74
  %113 = vmatpush.msra.mxu0 %v70
  %114 = vmatpush.msra.mxu0 %v66
  %115 = vmatpush.msra.mxu0 %v62
  %116 = vmatpush.msra.mxu0 %v58
  %117 = vmatpush.msra.mxu0 %v54
  %118 = vmatpush.msra.mxu0 %v50
  %119 = vmatpush.msra.mxu0 %v46
  %120 = vmatpush.msra.mxu0 %v42
  %121 = vmatpush.msra.mxu0 %v38
  %122 = vmatpush.msra.mxu0 %v34
  %123 = vmatpush.msra.mxu0 %v30
  %124 = vmatpush.msra.mxu0 %v26
  %125 = vmatmul.f32.gmra.mxu0 %v24
  %v126 = vpop.f32.mrf.mxu0
  %v127 = vadd.f32 0.0, %v126
  %128 = vdwg.mxu0
  %129 = vmatpush.msra.mxu0 %v87
  %130 = vmatpush.msra.mxu0 %v83
  %131 = vmatpush.msra.mxu0 %v79
  %132 = vmatpush.msra.mxu0 %v75
  %133 = vmatpush.msra.mxu0 %v71
  %134 = vmatpush.msra.mxu0 %v67
  %135 = vmatpush.msra.mxu0 %v63
  %136 = vmatpush.msra.mxu0 %v59
  %137 = vmatpush.msra.mxu0 %v55
  %138 = vmatpush.msra.mxu0 %v51
  %139 = vmatpush.msra.mxu0 %v47
  %140 = vmatpush.msra.mxu0 %v43
  %141 = vmatpush.msra.mxu0 %v39
  %142 = vmatpush.msra.mxu0 %v35
  %143 = vmatpush.msra.mxu0 %v31
  %144 = vmatpush.msra.mxu0 %v27
  %145 = vmatmul.f32.gmra.mxu0 %v24
  %v146 = vpop.f32.mrf.mxu0
  %v147 = vadd.f32 0.0, %v146
  %148 = vdwg.mxu0
  %149 = vmatpush.msra.mxu0 %v88
  %150 = vmatpush.msra.mxu0 %v84
  %151 = vmatpush.msra.mxu0 %v80
  %152 = vmatpush.msra.mxu0 %v76
  %153 = vmatpush.msra.mxu0 %v72
  %154 = vmatpush.msra.mxu0 %v68
  %155 = vmatpush.msra.mxu0 %v64
  %156 = vmatpush.msra.mxu0 %v60
  %157 = vmatpush.msra.mxu0 %v56
  %158 = vmatpush.msra.mxu0 %v52
  %159 = vmatpush.msra.mxu0 %v48
  %160 = vmatpush.msra.mxu0 %v44
  %161 = vmatpush.msra.mxu0 %v40
  %162 = vmatpush.msra.mxu0 %v36
  %163 = vmatpush.msra.mxu0 %v32
  %164 = vmatpush.msra.mxu0 %v28
  %165 = vmatmul.f32.gmra.mxu0 %v24
  %v166 = vpop.f32.mrf.mxu0
  %v167 = vadd.f32 0.0, %v166
  %168 = vdwg.mxu0
  %v169 = vadd.f32 %v20, %v107
  %v170 = vadd.f32 %v21, %v127
  %v171 = vadd.f32 %v22, %v147
  %v172 = vadd.f32 %v23, %v167
  %v173 = vxor.u32 %v169, 2147483648
  %v174 = vxor.u32 %v170, 2147483648
  %v175 = vxor.u32 %v171, 2147483648
  %v176 = vmul.f32 %v173, 1.442695
  %v177 = vpow.pop %v176
  %v178 = vmul.f32 %v174, 1.442695
  %v179 = vpow.pop %v178
  %v180 = vmul.f32 %v175, 1.442695
  %v181 = vpow.pop %v180
  %v182 = vadd.f32 %v177, 1.0
  %v183 = vadd.f32 %v179, 1.0
  %v184 = vadd.f32 %v181, 1.0
  %v185 = vrcp.pop %v182
  %v186 = vmul.f32 %v182, %v185
  %v187 = vsub.f32 1.0, %v186
  %v188 = vmul.f32 %v185, %v187
  %v189 = vadd.f32 %v185, %v188
  %vm190 = vweird.f32 %v182
  %vm191 = vweird.f32 %v185
  %vm192 = vmor %vm190, %vm191
  %v193 = vsel %vm192, %v185, %v189
  %v194 = vand.u32 2147483647, %v182
  %vm195 = vcmp.eq.f32.partialorder %v194, 8.507059e+37
  %v196 = vand.u32 %v182, 2147483648
  %v197 = vor.u32 1.1754944e-38, %v196
  %v198 = vsel %vm195, %v197, %v193
  %v199 = vmul.f32 1.0, %v198
  %v200 = vrcp.pop %v183
  %v201 = vmul.f32 %v183, %v200
  %v202 = vsub.f32 1.0, %v201
  %v203 = vmul.f32 %v200, %v202
  %v204 = vadd.f32 %v200, %v203
  %vm205 = vweird.f32 %v183
  %vm206 = vweird.f32 %v200
  %vm207 = vmor %vm205, %vm206
  %v208 = vsel %vm207, %v200, %v204
  %v209 = vand.u32 2147483647, %v183
  %vm210 = vcmp.eq.f32.partialorder %v209, 8.507059e+37
  %v211 = vand.u32 %v183, 2147483648
  %v212 = vor.u32 1.1754944e-38, %v211
  %v213 = vsel %vm210, %v212, %v208
  %v214 = vmul.f32 1.0, %v213
  %v215 = vrcp.pop %v184
  %v216 = vmul.f32 %v184, %v215
  %v217 = vsub.f32 1.0, %v216
  %v218 = vmul.f32 %v215, %v217
  %v219 = vadd.f32 %v215, %v218
  %vm220 = vweird.f32 %v184
  %vm221 = vweird.f32 %v215
  %vm222 = vmor %vm220, %vm221
  %v223 = vsel %vm222, %v215, %v219
  %v224 = vand.u32 2147483647, %v184
  %vm225 = vcmp.eq.f32.partialorder %v224, 8.507059e+37
  %v226 = vand.u32 %v184, 2147483648
  %v227 = vor.u32 1.1754944e-38, %v226
  %v228 = vsel %vm225, %v227, %v223
  %v229 = vmul.f32 1.0, %v228
  %v230 = vtanh.pop %v172
  %v231 = vld [vmem:[#allocation3] sm:$0xff]
  %v232 = vmul.f32 %v214, %v231
  %v233 = vmul.f32 %v199, %v230
  %v234 = vadd.f32 %v232, %v233
  %v235 = vtanh.pop %v234
  %v236 = vmul.f32 %v229, %v235
  %237 = vst [vmem:[#allocation3] sm:$0xff] %v234
  %238 = vst [vmem:[#allocation2] sm:$0xff] %v236
  %239 = vst [vmem:[%s2] sm:$0xff] %v236
  %s240 = scalar_lea.vmem %s0, 32
  %v241 = vld [vmem:[%s240] sm:$0xff]
  %v242 = vld [vmem:[%s240 + $0x8] sm:$0xff]
  %v243 = vld [vmem:[%s240 + $0x10] sm:$0xff]
  %v244 = vld [vmem:[%s240 + $0x18] sm:$0xff]
  %v245 = vld [vmem:[#allocation2] sm:$0xff]
  %v246 = vld [vmem:[%s1] sm:$0xff]
  %v247 = vld [vmem:[%s1 + $0x8] sm:$0xff]
  %v248 = vld [vmem:[%s1 + $0x10] sm:$0xff]
  %v249 = vld [vmem:[%s1 + $0x18] sm:$0xff]
  %v250 = vld [vmem:[%s1 + $0x20] sm:$0xff]
  %v251 = vld [vmem:[%s1 + $0x28] sm:$0xff]
  %v252 = vld [vmem:[%s1 + $0x30] sm:$0xff]
  %v253 = vld [vmem:[%s1 + $0x38] sm:$0xff]
  %v254 = vld [vmem:[%s1 + $0x40] sm:$0xff]
  %v255 = vld [vmem:[%s1 + $0x48] sm:$0xff]
  %v256 = vld [vmem:[%s1 + $0x50] sm:$0xff]
  %v257 = vld [vmem:[%s1 + $0x58] sm:$0xff]
  %v258 = vld [vmem:[%s1 + $0x60] sm:$0xff]
  %v259 = vld [vmem:[%s1 + $0x68] sm:$0xff]
  %v260 = vld [vmem:[%s1 + $0x70] sm:$0xff]
  %v261 = vld [vmem:[%s1 + $0x78] sm:$0xff]
  %v262 = vld [vmem:[%s1 + $0x80] sm:$0xff]
  %v263 = vld [vmem:[%s1 + $0x88] sm:$0xff]
  %v264 = vld [vmem:[%s1 + $0x90] sm:$0xff]
  %v265 = vld [vmem:[%s1 + $0x98] sm:$0xff]
  %v266 = vld [vmem:[%s1 + $0xa0] sm:$0xff]
  %v267 = vld [vmem:[%s1 + $0xa8] sm:$0xff]
  %v268 = vld [vmem:[%s1 + $0xb0] sm:$0xff]
  %v269 = vld [vmem:[%s1 + $0xb8] sm:$0xff]
  %v270 = vld [vmem:[%s1 + $0xc0] sm:$0xff]
  %v271 = vld [vmem:[%s1 + $0xc8] sm:$0xff]
  %v272 = vld [vmem:[%s1 + $0xd0] sm:$0xff]
  %v273 = vld [vmem:[%s1 + $0xd8] sm:$0xff]
  %v274 = vld [vmem:[%s1 + $0xe0] sm:$0xff]
  %v275 = vld [vmem:[%s1 + $0xe8] sm:$0xff]
  %v276 = vld [vmem:[%s1 + $0xf0] sm:$0xff]
  %v277 = vld [vmem:[%s1 + $0xf8] sm:$0xff]
  %v278 = vld [vmem:[%s1 + $0x100] sm:$0xff]
  %v279 = vld [vmem:[%s1 + $0x108] sm:$0xff]
  %v280 = vld [vmem:[%s1 + $0x110] sm:$0xff]
  %v281 = vld [vmem:[%s1 + $0x118] sm:$0xff]
  %v282 = vld [vmem:[%s1 + $0x120] sm:$0xff]
  %v283 = vld [vmem:[%s1 + $0x128] sm:$0xff]
  %v284 = vld [vmem:[%s1 + $0x130] sm:$0xff]
  %v285 = vld [vmem:[%s1 + $0x138] sm:$0xff]
  %v286 = vld [vmem:[%s1 + $0x140] sm:$0xff]
  %v287 = vld [vmem:[%s1 + $0x148] sm:$0xff]
  %v288 = vld [vmem:[%s1 + $0x150] sm:$0xff]
  %v289 = vld [vmem:[%s1 + $0x158] sm:$0xff]
  %v290 = vld [vmem:[%s1 + $0x160] sm:$0xff]
  %v291 = vld [vmem:[%s1 + $0x168] sm:$0xff]
  %v292 = vld [vmem:[%s1 + $0x170] sm:$0xff]
  %v293 = vld [vmem:[%s1 + $0x178] sm:$0xff]
  %v294 = vld [vmem:[%s1 + $0x180] sm:$0xff]
  %v295 = vld [vmem:[%s1 + $0x188] sm:$0xff]
  %v296 = vld [vmem:[%s1 + $0x190] sm:$0xff]
  %v297 = vld [vmem:[%s1 + $0x198] sm:$0xff]
  %v298 = vld [vmem:[%s1 + $0x1a0] sm:$0xff]
  %v299 = vld [vmem:[%s1 + $0x1a8] sm:$0xff]
  %v300 = vld [vmem:[%s1 + $0x1b0] sm:$0xff]
  %v301 = vld [vmem:[%s1 + $0x1b8] sm:$0xff]
  %v302 = vld [vmem:[%s1 + $0x1c0] sm:$0xff]
  %v303 = vld [vmem:[%s1 + $0x1c8] sm:$0xff]
  %v304 = vld [vmem:[%s1 + $0x1d0] sm:$0xff]
  %v305 = vld [vmem:[%s1 + $0x1d8] sm:$0xff]
  %v306 = vld [vmem:[%s1 + $0x1e0] sm:$0xff]
  %v307 = vld [vmem:[%s1 + $0x1e8] sm:$0xff]
  %v308 = vld [vmem:[%s1 + $0x1f0] sm:$0xff]
  %v309 = vld [vmem:[%s1 + $0x1f8] sm:$0xff]
  %310 = vmatpush.msra.mxu0 %v306
  %311 = vmatpush.msra.mxu0 %v302
  %312 = vmatpush.msra.mxu0 %v298
  %313 = vmatpush.msra.mxu0 %v294
  %314 = vmatpush.msra.mxu0 %v290
  %315 = vmatpush.msra.mxu0 %v286
  %316 = vmatpush.msra.mxu0 %v282
  %317 = vmatpush.msra.mxu0 %v278
  %318 = vmatpush.msra.mxu0 %v274
  %319 = vmatpush.msra.mxu0 %v270
  %320 = vmatpush.msra.mxu0 %v266
  %321 = vmatpush.msra.mxu0 %v262
  %322 = vmatpush.msra.mxu0 %v258
  %323 = vmatpush.msra.mxu0 %v254
  %324 = vmatpush.msra.mxu0 %v250
  %325 = vmatpush.msra.mxu0 %v246
  %326 = vmatmul.f32.gmra.mxu0 %v245
  %v327 = vpop.f32.mrf.mxu0
  %v328 = vadd.f32 0.0, %v327
  %329 = vdwg.mxu0
  %330 = vmatpush.msra.mxu0 %v307
  %331 = vmatpush.msra.mxu0 %v303
  %332 = vmatpush.msra.mxu0 %v299
  %333 = vmatpush.msra.mxu0 %v295
  %334 = vmatpush.msra.mxu0 %v291
  %335 = vmatpush.msra.mxu0 %v287
  %336 = vmatpush.msra.mxu0 %v283
  %337 = vmatpush.msra.mxu0 %v279
  %338 = vmatpush.msra.mxu0 %v275
  %339 = vmatpush.msra.mxu0 %v271
  %340 = vmatpush.msra.mxu0 %v267
  %341 = vmatpush.msra.mxu0 %v263
  %342 = vmatpush.msra.mxu0 %v259
  %343 = vmatpush.msra.mxu0 %v255
  %344 = vmatpush.msra.mxu0 %v251
  %345 = vmatpush.msra.mxu0 %v247
  %346 = vmatmul.f32.gmra.mxu0 %v245
  %v347 = vpop.f32.mrf.mxu0
  %v348 = vadd.f32 0.0, %v347
  %349 = vdwg.mxu0
  %350 = vmatpush.msra.mxu0 %v308
  %351 = vmatpush.msra.mxu0 %v304
  %352 = vmatpush.msra.mxu0 %v300
  %353 = vmatpush.msra.mxu0 %v296
  %354 = vmatpush.msra.mxu0 %v292
  %355 = vmatpush.msra.mxu0 %v288
  %356 = vmatpush.msra.mxu0 %v284
  %357 = vmatpush.msra.mxu0 %v280
  %358 = vmatpush.msra.mxu0 %v276
  %359 = vmatpush.msra.mxu0 %v272
  %360 = vmatpush.msra.mxu0 %v268
  %361 = vmatpush.msra.mxu0 %v264
  %362 = vmatpush.msra.mxu0 %v260
  %363 = vmatpush.msra.mxu0 %v256
  %364 = vmatpush.msra.mxu0 %v252
  %365 = vmatpush.msra.mxu0 %v248
  %366 = vmatmul.f32.gmra.mxu0 %v245
  %v367 = vpop.f32.mrf.mxu0
  %v368 = vadd.f32 0.0, %v367
  %369 = vdwg.mxu0
  %370 = vmatpush.msra.mxu0 %v309
  %371 = vmatpush.msra.mxu0 %v305
  %372 = vmatpush.msra.mxu0 %v301
  %373 = vmatpush.msra.mxu0 %v297
  %374 = vmatpush.msra.mxu0 %v293
  %375 = vmatpush.msra.mxu0 %v289
  %376 = vmatpush.msra.mxu0 %v285
  %377 = vmatpush.msra.mxu0 %v281
  %378 = vmatpush.msra.mxu0 %v277
  %379 = vmatpush.msra.mxu0 %v273
  %380 = vmatpush.msra.mxu0 %v269
  %381 = vmatpush.msra.mxu0 %v265
  %382 = vmatpush.msra.mxu0 %v261
  %383 = vmatpush.msra.mxu0 %v257
  %384 = vmatpush.msra.mxu0 %v253
  %385 = vmatpush.msra.mxu0 %v249
  %386 = vmatmul.f32.gmra.mxu0 %v245
  %v387 = vpop.f32.mrf.mxu0
  %v388 = vadd.f32 0.0, %v387
  %389 = vdwg.mxu0
  %v390 = vadd.f32 %v241, %v328
  %v391 = vadd.f32 %v242, %v348
  %v392 = vadd.f32 %v243, %v368
  %v393 = vadd.f32 %v244, %v388
  %v394 = vxor.u32 %v390, 2147483648
  %v395 = vxor.u32 %v391, 2147483648
  %v396 = vxor.u32 %v392, 2147483648
  %v397 = vmul.f32 %v394, 1.442695
  %v398 = vpow.pop %v397
  %v399 = vmul.f32 %v395, 1.442695
  %v400 = vpow.pop %v399
  %v401 = vmul.f32 %v396, 1.442695
  %v402 = vpow.pop %v401
  %v403 = vadd.f32 %v398, 1.0
  %v404 = vadd.f32 %v400, 1.0
  %v405 = vadd.f32 %v402, 1.0
  %v406 = vrcp.pop %v403
  %v407 = vmul.f32 %v403, %v406
  %v408 = vsub.f32 1.0, %v407
  %v409 = vmul.f32 %v406, %v408
  %v410 = vadd.f32 %v406, %v409
  %vm411 = vweird.f32 %v403
  %vm412 = vweird.f32 %v406
  %vm413 = vmor %vm411, %vm412
  %v414 = vsel %vm413, %v406, %v410
  %v415 = vand.u32 2147483647, %v403
  %vm416 = vcmp.eq.f32.partialorder %v415, 8.507059e+37
  %v417 = vand.u32 %v403, 2147483648
  %v418 = vor.u32 1.1754944e-38, %v417
  %v419 = vsel %vm416, %v418, %v414
  %v420 = vmul.f32 1.0, %v419
  %v421 = vrcp.pop %v404
  %v422 = vmul.f32 %v404, %v421
  %v423 = vsub.f32 1.0, %v422
  %v424 = vmul.f32 %v421, %v423
  %v425 = vadd.f32 %v421, %v424
  %vm426 = vweird.f32 %v404
  %vm427 = vweird.f32 %v421
  %vm428 = vmor %vm426, %vm427
  %v429 = vsel %vm428, %v421, %v425
  %v430 = vand.u32 2147483647, %v404
  %vm431 = vcmp.eq.f32.partialorder %v430, 8.507059e+37
  %v432 = vand.u32 %v404, 2147483648
  %v433 = vor.u32 1.1754944e-38, %v432
  %v434 = vsel %vm431, %v433, %v429
  %v435 = vmul.f32 1.0, %v434
  %v436 = vrcp.pop %v405
  %v437 = vmul.f32 %v405, %v436
  %v438 = vsub.f32 1.0, %v437
  %v439 = vmul.f32 %v436, %v438
  %v440 = vadd.f32 %v436, %v439
  %vm441 = vweird.f32 %v405
  %vm442 = vweird.f32 %v436
  %vm443 = vmor %vm441, %vm442
  %v444 = vsel %vm443, %v436, %v440
  %v445 = vand.u32 2147483647, %v405
  %vm446 = vcmp.eq.f32.partialorder %v445, 8.507059e+37
  %v447 = vand.u32 %v405, 2147483648
  %v448 = vor.u32 1.1754944e-38, %v447
  %v449 = vsel %vm446, %v448, %v444
  %v450 = vmul.f32 1.0, %v449
  %v451 = vtanh.pop %v393
  %v452 = vld [vmem:[#allocation3] sm:$0xff]
  %v453 = vmul.f32 %v435, %v452
  %v454 = vmul.f32 %v420, %v451
  %v455 = vadd.f32 %v453, %v454
  %v456 = vtanh.pop %v455
  %v457 = vmul.f32 %v450, %v456
  %458 = vst [vmem:[#allocation3] sm:$0xff] %v455
  %459 = vst [vmem:[#allocation2] sm:$0xff] %v457
  %s460 = scalar_lea.vmem %s2, 8
  %461 = vst [vmem:[%s460] sm:$0xff] %v457
  %s462 = scalar_lea.vmem %s0, 64
  %v463 = vld [vmem:[%s462] sm:$0xff]
  %v464 = vld [vmem:[%s462 + $0x8] sm:$0xff]
  %v465 = vld [vmem:[%s462 + $0x10] sm:$0xff]
  %v466 = vld [vmem:[%s462 + $0x18] sm:$0xff]
  %v467 = vld [vmem:[#allocation2] sm:$0xff]
  %v468 = vld [vmem:[%s1] sm:$0xff]
  %v469 = vld [vmem:[%s1 + $0x8] sm:$0xff]
  %v470 = vld [vmem:[%s1 + $0x10] sm:$0xff]
  %v471 = vld [vmem:[%s1 + $0x18] sm:$0xff]
  %v472 = vld [vmem:[%s1 + $0x20] sm:$0xff]
  %v473 = vld [vmem:[%s1 + $0x28] sm:$0xff]
  %v474 = vld [vmem:[%s1 + $0x30] sm:$0xff]
  %v475 = vld [vmem:[%s1 + $0x38] sm:$0xff]
  %v476 = vld [vmem:[%s1 + $0x40] sm:$0xff]
  %v477 = vld [vmem:[%s1 + $0x48] sm:$0xff]
  %v478 = vld [vmem:[%s1 + $0x50] sm:$0xff]
  %v479 = vld [vmem:[%s1 + $0x58] sm:$0xff]
  %v480 = vld [vmem:[%s1 + $0x60] sm:$0xff]
  %v481 = vld [vmem:[%s1 + $0x68] sm:$0xff]
  %v482 = vld [vmem:[%s1 + $0x70] sm:$0xff]
  %v483 = vld [vmem:[%s1 + $0x78] sm:$0xff]
  %v484 = vld [vmem:[%s1 + $0x80] sm:$0xff]
  %v485 = vld [vmem:[%s1 + $0x88] sm:$0xff]
  %v486 = vld [vmem:[%s1 + $0x90] sm:$0xff]
  %v487 = vld [vmem:[%s1 + $0x98] sm:$0xff]
  %v488 = vld [vmem:[%s1 + $0xa0] sm:$0xff]
  %v489 = vld [vmem:[%s1 + $0xa8] sm:$0xff]
  %v490 = vld [vmem:[%s1 + $0xb0] sm:$0xff]
  %v491 = vld [vmem:[%s1 + $0xb8] sm:$0xff]
  %v492 = vld [vmem:[%s1 + $0xc0] sm:$0xff]
  %v493 = vld [vmem:[%s1 + $0xc8] sm:$0xff]
  %v494 = vld [vmem:[%s1 + $0xd0] sm:$0xff]
  %v495 = vld [vmem:[%s1 + $0xd8] sm:$0xff]
  %v496 = vld [vmem:[%s1 + $0xe0] sm:$0xff]
  %v497 = vld [vmem:[%s1 + $0xe8] sm:$0xff]
  %v498 = vld [vmem:[%s1 + $0xf0] sm:$0xff]
  %v499 = vld [vmem:[%s1 + $0xf8] sm:$0xff]
  %v500 = vld [vmem:[%s1 + $0x100] sm:$0xff]
  %v501 = vld [vmem:[%s1 + $0x108] sm:$0xff]
  %v502 = vld [vmem:[%s1 + $0x110] sm:$0xff]
  %v503 = vld [vmem:[%s1 + $0x118] sm:$0xff]
  %v504 = vld [vmem:[%s1 + $0x120] sm:$0xff]
  %v505 = vld [vmem:[%s1 + $0x128] sm:$0xff]
  %v506 = vld [vmem:[%s1 + $0x130] sm:$0xff]
  %v507 = vld [vmem:[%s1 + $0x138] sm:$0xff]
  %v508 = vld [vmem:[%s1 + $0x140] sm:$0xff]
  %v509 = vld [vmem:[%s1 + $0x148] sm:$0xff]
  %v510 = vld [vmem:[%s1 + $0x150] sm:$0xff]
  %v511 = vld [vmem:[%s1 + $0x158] sm:$0xff]
  %v512 = vld [vmem:[%s1 + $0x160] sm:$0xff]
  %v513 = vld [vmem:[%s1 + $0x168] sm:$0xff]
  %v514 = vld [vmem:[%s1 + $0x170] sm:$0xff]
  %v515 = vld [vmem:[%s1 + $0x178] sm:$0xff]
  %v516 = vld [vmem:[%s1 + $0x180] sm:$0xff]
  %v517 = vld [vmem:[%s1 + $0x188] sm:$0xff]
  %v518 = vld [vmem:[%s1 + $0x190] sm:$0xff]
  %v519 = vld [vmem:[%s1 + $0x198] sm:$0xff]
  %v520 = vld [vmem:[%s1 + $0x1a0] sm:$0xff]
  %v521 = vld [vmem:[%s1 + $0x1a8] sm:$0xff]
  %v522 = vld [vmem:[%s1 + $0x1b0] sm:$0xff]
  %v523 = vld [vmem:[%s1 + $0x1b8] sm:$0xff]
  %v524 = vld [vmem:[%s1 + $0x1c0] sm:$0xff]
  %v525 = vld [vmem:[%s1 + $0x1c8] sm:$0xff]
  %v526 = vld [vmem:[%s1 + $0x1d0] sm:$0xff]
  %v527 = vld [vmem:[%s1 + $0x1d8] sm:$0xff]
  %v528 = vld [vmem:[%s1 + $0x1e0] sm:$0xff]
  %v529 = vld [vmem:[%s1 + $0x1e8] sm:$0xff]
  %v530 = vld [vmem:[%s1 + $0x1f0] sm:$0xff]
  %v531 = vld [vmem:[%s1 + $0x1f8] sm:$0xff]
  %532 = vmatpush.msra.mxu0 %v528
  %533 = vmatpush.msra.mxu0 %v524
  %534 = vmatpush.msra.mxu0 %v520
  %535 = vmatpush.msra.mxu0 %v516
  %536 = vmatpush.msra.mxu0 %v512
  %537 = vmatpush.msra.mxu0 %v508
  %538 = vmatpush.msra.mxu0 %v504
  %539 = vmatpush.msra.mxu0 %v500
  %540 = vmatpush.msra.mxu0 %v496
  %541 = vmatpush.msra.mxu0 %v492
  %542 = vmatpush.msra.mxu0 %v488
  %543 = vmatpush.msra.mxu0 %v484
  %544 = vmatpush.msra.mxu0 %v480
  %545 = vmatpush.msra.mxu0 %v476
  %546 = vmatpush.msra.mxu0 %v472
  %547 = vmatpush.msra.mxu0 %v468
  %548 = vmatmul.f32.gmra.mxu0 %v467
  %v549 = vpop.f32.mrf.mxu0
  %v550 = vadd.f32 0.0, %v549
  %551 = vdwg.mxu0
  %552 = vmatpush.msra.mxu0 %v529
  %553 = vmatpush.msra.mxu0 %v525
  %554 = vmatpush.msra.mxu0 %v521
  %555 = vmatpush.msra.mxu0 %v517
  %556 = vmatpush.msra.mxu0 %v513
  %557 = vmatpush.msra.mxu0 %v509
  %558 = vmatpush.msra.mxu0 %v505
  %559 = vmatpush.msra.mxu0 %v501
  %560 = vmatpush.msra.mxu0 %v497
  %561 = vmatpush.msra.mxu0 %v493
  %562 = vmatpush.msra.mxu0 %v489
  %563 = vmatpush.msra.mxu0 %v485
  %564 = vmatpush.msra.mxu0 %v481
  %565 = vmatpush.msra.mxu0 %v477
  %566 = vmatpush.msra.mxu0 %v473
  %567 = vmatpush.msra.mxu0 %v469
  %568 = vmatmul.f32.gmra.mxu0 %v467
  %v569 = vpop.f32.mrf.mxu0
  %v570 = vadd.f32 0.0, %v569
  %571 = vdwg.mxu0
  %572 = vmatpush.msra.mxu0 %v530
  %573 = vmatpush.msra.mxu0 %v526
  %574 = vmatpush.msra.mxu0 %v522
  %575 = vmatpush.msra.mxu0 %v518
  %576 = vmatpush.msra.mxu0 %v514
  %577 = vmatpush.msra.mxu0 %v510
  %578 = vmatpush.msra.mxu0 %v506
  %579 = vmatpush.msra.mxu0 %v502
  %580 = vmatpush.msra.mxu0 %v498
  %581 = vmatpush.msra.mxu0 %v494
  %582 = vmatpush.msra.mxu0 %v490
  %583 = vmatpush.msra.mxu0 %v486
  %584 = vmatpush.msra.mxu0 %v482
  %585 = vmatpush.msra.mxu0 %v478
  %586 = vmatpush.msra.mxu0 %v474
  %587 = vmatpush.msra.mxu0 %v470
  %588 = vmatmul.f32.gmra.mxu0 %v467
  %v589 = vpop.f32.mrf.mxu0
  %v590 = vadd.f32 0.0, %v589
  %591 = vdwg.mxu0
  %592 = vmatpush.msra.mxu0 %v531
  %593 = vmatpush.msra.mxu0 %v527
  %594 = vmatpush.msra.mxu0 %v523
  %595 = vmatpush.msra.mxu0 %v519
  %596 = vmatpush.msra.mxu0 %v515
  %597 = vmatpush.msra.mxu0 %v511
  %598 = vmatpush.msra.mxu0 %v507
  %599 = vmatpush.msra.mxu0 %v503
  %600 = vmatpush.msra.mxu0 %v499
  %601 = vmatpush.msra.mxu0 %v495
  %602 = vmatpush.msra.mxu0 %v491
  %603 = vmatpush.msra.mxu0 %v487
  %604 = vmatpush.msra.mxu0 %v483
  %605 = vmatpush.msra.mxu0 %v479
  %606 = vmatpush.msra.mxu0 %v475
  %607 = vmatpush.msra.mxu0 %v471
  %608 = vmatmul.f32.gmra.mxu0 %v467
  %v609 = vpop.f32.mrf.mxu0
  %v610 = vadd.f32 0.0, %v609
  %611 = vdwg.mxu0
  %v612 = vadd.f32 %v463, %v550
  %v613 = vadd.f32 %v464, %v570
  %v614 = vadd.f32 %v465, %v590
  %v615 = vadd.f32 %v466, %v610
  %v616 = vxor.u32 %v612, 2147483648
  %v617 = vxor.u32 %v613, 2147483648
  %v618 = vxor.u32 %v614, 2147483648
  %v619 = vmul.f32 %v616, 1.442695
  %v620 = vpow.pop %v619
  %v621 = vmul.f32 %v617, 1.442695
  %v622 = vpow.pop %v621
  %v623 = vmul.f32 %v618, 1.442695
  %v624 = vpow.pop %v623
  %v625 = vadd.f32 %v620, 1.0
  %v626 = vadd.f32 %v622, 1.0
  %v627 = vadd.f32 %v624, 1.0
  %v628 = vrcp.pop %v625
  %v629 = vmul.f32 %v625, %v628
  %v630 = vsub.f32 1.0, %v629
  %v631 = vmul.f32 %v628, %v630
  %v632 = vadd.f32 %v628, %v631
  %vm633 = vweird.f32 %v625
  %vm634 = vweird.f32 %v628
  %vm635 = vmor %vm633, %vm634
  %v636 = vsel %vm635, %v628, %v632
  %v637 = vand.u32 2147483647, %v625
  %vm638 = vcmp.eq.f32.partialorder %v637, 8.507059e+37
  %v639 = vand.u32 %v625, 2147483648
  %v640 = vor.u32 1.1754944e-38, %v639
  %v641 = vsel %vm638, %v640, %v636
  %v642 = vmul.f32 1.0, %v641
  %v643 = vrcp.pop %v626
  %v644 = vmul.f32 %v626, %v643
  %v645 = vsub.f32 1.0, %v644
  %v646 = vmul.f32 %v643, %v645
  %v647 = vadd.f32 %v643, %v646
  %vm648 = vweird.f32 %v626
  %vm649 = vweird.f32 %v643
  %vm650 = vmor %vm648, %vm649
  %v651 = vsel %vm650, %v643, %v647
  %v652 = vand.u32 2147483647, %v626
  %vm653 = vcmp.eq.f32.partialorder %v652, 8.507059e+37
  %v654 = vand.u32 %v626, 2147483648
  %v655 = vor.u32 1.1754944e-38, %v654
  %v656 = vsel %vm653, %v655, %v651
  %v657 = vmul.f32 1.0, %v656
  %v658 = vrcp.pop %v627
  %v659 = vmul.f32 %v627, %v658
  %v660 = vsub.f32 1.0, %v659
  %v661 = vmul.f32 %v658, %v660
  %v662 = vadd.f32 %v658, %v661
  %vm663 = vweird.f32 %v627
  %vm664 = vweird.f32 %v658
  %vm665 = vmor %vm663, %vm664
  %v666 = vsel %vm665, %v658, %v662
  %v667 = vand.u32 2147483647, %v627
  %vm668 = vcmp.eq.f32.partialorder %v667, 8.507059e+37
  %v669 = vand.u32 %v627, 2147483648
  %v670 = vor.u32 1.1754944e-38, %v669
  %v671 = vsel %vm668, %v670, %v666
  %v672 = vmul.f32 1.0, %v671
  %v673 = vtanh.pop %v615
  %v674 = vld [vmem:[#allocation3] sm:$0xff]
  %v675 = vmul.f32 %v657, %v674
  %v676 = vmul.f32 %v642, %v673
  %v677 = vadd.f32 %v675, %v676
  %v678 = vtanh.pop %v677
  %v679 = vmul.f32 %v672, %v678
  %680 = vst [vmem:[#allocation3] sm:$0xff] %v677
  %681 = vst [vmem:[#allocation2] sm:$0xff] %v679
  %s682 = scalar_lea.vmem %s2, 16
  %683 = vst [vmem:[%s682] sm:$0xff] %v679
  %s684 = scalar_lea.vmem %s0, 96
  %v685 = vld [vmem:[%s684] sm:$0xff]
  %v686 = vld [vmem:[%s684 + $0x8] sm:$0xff]
  %v687 = vld [vmem:[%s684 + $0x10] sm:$0xff]
  %v688 = vld [vmem:[%s684 + $0x18] sm:$0xff]
  %v689 = vld [vmem:[#allocation2] sm:$0xff]
  %v690 = vld [vmem:[%s1] sm:$0xff]
  %v691 = vld [vmem:[%s1 + $0x8] sm:$0xff]
  %v692 = vld [vmem:[%s1 + $0x10] sm:$0xff]
  %v693 = vld [vmem:[%s1 + $0x18] sm:$0xff]
  %v694 = vld [vmem:[%s1 + $0x20] sm:$0xff]
  %v695 = vld [vmem:[%s1 + $0x28] sm:$0xff]
  %v696 = vld [vmem:[%s1 + $0x30] sm:$0xff]
  %v697 = vld [vmem:[%s1 + $0x38] sm:$0xff]
  %v698 = vld [vmem:[%s1 + $0x40] sm:$0xff]
  %v699 = vld [vmem:[%s1 + $0x48] sm:$0xff]
  %v700 = vld [vmem:[%s1 + $0x50] sm:$0xff]
  %v701 = vld [vmem:[%s1 + $0x58] sm:$0xff]
  %v702 = vld [vmem:[%s1 + $0x60] sm:$0xff]
  %v703 = vld [vmem:[%s1 + $0x68] sm:$0xff]
  %v704 = vld [vmem:[%s1 + $0x70] sm:$0xff]
  %v705 = vld [vmem:[%s1 + $0x78] sm:$0xff]
  %v706 = vld [vmem:[%s1 + $0x80] sm:$0xff]
  %v707 = vld [vmem:[%s1 + $0x88] sm:$0xff]
  %v708 = vld [vmem:[%s1 + $0x90] sm:$0xff]
  %v709 = vld [vmem:[%s1 + $0x98] sm:$0xff]
  %v710 = vld [vmem:[%s1 + $0xa0] sm:$0xff]
  %v711 = vld [vmem:[%s1 + $0xa8] sm:$0xff]
  %v712 = vld [vmem:[%s1 + $0xb0] sm:$0xff]
  %v713 = vld [vmem:[%s1 + $0xb8] sm:$0xff]
  %v714 = vld [vmem:[%s1 + $0xc0] sm:$0xff]
  %v715 = vld [vmem:[%s1 + $0xc8] sm:$0xff]
  %v716 = vld [vmem:[%s1 + $0xd0] sm:$0xff]
  %v717 = vld [vmem:[%s1 + $0xd8] sm:$0xff]
  %v718 = vld [vmem:[%s1 + $0xe0] sm:$0xff]
  %v719 = vld [vmem:[%s1 + $0xe8] sm:$0xff]
  %v720 = vld [vmem:[%s1 + $0xf0] sm:$0xff]
  %v721 = vld [vmem:[%s1 + $0xf8] sm:$0xff]
  %v722 = vld [vmem:[%s1 + $0x100] sm:$0xff]
  %v723 = vld [vmem:[%s1 + $0x108] sm:$0xff]
  %v724 = vld [vmem:[%s1 + $0x110] sm:$0xff]
  %v725 = vld [vmem:[%s1 + $0x118] sm:$0xff]
  %v726 = vld [vmem:[%s1 + $0x120] sm:$0xff]
  %v727 = vld [vmem:[%s1 + $0x128] sm:$0xff]
  %v728 = vld [vmem:[%s1 + $0x130] sm:$0xff]
  %v729 = vld [vmem:[%s1 + $0x138] sm:$0xff]
  %v730 = vld [vmem:[%s1 + $0x140] sm:$0xff]
  %v731 = vld [vmem:[%s1 + $0x148] sm:$0xff]
  %v732 = vld [vmem:[%s1 + $0x150] sm:$0xff]
  %v733 = vld [vmem:[%s1 + $0x158] sm:$0xff]
  %v734 = vld [vmem:[%s1 + $0x160] sm:$0xff]
  %v735 = vld [vmem:[%s1 + $0x168] sm:$0xff]
  %v736 = vld [vmem:[%s1 + $0x170] sm:$0xff]
  %v737 = vld [vmem:[%s1 + $0x178] sm:$0xff]
  %v738 = vld [vmem:[%s1 + $0x180] sm:$0xff]
  %v739 = vld [vmem:[%s1 + $0x188] sm:$0xff]
  %v740 = vld [vmem:[%s1 + $0x190] sm:$0xff]
  %v741 = vld [vmem:[%s1 + $0x198] sm:$0xff]
  %v742 = vld [vmem:[%s1 + $0x1a0] sm:$0xff]
  %v743 = vld [vmem:[%s1 + $0x1a8] sm:$0xff]
  %v744 = vld [vmem:[%s1 + $0x1b0] sm:$0xff]
  %v745 = vld [vmem:[%s1 + $0x1b8] sm:$0xff]
  %v746 = vld [vmem:[%s1 + $0x1c0] sm:$0xff]
  %v747 = vld [vmem:[%s1 + $0x1c8] sm:$0xff]
  %v748 = vld [vmem:[%s1 + $0x1d0] sm:$0xff]
  %v749 = vld [vmem:[%s1 + $0x1d8] sm:$0xff]
  %v750 = vld [vmem:[%s1 + $0x1e0] sm:$0xff]
  %v751 = vld [vmem:[%s1 + $0x1e8] sm:$0xff]
  %v752 = vld [vmem:[%s1 + $0x1f0] sm:$0xff]
  %v753 = vld [vmem:[%s1 + $0x1f8] sm:$0xff]
  %754 = vmatpush.msra.mxu0 %v750
  %755 = vmatpush.msra.mxu0 %v746
  %756 = vmatpush.msra.mxu0 %v742
  %757 = vmatpush.msra.mxu0 %v738
  %758 = vmatpush.msra.mxu0 %v734
  %759 = vmatpush.msra.mxu0 %v730
  %760 = vmatpush.msra.mxu0 %v726
  %761 = vmatpush.msra.mxu0 %v722
  %762 = vmatpush.msra.mxu0 %v718
  %763 = vmatpush.msra.mxu0 %v714
  %764 = vmatpush.msra.mxu0 %v710
  %765 = vmatpush.msra.mxu0 %v706
  %766 = vmatpush.msra.mxu0 %v702
  %767 = vmatpush.msra.mxu0 %v698
  %768 = vmatpush.msra.mxu0 %v694
  %769 = vmatpush.msra.mxu0 %v690
  %770 = vmatmul.f32.gmra.mxu0 %v689
  %v771 = vpop.f32.mrf.mxu0
  %v772 = vadd.f32 0.0, %v771
  %773 = vdwg.mxu0
  %774 = vmatpush.msra.mxu0 %v751
  %775 = vmatpush.msra.mxu0 %v747
  %776 = vmatpush.msra.mxu0 %v743
  %777 = vmatpush.msra.mxu0 %v739
  %778 = vmatpush.msra.mxu0 %v735
  %779 = vmatpush.msra.mxu0 %v731
  %780 = vmatpush.msra.mxu0 %v727
  %781 = vmatpush.msra.mxu0 %v723
  %782 = vmatpush.msra.mxu0 %v719
  %783 = vmatpush.msra.mxu0 %v715
  %784 = vmatpush.msra.mxu0 %v711
  %785 = vmatpush.msra.mxu0 %v707
  %786 = vmatpush.msra.mxu0 %v703
  %787 = vmatpush.msra.mxu0 %v699
  %788 = vmatpush.msra.mxu0 %v695
  %789 = vmatpush.msra.mxu0 %v691
  %790 = vmatmul.f32.gmra.mxu0 %v689
  %v791 = vpop.f32.mrf.mxu0
  %v792 = vadd.f32 0.0, %v791
  %793 = vdwg.mxu0
  %794 = vmatpush.msra.mxu0 %v752
  %795 = vmatpush.msra.mxu0 %v748
  %796 = vmatpush.msra.mxu0 %v744
  %797 = vmatpush.msra.mxu0 %v740
  %798 = vmatpush.msra.mxu0 %v736
  %799 = vmatpush.msra.mxu0 %v732
  %800 = vmatpush.msra.mxu0 %v728
  %801 = vmatpush.msra.mxu0 %v724
  %802 = vmatpush.msra.mxu0 %v720
  %803 = vmatpush.msra.mxu0 %v716
  %804 = vmatpush.msra.mxu0 %v712
  %805 = vmatpush.msra.mxu0 %v708
  %806 = vmatpush.msra.mxu0 %v704
  %807 = vmatpush.msra.mxu0 %v700
  %808 = vmatpush.msra.mxu0 %v696
  %809 = vmatpush.msra.mxu0 %v692
  %810 = vmatmul.f32.gmra.mxu0 %v689
  %v811 = vpop.f32.mrf.mxu0
  %v812 = vadd.f32 0.0, %v811
  %813 = vdwg.mxu0
  %814 = vmatpush.msra.mxu0 %v753
  %815 = vmatpush.msra.mxu0 %v749
  %816 = vmatpush.msra.mxu0 %v745
  %817 = vmatpush.msra.mxu0 %v741
  %818 = vmatpush.msra.mxu0 %v737
  %819 = vmatpush.msra.mxu0 %v733
  %820 = vmatpush.msra.mxu0 %v729
  %821 = vmatpush.msra.mxu0 %v725
  %822 = vmatpush.msra.mxu0 %v721
  %823 = vmatpush.msra.mxu0 %v717
  %824 = vmatpush.msra.mxu0 %v713
  %825 = vmatpush.msra.mxu0 %v709
  %826 = vmatpush.msra.mxu0 %v705
  %827 = vmatpush.msra.mxu0 %v701
  %828 = vmatpush.msra.mxu0 %v697
  %829 = vmatpush.msra.mxu0 %v693
  %830 = vmatmul.f32.gmra.mxu0 %v689
  %v831 = vpop.f32.mrf.mxu0
  %v832 = vadd.f32 0.0, %v831
  %833 = vdwg.mxu0
  %v834 = vadd.f32 %v685, %v772
  %v835 = vadd.f32 %v686, %v792
  %v836 = vadd.f32 %v687, %v812
  %v837 = vadd.f32 %v688, %v832
  %v838 = vxor.u32 %v834, 2147483648
  %v839 = vxor.u32 %v835, 2147483648
  %v840 = vxor.u32 %v836, 2147483648
  %v841 = vmul.f32 %v838, 1.442695
  %v842 = vpow.pop %v841
  %v843 = vmul.f32 %v839, 1.442695
  %v844 = vpow.pop %v843
  %v845 = vmul.f32 %v840, 1.442695
  %v846 = vpow.pop %v845
  %v847 = vadd.f32 %v842, 1.0
  %v848 = vadd.f32 %v844, 1.0
  %v849 = vadd.f32 %v846, 1.0
  %v850 = vrcp.pop %v847
  %v851 = vmul.f32 %v847, %v850
  %v852 = vsub.f32 1.0, %v851
  %v853 = vmul.f32 %v850, %v852
  %v854 = vadd.f32 %v850, %v853
  %vm855 = vweird.f32 %v847
  %vm856 = vweird.f32 %v850
  %vm857 = vmor %vm855, %vm856
  %v858 = vsel %vm857, %v850, %v854
  %v859 = vand.u32 2147483647, %v847
  %vm860 = vcmp.eq.f32.partialorder %v859, 8.507059e+37
  %v861 = vand.u32 %v847, 2147483648
  %v862 = vor.u32 1.1754944e-38, %v861
  %v863 = vsel %vm860, %v862, %v858
  %v864 = vmul.f32 1.0, %v863
  %v865 = vrcp.pop %v848
  %v866 = vmul.f32 %v848, %v865
  %v867 = vsub.f32 1.0, %v866
  %v868 = vmul.f32 %v865, %v867
  %v869 = vadd.f32 %v865, %v868
  %vm870 = vweird.f32 %v848
  %vm871 = vweird.f32 %v865
  %vm872 = vmor %vm870, %vm871
  %v873 = vsel %vm872, %v865, %v869
  %v874 = vand.u32 2147483647, %v848
  %vm875 = vcmp.eq.f32.partialorder %v874, 8.507059e+37
  %v876 = vand.u32 %v848, 2147483648
  %v877 = vor.u32 1.1754944e-38, %v876
  %v878 = vsel %vm875, %v877, %v873
  %v879 = vmul.f32 1.0, %v878
  %v880 = vrcp.pop %v849
  %v881 = vmul.f32 %v849, %v880
  %v882 = vsub.f32 1.0, %v881
  %v883 = vmul.f32 %v880, %v882
  %v884 = vadd.f32 %v880, %v883
  %vm885 = vweird.f32 %v849
  %vm886 = vweird.f32 %v880
  %vm887 = vmor %vm885, %vm886
  %v888 = vsel %vm887, %v880, %v884
  %v889 = vand.u32 2147483647, %v849
  %vm890 = vcmp.eq.f32.partialorder %v889, 8.507059e+37
  %v891 = vand.u32 %v849, 2147483648
  %v892 = vor.u32 1.1754944e-38, %v891
  %v893 = vsel %vm890, %v892, %v888
  %v894 = vmul.f32 1.0, %v893
  %v895 = vtanh.pop %v837
  %v896 = vld [vmem:[#allocation3] sm:$0xff]
  %v897 = vmul.f32 %v879, %v896
  %v898 = vmul.f32 %v864, %v895
  %v899 = vadd.f32 %v897, %v898
  %v900 = vtanh.pop %v899
  %v901 = vmul.f32 %v894, %v900
  %902 = vst [vmem:[#allocation3] sm:$0xff] %v899
  %903 = vst [vmem:[#allocation2] sm:$0xff] %v901
  %s904 = scalar_lea.vmem %s2, 24
  %905 = vst [vmem:[%s904] sm:$0xff] %v901
  %s906 = scalar_lea.vmem %s0, 128
  %v907 = vld [vmem:[%s906] sm:$0xff]
  %v908 = vld [vmem:[%s906 + $0x8] sm:$0xff]
  %v909 = vld [vmem:[%s906 + $0x10] sm:$0xff]
  %v910 = vld [vmem:[%s906 + $0x18] sm:$0xff]
  %v911 = vld [vmem:[#allocation2] sm:$0xff]
  %v912 = vld [vmem:[%s1] sm:$0xff]
  %v913 = vld [vmem:[%s1 + $0x8] sm:$0xff]
  %v914 = vld [vmem:[%s1 + $0x10] sm:$0xff]
  %v915 = vld [vmem:[%s1 + $0x18] sm:$0xff]
  %v916 = vld [vmem:[%s1 + $0x20] sm:$0xff]
  %v917 = vld [vmem:[%s1 + $0x28] sm:$0xff]
  %v918 = vld [vmem:[%s1 + $0x30] sm:$0xff]
  %v919 = vld [vmem:[%s1 + $0x38] sm:$0xff]
  %v920 = vld [vmem:[%s1 + $0x40] sm:$0xff]
  %v921 = vld [vmem:[%s1 + $0x48] sm:$0xff]
  %v922 = vld [vmem:[%s1 + $0x50] sm:$0xff]
  %v923 = vld [vmem:[%s1 + $0x58] sm:$0xff]
  %v924 = vld [vmem:[%s1 + $0x60] sm:$0xff]
  %v925 = vld [vmem:[%s1 + $0x68] sm:$0xff]
  %v926 = vld [vmem:[%s1 + $0x70] sm:$0xff]
  %v927 = vld [vmem:[%s1 + $0x78] sm:$0xff]
  %v928 = vld [vmem:[%s1 + $0x80] sm:$0xff]
  %v929 = vld [vmem:[%s1 + $0x88] sm:$0xff]
  %v930 = vld [vmem:[%s1 + $0x90] sm:$0xff]
  %v931 = vld [vmem:[%s1 + $0x98] sm:$0xff]
  %v932 = vld [vmem:[%s1 + $0xa0] sm:$0xff]
  %v933 = vld [vmem:[%s1 + $0xa8] sm:$0xff]
  %v934 = vld [vmem:[%s1 + $0xb0] sm:$0xff]
  %v935 = vld [vmem:[%s1 + $0xb8] sm:$0xff]
  %v936 = vld [vmem:[%s1 + $0xc0] sm:$0xff]
  %v937 = vld [vmem:[%s1 + $0xc8] sm:$0xff]
  %v938 = vld [vmem:[%s1 + $0xd0] sm:$0xff]
  %v939 = vld [vmem:[%s1 + $0xd8] sm:$0xff]
  %v940 = vld [vmem:[%s1 + $0xe0] sm:$0xff]
  %v941 = vld [vmem:[%s1 + $0xe8] sm:$0xff]
  %v942 = vld [vmem:[%s1 + $0xf0] sm:$0xff]
  %v943 = vld [vmem:[%s1 + $0xf8] sm:$0xff]
  %v944 = vld [vmem:[%s1 + $0x100] sm:$0xff]
  %v945 = vld [vmem:[%s1 + $0x108] sm:$0xff]
  %v946 = vld [vmem:[%s1 + $0x110] sm:$0xff]
  %v947 = vld [vmem:[%s1 + $0x118] sm:$0xff]
  %v948 = vld [vmem:[%s1 + $0x120] sm:$0xff]
  %v949 = vld [vmem:[%s1 + $0x128] sm:$0xff]
  %v950 = vld [vmem:[%s1 + $0x130] sm:$0xff]
  %v951 = vld [vmem:[%s1 + $0x138] sm:$0xff]
  %v952 = vld [vmem:[%s1 + $0x140] sm:$0xff]
  %v953 = vld [vmem:[%s1 + $0x148] sm:$0xff]
  %v954 = vld [vmem:[%s1 + $0x150] sm:$0xff]
  %v955 = vld [vmem:[%s1 + $0x158] sm:$0xff]
  %v956 = vld [vmem:[%s1 + $0x160] sm:$0xff]
  %v957 = vld [vmem:[%s1 + $0x168] sm:$0xff]
  %v958 = vld [vmem:[%s1 + $0x170] sm:$0xff]
  %v959 = vld [vmem:[%s1 + $0x178] sm:$0xff]
  %v960 = vld [vmem:[%s1 + $0x180] sm:$0xff]
  %v961 = vld [vmem:[%s1 + $0x188] sm:$0xff]
  %v962 = vld [vmem:[%s1 + $0x190] sm:$0xff]
  %v963 = vld [vmem:[%s1 + $0x198] sm:$0xff]
  %v964 = vld [vmem:[%s1 + $0x1a0] sm:$0xff]
  %v965 = vld [vmem:[%s1 + $0x1a8] sm:$0xff]
  %v966 = vld [vmem:[%s1 + $0x1b0] sm:$0xff]
  %v967 = vld [vmem:[%s1 + $0x1b8] sm:$0xff]
  %v968 = vld [vmem:[%s1 + $0x1c0] sm:$0xff]
  %v969 = vld [vmem:[%s1 + $0x1c8] sm:$0xff]
  %v970 = vld [vmem:[%s1 + $0x1d0] sm:$0xff]
  %v971 = vld [vmem:[%s1 + $0x1d8] sm:$0xff]
  %v972 = vld [vmem:[%s1 + $0x1e0] sm:$0xff]
  %v973 = vld [vmem:[%s1 + $0x1e8] sm:$0xff]
  %v974 = vld [vmem:[%s1 + $0x1f0] sm:$0xff]
  %v975 = vld [vmem:[%s1 + $0x1f8] sm:$0xff]
  %976 = vmatpush.msra.mxu0 %v972
  %977 = vmatpush.msra.mxu0 %v968
  %978 = vmatpush.msra.mxu0 %v964
  %979 = vmatpush.msra.mxu0 %v960
  %980 = vmatpush.msra.mxu0 %v956
  %981 = vmatpush.msra.mxu0 %v952
  %982 = vmatpush.msra.mxu0 %v948
  %983 = vmatpush.msra.mxu0 %v944
  %984 = vmatpush.msra.mxu0 %v940
  %985 = vmatpush.msra.mxu0 %v936
  %986 = vmatpush.msra.mxu0 %v932
  %987 = vmatpush.msra.mxu0 %v928
  %988 = vmatpush.msra.mxu0 %v924
  %989 = vmatpush.msra.mxu0 %v920
  %990 = vmatpush.msra.mxu0 %v916
  %991 = vmatpush.msra.mxu0 %v912
  %992 = vmatmul.f32.gmra.mxu0 %v911
  %v993 = vpop.f32.mrf.mxu0
  %v994 = vadd.f32 0.0, %v993
  %995 = vdwg.mxu0
  %996 = vmatpush.msra.mxu0 %v973
  %997 = vmatpush.msra.mxu0 %v969
  %998 = vmatpush.msra.mxu0 %v965
  %999 = vmatpush.msra.mxu0 %v961
  %1000 = vmatpush.msra.mxu0 %v957
  %1001 = vmatpush.msra.mxu0 %v953
  %1002 = vmatpush.msra.mxu0 %v949
  %1003 = vmatpush.msra.mxu0 %v945
  %1004 = vmatpush.msra.mxu0 %v941
  %1005 = vmatpush.msra.mxu0 %v937
  %1006 = vmatpush.msra.mxu0 %v933
  %1007 = vmatpush.msra.mxu0 %v929
  %1008 = vmatpush.msra.mxu0 %v925
  %1009 = vmatpush.msra.mxu0 %v921
  %1010 = vmatpush.msra.mxu0 %v917
  %1011 = vmatpush.msra.mxu0 %v913
  %1012 = vmatmul.f32.gmra.mxu0 %v911
  %v1013 = vpop.f32.mrf.mxu0
  %v1014 = vadd.f32 0.0, %v1013
  %1015 = vdwg.mxu0
  %1016 = vmatpush.msra.mxu0 %v974
  %1017 = vmatpush.msra.mxu0 %v970
  %1018 = vmatpush.msra.mxu0 %v966
  %1019 = vmatpush.msra.mxu0 %v962
  %1020 = vmatpush.msra.mxu0 %v958
  %1021 = vmatpush.msra.mxu0 %v954
  %1022 = vmatpush.msra.mxu0 %v950
  %1023 = vmatpush.msra.mxu0 %v946
  %1024 = vmatpush.msra.mxu0 %v942
  %1025 = vmatpush.msra.mxu0 %v938
  %1026 = vmatpush.msra.mxu0 %v934
  %1027 = vmatpush.msra.mxu0 %v930
  %1028 = vmatpush.msra.mxu0 %v926
  %1029 = vmatpush.msra.mxu0 %v922
  %1030 = vmatpush.msra.mxu0 %v918
  %1031 = vmatpush.msra.mxu0 %v914
  %1032 = vmatmul.f32.gmra.mxu0 %v911
  %v1033 = vpop.f32.mrf.mxu0
  %v1034 = vadd.f32 0.0, %v1033
  %1035 = vdwg.mxu0
  %1036 = vmatpush.msra.mxu0 %v975
  %1037 = vmatpush.msra.mxu0 %v971
  %1038 = vmatpush.msra.mxu0 %v967
  %1039 = vmatpush.msra.mxu0 %v963
  %1040 = vmatpush.msra.mxu0 %v959
  %1041 = vmatpush.msra.mxu0 %v955
  %1042 = vmatpush.msra.mxu0 %v951
  %1043 = vmatpush.msra.mxu0 %v947
  %1044 = vmatpush.msra.mxu0 %v943
  %1045 = vmatpush.msra.mxu0 %v939
  %1046 = vmatpush.msra.mxu0 %v935
  %1047 = vmatpush.msra.mxu0 %v931
  %1048 = vmatpush.msra.mxu0 %v927
  %1049 = vmatpush.msra.mxu0 %v923
  %1050 = vmatpush.msra.mxu0 %v919
  %1051 = vmatpush.msra.mxu0 %v915
  %1052 = vmatmul.f32.gmra.mxu0 %v911
  %v1053 = vpop.f32.mrf.mxu0
  %v1054 = vadd.f32 0.0, %v1053
  %1055 = vdwg.mxu0
  %v1056 = vadd.f32 %v907, %v994
  %v1057 = vadd.f32 %v908, %v1014
  %v1058 = vadd.f32 %v909, %v1034
  %v1059 = vadd.f32 %v910, %v1054
  %v1060 = vxor.u32 %v1056, 2147483648
  %v1061 = vxor.u32 %v1057, 2147483648
  %v1062 = vxor.u32 %v1058, 2147483648
  %v1063 = vmul.f32 %v1060, 1.442695
  %v1064 = vpow.pop %v1063
  %v1065 = vmul.f32 %v1061, 1.442695
  %v1066 = vpow.pop %v1065
  %v1067 = vmul.f32 %v1062, 1.442695
  %v1068 = vpow.pop %v1067
  %v1069 = vadd.f32 %v1064, 1.0
  %v1070 = vadd.f32 %v1066, 1.0
  %v1071 = vadd.f32 %v1068, 1.0
  %v1072 = vrcp.pop %v1069
  %v1073 = vmul.f32 %v1069, %v1072
  %v1074 = vsub.f32 1.0, %v1073
  %v1075 = vmul.f32 %v1072, %v1074
  %v1076 = vadd.f32 %v1072, %v1075
  %vm1077 = vweird.f32 %v1069
  %vm1078 = vweird.f32 %v1072
  %vm1079 = vmor %vm1077, %vm1078
  %v1080 = vsel %vm1079, %v1072, %v1076
  %v1081 = vand.u32 2147483647, %v1069
  %vm1082 = vcmp.eq.f32.partialorder %v1081, 8.507059e+37
  %v1083 = vand.u32 %v1069, 2147483648
  %v1084 = vor.u32 1.1754944e-38, %v1083
  %v1085 = vsel %vm1082, %v1084, %v1080
  %v1086 = vmul.f32 1.0, %v1085
  %v1087 = vrcp.pop %v1070
  %v1088 = vmul.f32 %v1070, %v1087
  %v1089 = vsub.f32 1.0, %v1088
  %v1090 = vmul.f32 %v1087, %v1089
  %v1091 = vadd.f32 %v1087, %v1090
  %vm1092 = vweird.f32 %v1070
  %vm1093 = vweird.f32 %v1087
  %vm1094 = vmor %vm1092, %vm1093
  %v1095 = vsel %vm1094, %v1087, %v1091
  %v1096 = vand.u32 2147483647, %v1070
  %vm1097 = vcmp.eq.f32.partialorder %v1096, 8.507059e+37
  %v1098 = vand.u32 %v1070, 2147483648
  %v1099 = vor.u32 1.1754944e-38, %v1098
  %v1100 = vsel %vm1097, %v1099, %v1095
  %v1101 = vmul.f32 1.0, %v1100
  %v1102 = vrcp.pop %v1071
  %v1103 = vmul.f32 %v1071, %v1102
  %v1104 = vsub.f32 1.0, %v1103
  %v1105 = vmul.f32 %v1102, %v1104
  %v1106 = vadd.f32 %v1102, %v1105
  %vm1107 = vweird.f32 %v1071
  %vm1108 = vweird.f32 %v1102
  %vm1109 = vmor %vm1107, %vm1108
  %v1110 = vsel %vm1109, %v1102, %v1106
  %v1111 = vand.u32 2147483647, %v1071
  %vm1112 = vcmp.eq.f32.partialorder %v1111, 8.507059e+37
  %v1113 = vand.u32 %v1071, 2147483648
  %v1114 = vor.u32 1.1754944e-38, %v1113
  %v1115 = vsel %vm1112, %v1114, %v1110
  %v1116 = vmul.f32 1.0, %v1115
  %v1117 = vtanh.pop %v1059
  %v1118 = vld [vmem:[#allocation3] sm:$0xff]
  %v1119 = vmul.f32 %v1101, %v1118
  %v1120 = vmul.f32 %v1086, %v1117
  %v1121 = vadd.f32 %v1119, %v1120
  %v1122 = vtanh.pop %v1121
  %v1123 = vmul.f32 %v1116, %v1122
  %1124 = vst [vmem:[#allocation3] sm:$0xff] %v1121
  %1125 = vst [vmem:[#allocation2] sm:$0xff] %v1123
  %s1126 = scalar_lea.vmem %s2, 32
  %1127 = vst [vmem:[%s1126] sm:$0xff] %v1123
  %s1128 = scalar_lea.vmem %s0, 160
  %v1129 = vld [vmem:[%s1128] sm:$0xff]
  %v1130 = vld [vmem:[%s1128 + $0x8] sm:$0xff]
  %v1131 = vld [vmem:[%s1128 + $0x10] sm:$0xff]
  %v1132 = vld [vmem:[%s1128 + $0x18] sm:$0xff]
  %v1133 = vld [vmem:[#allocation2] sm:$0xff]
  %v1134 = vld [vmem:[%s1] sm:$0xff]
  %v1135 = vld [vmem:[%s1 + $0x8] sm:$0xff]
  %v1136 = vld [vmem:[%s1 + $0x10] sm:$0xff]
  %v1137 = vld [vmem:[%s1 + $0x18] sm:$0xff]
  %v1138 = vld [vmem:[%s1 + $0x20] sm:$0xff]
  %v1139 = vld [vmem:[%s1 + $0x28] sm:$0xff]
  %v1140 = vld [vmem:[%s1 + $0x30] sm:$0xff]
  %v1141 = vld [vmem:[%s1 + $0x38] sm:$0xff]
  %v1142 = vld [vmem:[%s1 + $0x40] sm:$0xff]
  %v1143 = vld [vmem:[%s1 + $0x48] sm:$0xff]
  %v1144 = vld [vmem:[%s1 + $0x50] sm:$0xff]
  %v1145 = vld [vmem:[%s1 + $0x58] sm:$0xff]
  %v1146 = vld [vmem:[%s1 + $0x60] sm:$0xff]
  %v1147 = vld [vmem:[%s1 + $0x68] sm:$0xff]
  %v1148 = vld [vmem:[%s1 + $0x70] sm:$0xff]
  %v1149 = vld [vmem:[%s1 + $0x78] sm:$0xff]
  %v1150 = vld [vmem:[%s1 + $0x80] sm:$0xff]
  %v1151 = vld [vmem:[%s1 + $0x88] sm:$0xff]
  %v1152 = vld [vmem:[%s1 + $0x90] sm:$0xff]
  %v1153 = vld [vmem:[%s1 + $0x98] sm:$0xff]
  %v1154 = vld [vmem:[%s1 + $0xa0] sm:$0xff]
  %v1155 = vld [vmem:[%s1 + $0xa8] sm:$0xff]
  %v1156 = vld [vmem:[%s1 + $0xb0] sm:$0xff]
  %v1157 = vld [vmem:[%s1 + $0xb8] sm:$0xff]
  %v1158 = vld [vmem:[%s1 + $0xc0] sm:$0xff]
  %v1159 = vld [vmem:[%s1 + $0xc8] sm:$0xff]
  %v1160 = vld [vmem:[%s1 + $0xd0] sm:$0xff]
  %v1161 = vld [vmem:[%s1 + $0xd8] sm:$0xff]
  %v1162 = vld [vmem:[%s1 + $0xe0] sm:$0xff]
  %v1163 = vld [vmem:[%s1 + $0xe8] sm:$0xff]
  %v1164 = vld [vmem:[%s1 + $0xf0] sm:$0xff]
  %v1165 = vld [vmem:[%s1 + $0xf8] sm:$0xff]
  %v1166 = vld [vmem:[%s1 + $0x100] sm:$0xff]
  %v1167 = vld [vmem:[%s1 + $0x108] sm:$0xff]
  %v1168 = vld [vmem:[%s1 + $0x110] sm:$0xff]
  %v1169 = vld [vmem:[%s1 + $0x118] sm:$0xff]
  %v1170 = vld [vmem:[%s1 + $0x120] sm:$0xff]
  %v1171 = vld [vmem:[%s1 + $0x128] sm:$0xff]
  %v1172 = vld [vmem:[%s1 + $0x130] sm:$0xff]
  %v1173 = vld [vmem:[%s1 + $0x138] sm:$0xff]
  %v1174 = vld [vmem:[%s1 + $0x140] sm:$0xff]
  %v1175 = vld [vmem:[%s1 + $0x148] sm:$0xff]
  %v1176 = vld [vmem:[%s1 + $0x150] sm:$0xff]
  %v1177 = vld [vmem:[%s1 + $0x158] sm:$0xff]
  %v1178 = vld [vmem:[%s1 + $0x160] sm:$0xff]
  %v1179 = vld [vmem:[%s1 + $0x168] sm:$0xff]
  %v1180 = vld [vmem:[%s1 + $0x170] sm:$0xff]
  %v1181 = vld [vmem:[%s1 + $0x178] sm:$0xff]
  %v1182 = vld [vmem:[%s1 + $0x180] sm:$0xff]
  %v1183 = vld [vmem:[%s1 + $0x188] sm:$0xff]
  %v1184 = vld [vmem:[%s1 + $0x190] sm:$0xff]
  %v1185 = vld [vmem:[%s1 + $0x198] sm:$0xff]
  %v1186 = vld [vmem:[%s1 + $0x1a0] sm:$0xff]
  %v1187 = vld [vmem:[%s1 + $0x1a8] sm:$0xff]
  %v1188 = vld [vmem:[%s1 + $0x1b0] sm:$0xff]
  %v1189 = vld [vmem:[%s1 + $0x1b8] sm:$0xff]
  %v1190 = vld [vmem:[%s1 + $0x1c0] sm:$0xff]
  %v1191 = vld [vmem:[%s1 + $0x1c8] sm:$0xff]
  %v1192 = vld [vmem:[%s1 + $0x1d0] sm:$0xff]
  %v1193 = vld [vmem:[%s1 + $0x1d8] sm:$0xff]
  %v1194 = vld [vmem:[%s1 + $0x1e0] sm:$0xff]
  %v1195 = vld [vmem:[%s1 + $0x1e8] sm:$0xff]
  %v1196 = vld [vmem:[%s1 + $0x1f0] sm:$0xff]
  %v1197 = vld [vmem:[%s1 + $0x1f8] sm:$0xff]
  %1198 = vmatpush.msra.mxu0 %v1194
  %1199 = vmatpush.msra.mxu0 %v1190
  %1200 = vmatpush.msra.mxu0 %v1186
  %1201 = vmatpush.msra.mxu0 %v1182
  %1202 = vmatpush.msra.mxu0 %v1178
  %1203 = vmatpush.msra.mxu0 %v1174
  %1204 = vmatpush.msra.mxu0 %v1170
  %1205 = vmatpush.msra.mxu0 %v1166
  %1206 = vmatpush.msra.mxu0 %v1162
  %1207 = vmatpush.msra.mxu0 %v1158
  %1208 = vmatpush.msra.mxu0 %v1154
  %1209 = vmatpush.msra.mxu0 %v1150
  %1210 = vmatpush.msra.mxu0 %v1146
  %1211 = vmatpush.msra.mxu0 %v1142
  %1212 = vmatpush.msra.mxu0 %v1138
  %1213 = vmatpush.msra.mxu0 %v1134
  %1214 = vmatmul.f32.gmra.mxu0 %v1133
  %v1215 = vpop.f32.mrf.mxu0
  %v1216 = vadd.f32 0.0, %v1215
  %1217 = vdwg.mxu0
  %1218 = vmatpush.msra.mxu0 %v1195
  %1219 = vmatpush.msra.mxu0 %v1191
  %1220 = vmatpush.msra.mxu0 %v1187
  %1221 = vmatpush.msra.mxu0 %v1183
  %1222 = vmatpush.msra.mxu0 %v1179
  %1223 = vmatpush.msra.mxu0 %v1175
  %1224 = vmatpush.msra.mxu0 %v1171
  %1225 = vmatpush.msra.mxu0 %v1167
  %1226 = vmatpush.msra.mxu0 %v1163
  %1227 = vmatpush.msra.mxu0 %v1159
  %1228 = vmatpush.msra.mxu0 %v1155
  %1229 = vmatpush.msra.mxu0 %v1151
  %1230 = vmatpush.msra.mxu0 %v1147
  %1231 = vmatpush.msra.mxu0 %v1143
  %1232 = vmatpush.msra.mxu0 %v1139
  %1233 = vmatpush.msra.mxu0 %v1135
  %1234 = vmatmul.f32.gmra.mxu0 %v1133
  %v1235 = vpop.f32.mrf.mxu0
  %v1236 = vadd.f32 0.0, %v1235
  %1237 = vdwg.mxu0
  %1238 = vmatpush.msra.mxu0 %v1196
  %1239 = vmatpush.msra.mxu0 %v1192
  %1240 = vmatpush.msra.mxu0 %v1188
  %1241 = vmatpush.msra.mxu0 %v1184
  %1242 = vmatpush.msra.mxu0 %v1180
  %1243 = vmatpush.msra.mxu0 %v1176
  %1244 = vmatpush.msra.mxu0 %v1172
  %1245 = vmatpush.msra.mxu0 %v1168
  %1246 = vmatpush.msra.mxu0 %v1164
  %1247 = vmatpush.msra.mxu0 %v1160
  %1248 = vmatpush.msra.mxu0 %v1156
  %1249 = vmatpush.msra.mxu0 %v1152
  %1250 = vmatpush.msra.mxu0 %v1148
  %1251 = vmatpush.msra.mxu0 %v1144
  %1252 = vmatpush.msra.mxu0 %v1140
  %1253 = vmatpush.msra.mxu0 %v1136
  %1254 = vmatmul.f32.gmra.mxu0 %v1133
  %v1255 = vpop.f32.mrf.mxu0
  %v1256 = vadd.f32 0.0, %v1255
  %1257 = vdwg.mxu0
  %1258 = vmatpush.msra.mxu0 %v1197
  %1259 = vmatpush.msra.mxu0 %v1193
  %1260 = vmatpush.msra.mxu0 %v1189
  %1261 = vmatpush.msra.mxu0 %v1185
  %1262 = vmatpush.msra.mxu0 %v1181
  %1263 = vmatpush.msra.mxu0 %v1177
  %1264 = vmatpush.msra.mxu0 %v1173
  %1265 = vmatpush.msra.mxu0 %v1169
  %1266 = vmatpush.msra.mxu0 %v1165
  %1267 = vmatpush.msra.mxu0 %v1161
  %1268 = vmatpush.msra.mxu0 %v1157
  %1269 = vmatpush.msra.mxu0 %v1153
  %1270 = vmatpush.msra.mxu0 %v1149
  %1271 = vmatpush.msra.mxu0 %v1145
  %1272 = vmatpush.msra.mxu0 %v1141
  %1273 = vmatpush.msra.mxu0 %v1137
  %1274 = vmatmul.f32.gmra.mxu0 %v1133
  %v1275 = vpop.f32.mrf.mxu0
  %v1276 = vadd.f32 0.0, %v1275
  %1277 = vdwg.mxu0
  %v1278 = vadd.f32 %v1129, %v1216
  %v1279 = vadd.f32 %v1130, %v1236
  %v1280 = vadd.f32 %v1131, %v1256
  %v1281 = vadd.f32 %v1132, %v1276
  %v1282 = vxor.u32 %v1278, 2147483648
  %v1283 = vxor.u32 %v1279, 2147483648
  %v1284 = vxor.u32 %v1280, 2147483648
  %v1285 = vmul.f32 %v1282, 1.442695
  %v1286 = vpow.pop %v1285
  %v1287 = vmul.f32 %v1283, 1.442695
  %v1288 = vpow.pop %v1287
  %v1289 = vmul.f32 %v1284, 1.442695
  %v1290 = vpow.pop %v1289
  %v1291 = vadd.f32 %v1286, 1.0
  %v1292 = vadd.f32 %v1288, 1.0
  %v1293 = vadd.f32 %v1290, 1.0
  %v1294 = vrcp.pop %v1291
  %v1295 = vmul.f32 %v1291, %v1294
  %v1296 = vsub.f32 1.0, %v1295
  %v1297 = vmul.f32 %v1294, %v1296
  %v1298 = vadd.f32 %v1294, %v1297
  %vm1299 = vweird.f32 %v1291
  %vm1300 = vweird.f32 %v1294
  %vm1301 = vmor %vm1299, %vm1300
  %v1302 = vsel %vm1301, %v1294, %v1298
  %v1303 = vand.u32 2147483647, %v1291
  %vm1304 = vcmp.eq.f32.partialorder %v1303, 8.507059e+37
  %v1305 = vand.u32 %v1291, 2147483648
  %v1306 = vor.u32 1.1754944e-38, %v1305
  %v1307 = vsel %vm1304, %v1306, %v1302
  %v1308 = vmul.f32 1.0, %v1307
  %v1309 = vrcp.pop %v1292
  %v1310 = vmul.f32 %v1292, %v1309
  %v1311 = vsub.f32 1.0, %v1310
  %v1312 = vmul.f32 %v1309, %v1311
  %v1313 = vadd.f32 %v1309, %v1312
  %vm1314 = vweird.f32 %v1292
  %vm1315 = vweird.f32 %v1309
  %vm1316 = vmor %vm1314, %vm1315
  %v1317 = vsel %vm1316, %v1309, %v1313
  %v1318 = vand.u32 2147483647, %v1292
  %vm1319 = vcmp.eq.f32.partialorder %v1318, 8.507059e+37
  %v1320 = vand.u32 %v1292, 2147483648
  %v1321 = vor.u32 1.1754944e-38, %v1320
  %v1322 = vsel %vm1319, %v1321, %v1317
  %v1323 = vmul.f32 1.0, %v1322
  %v1324 = vrcp.pop %v1293
  %v1325 = vmul.f32 %v1293, %v1324
  %v1326 = vsub.f32 1.0, %v1325
  %v1327 = vmul.f32 %v1324, %v1326
  %v1328 = vadd.f32 %v1324, %v1327
  %vm1329 = vweird.f32 %v1293
  %vm1330 = vweird.f32 %v1324
  %vm1331 = vmor %vm1329, %vm1330
  %v1332 = vsel %vm1331, %v1324, %v1328
  %v1333 = vand.u32 2147483647, %v1293
  %vm1334 = vcmp.eq.f32.partialorder %v1333, 8.507059e+37
  %v1335 = vand.u32 %v1293, 2147483648
  %v1336 = vor.u32 1.1754944e-38, %v1335
  %v1337 = vsel %vm1334, %v1336, %v1332
  %v1338 = vmul.f32 1.0, %v1337
  %v1339 = vtanh.pop %v1281
  %v1340 = vld [vmem:[#allocation3] sm:$0xff]
  %v1341 = vmul.f32 %v1323, %v1340
  %v1342 = vmul.f32 %v1308, %v1339
  %v1343 = vadd.f32 %v1341, %v1342
  %v1344 = vtanh.pop %v1343
  %v1345 = vmul.f32 %v1338, %v1344
  %1346 = vst [vmem:[#allocation3] sm:$0xff] %v1343
  %1347 = vst [vmem:[#allocation2] sm:$0xff] %v1345
  %s1348 = scalar_lea.vmem %s2, 40
  %1349 = vst [vmem:[%s1348] sm:$0xff] %v1345
  %s1350 = scalar_lea.vmem %s0, 192
  %v1351 = vld [vmem:[%s1350] sm:$0xff]
  %v1352 = vld [vmem:[%s1350 + $0x8] sm:$0xff]
  %v1353 = vld [vmem:[%s1350 + $0x10] sm:$0xff]
  %v1354 = vld [vmem:[%s1350 + $0x18] sm:$0xff]
  %v1355 = vld [vmem:[#allocation2] sm:$0xff]
  %v1356 = vld [vmem:[%s1] sm:$0xff]
  %v1357 = vld [vmem:[%s1 + $0x8] sm:$0xff]
  %v1358 = vld [vmem:[%s1 + $0x10] sm:$0xff]
  %v1359 = vld [vmem:[%s1 + $0x18] sm:$0xff]
  %v1360 = vld [vmem:[%s1 + $0x20] sm:$0xff]
  %v1361 = vld [vmem:[%s1 + $0x28] sm:$0xff]
  %v1362 = vld [vmem:[%s1 + $0x30] sm:$0xff]
  %v1363 = vld [vmem:[%s1 + $0x38] sm:$0xff]
  %v1364 = vld [vmem:[%s1 + $0x40] sm:$0xff]
  %v1365 = vld [vmem:[%s1 + $0x48] sm:$0xff]
  %v1366 = vld [vmem:[%s1 + $0x50] sm:$0xff]
  %v1367 = vld [vmem:[%s1 + $0x58] sm:$0xff]
  %v1368 = vld [vmem:[%s1 + $0x60] sm:$0xff]
  %v1369 = vld [vmem:[%s1 + $0x68] sm:$0xff]
  %v1370 = vld [vmem:[%s1 + $0x70] sm:$0xff]
  %v1371 = vld [vmem:[%s1 + $0x78] sm:$0xff]
  %v1372 = vld [vmem:[%s1 + $0x80] sm:$0xff]
  %v1373 = vld [vmem:[%s1 + $0x88] sm:$0xff]
  %v1374 = vld [vmem:[%s1 + $0x90] sm:$0xff]
  %v1375 = vld [vmem:[%s1 + $0x98] sm:$0xff]
  %v1376 = vld [vmem:[%s1 + $0xa0] sm:$0xff]
  %v1377 = vld [vmem:[%s1 + $0xa8] sm:$0xff]
  %v1378 = vld [vmem:[%s1 + $0xb0] sm:$0xff]
  %v1379 = vld [vmem:[%s1 + $0xb8] sm:$0xff]
  %v1380 = vld [vmem:[%s1 + $0xc0] sm:$0xff]
  %v1381 = vld [vmem:[%s1 + $0xc8] sm:$0xff]
  %v1382 = vld [vmem:[%s1 + $0xd0] sm:$0xff]
  %v1383 = vld [vmem:[%s1 + $0xd8] sm:$0xff]
  %v1384 = vld [vmem:[%s1 + $0xe0] sm:$0xff]
  %v1385 = vld [vmem:[%s1 + $0xe8] sm:$0xff]
  %v1386 = vld [vmem:[%s1 + $0xf0] sm:$0xff]
  %v1387 = vld [vmem:[%s1 + $0xf8] sm:$0xff]
  %v1388 = vld [vmem:[%s1 + $0x100] sm:$0xff]
  %v1389 = vld [vmem:[%s1 + $0x108] sm:$0xff]
  %v1390 = vld [vmem:[%s1 + $0x110] sm:$0xff]
  %v1391 = vld [vmem:[%s1 + $0x118] sm:$0xff]
  %v1392 = vld [vmem:[%s1 + $0x120] sm:$0xff]
  %v1393 = vld [vmem:[%s1 + $0x128] sm:$0xff]
  %v1394 = vld [vmem:[%s1 + $0x130] sm:$0xff]
  %v1395 = vld [vmem:[%s1 + $0x138] sm:$0xff]
  %v1396 = vld [vmem:[%s1 + $0x140] sm:$0xff]
  %v1397 = vld [vmem:[%s1 + $0x148] sm:$0xff]
  %v1398 = vld [vmem:[%s1 + $0x150] sm:$0xff]
  %v1399 = vld [vmem:[%s1 + $0x158] sm:$0xff]
  %v1400 = vld [vmem:[%s1 + $0x160] sm:$0xff]
  %v1401 = vld [vmem:[%s1 + $0x168] sm:$0xff]
  %v1402 = vld [vmem:[%s1 + $0x170] sm:$0xff]
  %v1403 = vld [vmem:[%s1 + $0x178] sm:$0xff]
  %v1404 = vld [vmem:[%s1 + $0x180] sm:$0xff]
  %v1405 = vld [vmem:[%s1 + $0x188] sm:$0xff]
  %v1406 = vld [vmem:[%s1 + $0x190] sm:$0xff]
  %v1407 = vld [vmem:[%s1 + $0x198] sm:$0xff]
  %v1408 = vld [vmem:[%s1 + $0x1a0] sm:$0xff]
  %v1409 = vld [vmem:[%s1 + $0x1a8] sm:$0xff]
  %v1410 = vld [vmem:[%s1 + $0x1b0] sm:$0xff]
  %v1411 = vld [vmem:[%s1 + $0x1b8] sm:$0xff]
  %v1412 = vld [vmem:[%s1 + $0x1c0] sm:$0xff]
  %v1413 = vld [vmem:[%s1 + $0x1c8] sm:$0xff]
  %v1414 = vld [vmem:[%s1 + $0x1d0] sm:$0xff]
  %v1415 = vld [vmem:[%s1 + $0x1d8] sm:$0xff]
  %v1416 = vld [vmem:[%s1 + $0x1e0] sm:$0xff]
  %v1417 = vld [vmem:[%s1 + $0x1e8] sm:$0xff]
  %v1418 = vld [vmem:[%s1 + $0x1f0] sm:$0xff]
  %v1419 = vld [vmem:[%s1 + $0x1f8] sm:$0xff]
  %1420 = vmatpush.msra.mxu0 %v1416
  %1421 = vmatpush.msra.mxu0 %v1412
  %1422 = vmatpush.msra.mxu0 %v1408
  %1423 = vmatpush.msra.mxu0 %v1404
  %1424 = vmatpush.msra.mxu0 %v1400
  %1425 = vmatpush.msra.mxu0 %v1396
  %1426 = vmatpush.msra.mxu0 %v1392
  %1427 = vmatpush.msra.mxu0 %v1388
  %1428 = vmatpush.msra.mxu0 %v1384
  %1429 = vmatpush.msra.mxu0 %v1380
  %1430 = vmatpush.msra.mxu0 %v1376
  %1431 = vmatpush.msra.mxu0 %v1372
  %1432 = vmatpush.msra.mxu0 %v1368
  %1433 = vmatpush.msra.mxu0 %v1364
  %1434 = vmatpush.msra.mxu0 %v1360
  %1435 = vmatpush.msra.mxu0 %v1356
  %1436 = vmatmul.f32.gmra.mxu0 %v1355
  %v1437 = vpop.f32.mrf.mxu0
  %v1438 = vadd.f32 0.0, %v1437
  %1439 = vdwg.mxu0
  %1440 = vmatpush.msra.mxu0 %v1417
  %1441 = vmatpush.msra.mxu0 %v1413
  %1442 = vmatpush.msra.mxu0 %v1409
  %1443 = vmatpush.msra.mxu0 %v1405
  %1444 = vmatpush.msra.mxu0 %v1401
  %1445 = vmatpush.msra.mxu0 %v1397
  %1446 = vmatpush.msra.mxu0 %v1393
  %1447 = vmatpush.msra.mxu0 %v1389
  %1448 = vmatpush.msra.mxu0 %v1385
  %1449 = vmatpush.msra.mxu0 %v1381
  %1450 = vmatpush.msra.mxu0 %v1377
  %1451 = vmatpush.msra.mxu0 %v1373
  %1452 = vmatpush.msra.mxu0 %v1369
  %1453 = vmatpush.msra.mxu0 %v1365
  %1454 = vmatpush.msra.mxu0 %v1361
  %1455 = vmatpush.msra.mxu0 %v1357
  %1456 = vmatmul.f32.gmra.mxu0 %v1355
  %v1457 = vpop.f32.mrf.mxu0
  %v1458 = vadd.f32 0.0, %v1457
  %1459 = vdwg.mxu0
  %1460 = vmatpush.msra.mxu0 %v1418
  %1461 = vmatpush.msra.mxu0 %v1414
  %1462 = vmatpush.msra.mxu0 %v1410
  %1463 = vmatpush.msra.mxu0 %v1406
  %1464 = vmatpush.msra.mxu0 %v1402
  %1465 = vmatpush.msra.mxu0 %v1398
  %1466 = vmatpush.msra.mxu0 %v1394
  %1467 = vmatpush.msra.mxu0 %v1390
  %1468 = vmatpush.msra.mxu0 %v1386
  %1469 = vmatpush.msra.mxu0 %v1382
  %1470 = vmatpush.msra.mxu0 %v1378
  %1471 = vmatpush.msra.mxu0 %v1374
  %1472 = vmatpush.msra.mxu0 %v1370
  %1473 = vmatpush.msra.mxu0 %v1366
  %1474 = vmatpush.msra.mxu0 %v1362
  %1475 = vmatpush.msra.mxu0 %v1358
  %1476 = vmatmul.f32.gmra.mxu0 %v1355
  %v1477 = vpop.f32.mrf.mxu0
  %v1478 = vadd.f32 0.0, %v1477
  %1479 = vdwg.mxu0
  %1480 = vmatpush.msra.mxu0 %v1419
  %1481 = vmatpush.msra.mxu0 %v1415
  %1482 = vmatpush.msra.mxu0 %v1411
  %1483 = vmatpush.msra.mxu0 %v1407
  %1484 = vmatpush.msra.mxu0 %v1403
  %1485 = vmatpush.msra.mxu0 %v1399
  %1486 = vmatpush.msra.mxu0 %v1395
  %1487 = vmatpush.msra.mxu0 %v1391
  %1488 = vmatpush.msra.mxu0 %v1387
  %1489 = vmatpush.msra.mxu0 %v1383
  %1490 = vmatpush.msra.mxu0 %v1379
  %1491 = vmatpush.msra.mxu0 %v1375
  %1492 = vmatpush.msra.mxu0 %v1371
  %1493 = vmatpush.msra.mxu0 %v1367
  %1494 = vmatpush.msra.mxu0 %v1363
  %1495 = vmatpush.msra.mxu0 %v1359
  %1496 = vmatmul.f32.gmra.mxu0 %v1355
  %v1497 = vpop.f32.mrf.mxu0
  %v1498 = vadd.f32 0.0, %v1497
  %1499 = vdwg.mxu0
  %v1500 = vadd.f32 %v1351, %v1438
  %v1501 = vadd.f32 %v1352, %v1458
  %v1502 = vadd.f32 %v1353, %v1478
  %v1503 = vadd.f32 %v1354, %v1498
  %v1504 = vxor.u32 %v1500, 2147483648
  %v1505 = vxor.u32 %v1501, 2147483648
  %v1506 = vxor.u32 %v1502, 2147483648
  %v1507 = vmul.f32 %v1504, 1.442695
  %v1508 = vpow.pop %v1507
  %v1509 = vmul.f32 %v1505, 1.442695
  %v1510 = vpow.pop %v1509
  %v1511 = vmul.f32 %v1506, 1.442695
  %v1512 = vpow.pop %v1511
  %v1513 = vadd.f32 %v1508, 1.0
  %v1514 = vadd.f32 %v1510, 1.0
  %v1515 = vadd.f32 %v1512, 1.0
  %v1516 = vrcp.pop %v1513
  %v1517 = vmul.f32 %v1513, %v1516
  %v1518 = vsub.f32 1.0, %v1517
  %v1519 = vmul.f32 %v1516, %v1518
  %v1520 = vadd.f32 %v1516, %v1519
  %vm1521 = vweird.f32 %v1513
  %vm1522 = vweird.f32 %v1516
  %vm1523 = vmor %vm1521, %vm1522
  %v1524 = vsel %vm1523, %v1516, %v1520
  %v1525 = vand.u32 2147483647, %v1513
  %vm1526 = vcmp.eq.f32.partialorder %v1525, 8.507059e+37
  %v1527 = vand.u32 %v1513, 2147483648
  %v1528 = vor.u32 1.1754944e-38, %v1527
  %v1529 = vsel %vm1526, %v1528, %v1524
  %v1530 = vmul.f32 1.0, %v1529
  %v1531 = vrcp.pop %v1514
  %v1532 = vmul.f32 %v1514, %v1531
  %v1533 = vsub.f32 1.0, %v1532
  %v1534 = vmul.f32 %v1531, %v1533
  %v1535 = vadd.f32 %v1531, %v1534
  %vm1536 = vweird.f32 %v1514
  %vm1537 = vweird.f32 %v1531
  %vm1538 = vmor %vm1536, %vm1537
  %v1539 = vsel %vm1538, %v1531, %v1535
  %v1540 = vand.u32 2147483647, %v1514
  %vm1541 = vcmp.eq.f32.partialorder %v1540, 8.507059e+37
  %v1542 = vand.u32 %v1514, 2147483648
  %v1543 = vor.u32 1.1754944e-38, %v1542
  %v1544 = vsel %vm1541, %v1543, %v1539
  %v1545 = vmul.f32 1.0, %v1544
  %v1546 = vrcp.pop %v1515
  %v1547 = vmul.f32 %v1515, %v1546
  %v1548 = vsub.f32 1.0, %v1547
  %v1549 = vmul.f32 %v1546, %v1548
  %v1550 = vadd.f32 %v1546, %v1549
  %vm1551 = vweird.f32 %v1515
  %vm1552 = vweird.f32 %v1546
  %vm1553 = vmor %vm1551, %vm1552
  %v1554 = vsel %vm1553, %v1546, %v1550
  %v1555 = vand.u32 2147483647, %v1515
  %vm1556 = vcmp.eq.f32.partialorder %v1555, 8.507059e+37
  %v1557 = vand.u32 %v1515, 2147483648
  %v1558 = vor.u32 1.1754944e-38, %v1557
  %v1559 = vsel %vm1556, %v1558, %v1554
  %v1560 = vmul.f32 1.0, %v1559
  %v1561 = vtanh.pop %v1503
  %v1562 = vld [vmem:[#allocation3] sm:$0xff]
  %v1563 = vmul.f32 %v1545, %v1562
  %v1564 = vmul.f32 %v1530, %v1561
  %v1565 = vadd.f32 %v1563, %v1564
  %v1566 = vtanh.pop %v1565
  %v1567 = vmul.f32 %v1560, %v1566
  %1568 = vst [vmem:[#allocation3] sm:$0xff] %v1565
  %1569 = vst [vmem:[#allocation2] sm:$0xff] %v1567
  %s1570 = scalar_lea.vmem %s2, 48
  %1571 = vst [vmem:[%s1570] sm:$0xff] %v1567
  %s1572 = scalar_lea.vmem %s0, 224
  %v1573 = vld [vmem:[%s1572] sm:$0xff]
  %v1574 = vld [vmem:[%s1572 + $0x8] sm:$0xff]
  %v1575 = vld [vmem:[%s1572 + $0x10] sm:$0xff]
  %v1576 = vld [vmem:[%s1572 + $0x18] sm:$0xff]
  %v1577 = vld [vmem:[#allocation2] sm:$0xff]
  %v1578 = vld [vmem:[%s1] sm:$0xff]
  %v1579 = vld [vmem:[%s1 + $0x8] sm:$0xff]
  %v1580 = vld [vmem:[%s1 + $0x10] sm:$0xff]
  %v1581 = vld [vmem:[%s1 + $0x18] sm:$0xff]
  %v1582 = vld [vmem:[%s1 + $0x20] sm:$0xff]
  %v1583 = vld [vmem:[%s1 + $0x28] sm:$0xff]
  %v1584 = vld [vmem:[%s1 + $0x30] sm:$0xff]
  %v1585 = vld [vmem:[%s1 + $0x38] sm:$0xff]
  %v1586 = vld [vmem:[%s1 + $0x40] sm:$0xff]
  %v1587 = vld [vmem:[%s1 + $0x48] sm:$0xff]
  %v1588 = vld [vmem:[%s1 + $0x50] sm:$0xff]
  %v1589 = vld [vmem:[%s1 + $0x58] sm:$0xff]
  %v1590 = vld [vmem:[%s1 + $0x60] sm:$0xff]
  %v1591 = vld [vmem:[%s1 + $0x68] sm:$0xff]
  %v1592 = vld [vmem:[%s1 + $0x70] sm:$0xff]
  %v1593 = vld [vmem:[%s1 + $0x78] sm:$0xff]
  %v1594 = vld [vmem:[%s1 + $0x80] sm:$0xff]
  %v1595 = vld [vmem:[%s1 + $0x88] sm:$0xff]
  %v1596 = vld [vmem:[%s1 + $0x90] sm:$0xff]
  %v1597 = vld [vmem:[%s1 + $0x98] sm:$0xff]
  %v1598 = vld [vmem:[%s1 + $0xa0] sm:$0xff]
  %v1599 = vld [vmem:[%s1 + $0xa8] sm:$0xff]
  %v1600 = vld [vmem:[%s1 + $0xb0] sm:$0xff]
  %v1601 = vld [vmem:[%s1 + $0xb8] sm:$0xff]
  %v1602 = vld [vmem:[%s1 + $0xc0] sm:$0xff]
  %v1603 = vld [vmem:[%s1 + $0xc8] sm:$0xff]
  %v1604 = vld [vmem:[%s1 + $0xd0] sm:$0xff]
  %v1605 = vld [vmem:[%s1 + $0xd8] sm:$0xff]
  %v1606 = vld [vmem:[%s1 + $0xe0] sm:$0xff]
  %v1607 = vld [vmem:[%s1 + $0xe8] sm:$0xff]
  %v1608 = vld [vmem:[%s1 + $0xf0] sm:$0xff]
  %v1609 = vld [vmem:[%s1 + $0xf8] sm:$0xff]
  %v1610 = vld [vmem:[%s1 + $0x100] sm:$0xff]
  %v1611 = vld [vmem:[%s1 + $0x108] sm:$0xff]
  %v1612 = vld [vmem:[%s1 + $0x110] sm:$0xff]
  %v1613 = vld [vmem:[%s1 + $0x118] sm:$0xff]
  %v1614 = vld [vmem:[%s1 + $0x120] sm:$0xff]
  %v1615 = vld [vmem:[%s1 + $0x128] sm:$0xff]
  %v1616 = vld [vmem:[%s1 + $0x130] sm:$0xff]
  %v1617 = vld [vmem:[%s1 + $0x138] sm:$0xff]
  %v1618 = vld [vmem:[%s1 + $0x140] sm:$0xff]
  %v1619 = vld [vmem:[%s1 + $0x148] sm:$0xff]
  %v1620 = vld [vmem:[%s1 + $0x150] sm:$0xff]
  %v1621 = vld [vmem:[%s1 + $0x158] sm:$0xff]
  %v1622 = vld [vmem:[%s1 + $0x160] sm:$0xff]
  %v1623 = vld [vmem:[%s1 + $0x168] sm:$0xff]
  %v1624 = vld [vmem:[%s1 + $0x170] sm:$0xff]
  %v1625 = vld [vmem:[%s1 + $0x178] sm:$0xff]
  %v1626 = vld [vmem:[%s1 + $0x180] sm:$0xff]
  %v1627 = vld [vmem:[%s1 + $0x188] sm:$0xff]
  %v1628 = vld [vmem:[%s1 + $0x190] sm:$0xff]
  %v1629 = vld [vmem:[%s1 + $0x198] sm:$0xff]
  %v1630 = vld [vmem:[%s1 + $0x1a0] sm:$0xff]
  %v1631 = vld [vmem:[%s1 + $0x1a8] sm:$0xff]
  %v1632 = vld [vmem:[%s1 + $0x1b0] sm:$0xff]
  %v1633 = vld [vmem:[%s1 + $0x1b8] sm:$0xff]
  %v1634 = vld [vmem:[%s1 + $0x1c0] sm:$0xff]
  %v1635 = vld [vmem:[%s1 + $0x1c8] sm:$0xff]
  %v1636 = vld [vmem:[%s1 + $0x1d0] sm:$0xff]
  %v1637 = vld [vmem:[%s1 + $0x1d8] sm:$0xff]
  %v1638 = vld [vmem:[%s1 + $0x1e0] sm:$0xff]
  %v1639 = vld [vmem:[%s1 + $0x1e8] sm:$0xff]
  %v1640 = vld [vmem:[%s1 + $0x1f0] sm:$0xff]
  %v1641 = vld [vmem:[%s1 + $0x1f8] sm:$0xff]
  %1642 = vmatpush.msra.mxu0 %v1638
  %1643 = vmatpush.msra.mxu0 %v1634
  %1644 = vmatpush.msra.mxu0 %v1630
  %1645 = vmatpush.msra.mxu0 %v1626
  %1646 = vmatpush.msra.mxu0 %v1622
  %1647 = vmatpush.msra.mxu0 %v1618
  %1648 = vmatpush.msra.mxu0 %v1614
  %1649 = vmatpush.msra.mxu0 %v1610
  %1650 = vmatpush.msra.mxu0 %v1606
  %1651 = vmatpush.msra.mxu0 %v1602
  %1652 = vmatpush.msra.mxu0 %v1598
  %1653 = vmatpush.msra.mxu0 %v1594
  %1654 = vmatpush.msra.mxu0 %v1590
  %1655 = vmatpush.msra.mxu0 %v1586
  %1656 = vmatpush.msra.mxu0 %v1582
  %1657 = vmatpush.msra.mxu0 %v1578
  %1658 = vmatmul.f32.gmra.mxu0 %v1577
  %v1659 = vpop.f32.mrf.mxu0
  %v1660 = vadd.f32 0.0, %v1659
  %1661 = vdwg.mxu0
  %1662 = vmatpush.msra.mxu0 %v1639
  %1663 = vmatpush.msra.mxu0 %v1635
  %1664 = vmatpush.msra.mxu0 %v1631
  %1665 = vmatpush.msra.mxu0 %v1627
  %1666 = vmatpush.msra.mxu0 %v1623
  %1667 = vmatpush.msra.mxu0 %v1619
  %1668 = vmatpush.msra.mxu0 %v1615
  %1669 = vmatpush.msra.mxu0 %v1611
  %1670 = vmatpush.msra.mxu0 %v1607
  %1671 = vmatpush.msra.mxu0 %v1603
  %1672 = vmatpush.msra.mxu0 %v1599
  %1673 = vmatpush.msra.mxu0 %v1595
  %1674 = vmatpush.msra.mxu0 %v1591
  %1675 = vmatpush.msra.mxu0 %v1587
  %1676 = vmatpush.msra.mxu0 %v1583
  %1677 = vmatpush.msra.mxu0 %v1579
  %1678 = vmatmul.f32.gmra.mxu0 %v1577
  %v1679 = vpop.f32.mrf.mxu0
  %v1680 = vadd.f32 0.0, %v1679
  %1681 = vdwg.mxu0
  %1682 = vmatpush.msra.mxu0 %v1640
  %1683 = vmatpush.msra.mxu0 %v1636
  %1684 = vmatpush.msra.mxu0 %v1632
  %1685 = vmatpush.msra.mxu0 %v1628
  %1686 = vmatpush.msra.mxu0 %v1624
  %1687 = vmatpush.msra.mxu0 %v1620
  %1688 = vmatpush.msra.mxu0 %v1616
  %1689 = vmatpush.msra.mxu0 %v1612
  %1690 = vmatpush.msra.mxu0 %v1608
  %1691 = vmatpush.msra.mxu0 %v1604
  %1692 = vmatpush.msra.mxu0 %v1600
  %1693 = vmatpush.msra.mxu0 %v1596
  %1694 = vmatpush.msra.mxu0 %v1592
  %1695 = vmatpush.msra.mxu0 %v1588
  %1696 = vmatpush.msra.mxu0 %v1584
  %1697 = vmatpush.msra.mxu0 %v1580
  %1698 = vmatmul.f32.gmra.mxu0 %v1577
  %v1699 = vpop.f32.mrf.mxu0
  %v1700 = vadd.f32 0.0, %v1699
  %1701 = vdwg.mxu0
  %1702 = vmatpush.msra.mxu0 %v1641
  %1703 = vmatpush.msra.mxu0 %v1637
  %1704 = vmatpush.msra.mxu0 %v1633
  %1705 = vmatpush.msra.mxu0 %v1629
  %1706 = vmatpush.msra.mxu0 %v1625
  %1707 = vmatpush.msra.mxu0 %v1621
  %1708 = vmatpush.msra.mxu0 %v1617
  %1709 = vmatpush.msra.mxu0 %v1613
  %1710 = vmatpush.msra.mxu0 %v1609
  %1711 = vmatpush.msra.mxu0 %v1605
  %1712 = vmatpush.msra.mxu0 %v1601
  %1713 = vmatpush.msra.mxu0 %v1597
  %1714 = vmatpush.msra.mxu0 %v1593
  %1715 = vmatpush.msra.mxu0 %v1589
  %1716 = vmatpush.msra.mxu0 %v1585
  %1717 = vmatpush.msra.mxu0 %v1581
  %1718 = vmatmul.f32.gmra.mxu0 %v1577
  %v1719 = vpop.f32.mrf.mxu0
  %v1720 = vadd.f32 0.0, %v1719
  %1721 = vdwg.mxu0
  %v1722 = vadd.f32 %v1573, %v1660
  %v1723 = vadd.f32 %v1574, %v1680
  %v1724 = vadd.f32 %v1575, %v1700
  %v1725 = vadd.f32 %v1576, %v1720
  %v1726 = vxor.u32 %v1722, 2147483648
  %v1727 = vxor.u32 %v1723, 2147483648
  %v1728 = vxor.u32 %v1724, 2147483648
  %v1729 = vmul.f32 %v1726, 1.442695
  %v1730 = vpow.pop %v1729
  %v1731 = vmul.f32 %v1727, 1.442695
  %v1732 = vpow.pop %v1731
  %v1733 = vmul.f32 %v1728, 1.442695
  %v1734 = vpow.pop %v1733
  %v1735 = vadd.f32 %v1730, 1.0
  %v1736 = vadd.f32 %v1732, 1.0
  %v1737 = vadd.f32 %v1734, 1.0
  %v1738 = vrcp.pop %v1735
  %v1739 = vmul.f32 %v1735, %v1738
  %v1740 = vsub.f32 1.0, %v1739
  %v1741 = vmul.f32 %v1738, %v1740
  %v1742 = vadd.f32 %v1738, %v1741
  %vm1743 = vweird.f32 %v1735
  %vm1744 = vweird.f32 %v1738
  %vm1745 = vmor %vm1743, %vm1744
  %v1746 = vsel %vm1745, %v1738, %v1742
  %v1747 = vand.u32 2147483647, %v1735
  %vm1748 = vcmp.eq.f32.partialorder %v1747, 8.507059e+37
  %v1749 = vand.u32 %v1735, 2147483648
  %v1750 = vor.u32 1.1754944e-38, %v1749
  %v1751 = vsel %vm1748, %v1750, %v1746
  %v1752 = vmul.f32 1.0, %v1751
  %v1753 = vrcp.pop %v1736
  %v1754 = vmul.f32 %v1736, %v1753
  %v1755 = vsub.f32 1.0, %v1754
  %v1756 = vmul.f32 %v1753, %v1755
  %v1757 = vadd.f32 %v1753, %v1756
  %vm1758 = vweird.f32 %v1736
  %vm1759 = vweird.f32 %v1753
  %vm1760 = vmor %vm1758, %vm1759
  %v1761 = vsel %vm1760, %v1753, %v1757
  %v1762 = vand.u32 2147483647, %v1736
  %vm1763 = vcmp.eq.f32.partialorder %v1762, 8.507059e+37
  %v1764 = vand.u32 %v1736, 2147483648
  %v1765 = vor.u32 1.1754944e-38, %v1764
  %v1766 = vsel %vm1763, %v1765, %v1761
  %v1767 = vmul.f32 1.0, %v1766
  %v1768 = vrcp.pop %v1737
  %v1769 = vmul.f32 %v1737, %v1768
  %v1770 = vsub.f32 1.0, %v1769
  %v1771 = vmul.f32 %v1768, %v1770
  %v1772 = vadd.f32 %v1768, %v1771
  %vm1773 = vweird.f32 %v1737
  %vm1774 = vweird.f32 %v1768
  %vm1775 = vmor %vm1773, %vm1774
  %v1776 = vsel %vm1775, %v1768, %v1772
  %v1777 = vand.u32 2147483647, %v1737
  %vm1778 = vcmp.eq.f32.partialorder %v1777, 8.507059e+37
  %v1779 = vand.u32 %v1737, 2147483648
  %v1780 = vor.u32 1.1754944e-38, %v1779
  %v1781 = vsel %vm1778, %v1780, %v1776
  %v1782 = vmul.f32 1.0, %v1781
  %v1783 = vtanh.pop %v1725
  %v1784 = vld [vmem:[#allocation3] sm:$0xff]
  %v1785 = vmul.f32 %v1767, %v1784
  %v1786 = vmul.f32 %v1752, %v1783
  %v1787 = vadd.f32 %v1785, %v1786
  %v1788 = vtanh.pop %v1787
  %v1789 = vmul.f32 %v1782, %v1788
  %1790 = vst [vmem:[#allocation3] sm:$0xff] %v1787
  %1791 = vst [vmem:[#allocation2] sm:$0xff] %v1789
  %s1792 = scalar_lea.vmem %s2, 56
  %1793 = vst [vmem:[%s1792] sm:$0xff] %v1789
  // Predicated region
  $region14: #{rnn_model_forward.3} parent=0 // pred_check
    %p1794 = pneg %p14
  $region15: #{rnn_model_forward.3} parent=0 // pred_check_branch
    %1796 = sbr.rel (%p1794) target = $region17
  $region16: #{rnn_model_forward.3} parent=0 // pred_region
    %v1797 = vld [vmem:[#allocation2] sm:$0xff]
    %1798 = vst [vmem:[%s3] sm:$0xff] %v1797
    %v1799 = vld [vmem:[#allocation3] sm:$0xff]
    %1800 = vst [vmem:[%s4] sm:$0xff] %v1799
  $region17: #{rnn_model_forward.3} parent=0 // pred_fallthru
    _
  // Predicated region
  $region18: #{rnn_model_forward.3} parent=0 // pred_check
    _
  $region19: #{rnn_model_forward.3} parent=0 // pred_check_branch
    %1802 = sbr.rel (0) target = $region21
  $region20: #{rnn_model_forward.3} parent=0 // pred_region
    _
  $region21: #{rnn_model_forward.3} parent=0 // pred_fallthru
    _
  // Predicated region
  $region22: #{rnn_model_forward.3} parent=0 // pred_check
    _
  $region23: #{rnn_model_forward.3} parent=0 // pred_check_branch
    %1804 = sbr.rel (0) target = $region25
  $region24: #{rnn_model_forward.3} parent=0 // pred_region
    _
  $region25: #{rnn_model_forward.3} parent=0 // pred_fallthru
    _
  // Predicated region
  $region26: #{rnn_model_forward.3} parent=0 // pred_check
    _
  $region27: #{rnn_model_forward.3} parent=0 // pred_check_branch
    %1806 = sbr.rel (0) target = $region29
  $region28: #{rnn_model_forward.3} parent=0 // pred_region
    _
  $region29: #{rnn_model_forward.3} parent=0 // pred_fallthru
    _
  // Predicated region
  $region30: #{rnn_model_forward.3} parent=0 // pred_check
    _
  $region31: #{rnn_model_forward.3} parent=0 // pred_check_branch
    %1808 = sbr.rel (0) target = $region33
  $region32: #{rnn_model_forward.3} parent=0 // pred_region
    _
  $region33: #{rnn_model_forward.3} parent=0 // pred_fallthru
    _
  // Predicated region
  $region34: #{rnn_model_forward.3} parent=0 // pred_check
    _
  $region35: #{rnn_model_forward.3} parent=0 // pred_check_branch
    %1810 = sbr.rel (0) target = $region37
  $region36: #{rnn_model_forward.3} parent=0 // pred_region
    _
  $region37: #{rnn_model_forward.3} parent=0 // pred_fallthru
    _
  // Predicated region
  $region38: #{rnn_model_forward.3} parent=0 // pred_check
    _
  $region39: #{rnn_model_forward.3} parent=0 // pred_check_branch
    %1812 = sbr.rel (0) target = $region41
  $region40: #{rnn_model_forward.3} parent=0 // pred_region
    _
  $region41: #{rnn_model_forward.3} parent=0 // pred_fallthru
    _

</llo_original>
